<compile_context>
chip_gen: v5e
topology: v5e:2x2
jax: 0.10.0
libtpu: 0.0.40
codegen_flags: <defaults>
</compile_context>

<pallas_src>
import functools

import jax
import jax.numpy as jnp
from jax.experimental import pallas as pl
from jax.experimental.pallas import tpu as pltpu


def _mlp_kernel(x_ref,
                w1_ref, b1_ref,
                w2_ref, b2_ref,
                w3_ref, b3_ref,
                wh_ref, bh_ref,
                out_ref,
                *, h_dim, n_cls):
    """Fused MLP forward for one batch tile.

    x_ref:   (TILE_B, n_features)  bf16
    w*_ref:  (in, out)             bf16   weights, [in, out] layout (W_torch.T)
    b*_ref:  (1, out)              f32
    wh_ref:  (h_dim, SLAB_W)       bf16   augmented head weight [I | Wh | 0]
    bh_ref:  (1, SLAB_W)           f32    augmented head bias   [0 | bh | 0]
    out_ref: (TILE_B, SLAB_W)      f32    lanes [0:h_dim)          -> h
                                          lanes [h_dim:h_dim+n_cls) -> sigmoid(head)
    """
    x = x_ref[...]

    # Hidden layers: Linear -> ReLU -> Dropout (eval mode => identity).
    a = jnp.dot(x, w1_ref[...], preferred_element_type=jnp.float32) + b1_ref[...]
    a = jnp.maximum(a, 0.0).astype(jnp.bfloat16)
    a = jnp.dot(a, w2_ref[...], preferred_element_type=jnp.float32) + b2_ref[...]
    a = jnp.maximum(a, 0.0).astype(jnp.bfloat16)
    a = jnp.dot(a, w3_ref[...], preferred_element_type=jnp.float32) + b3_ref[...]
    h = jnp.maximum(a, 0.0).astype(jnp.bfloat16)            # (TILE_B, h_dim)

    # Augmented head matmul -> [h | logits | 0] as one lane-dense slab.
    s = jnp.dot(h, wh_ref[...], preferred_element_type=jnp.float32) + bh_ref[...]

    # Sigmoid only on the logit lanes (exp -> EUP, approx reciprocal -> EUP).
    lane = jax.lax.broadcasted_iota(jnp.int32, s.shape, dimension=1)
    is_logit = (lane >= h_dim) & (lane < h_dim + n_cls)
    sig = pl.reciprocal(1.0 + jnp.exp(-s), approx=True)
    out_ref[...] = jnp.where(is_logit, sig, s)


def mlp_forward(x, params, *, tile_b=256):
    """params = (w1, b1, w2, b2, w3, b3, wh, bh); weights are [in, out]."""
    w1, b1, w2, b2, w3, b3, wh, bh = params
    batch, n_features = x.shape
    h_dim = w3.shape[1]
    n_cls = wh.shape[1]
    slab_w = pl.cdiv(h_dim + n_cls, 128) * 128

    # bf16 MXU operands; biases stay f32 (added after f32 accumulation).
    xb = x.astype(jnp.bfloat16)
    w1b, w2b, w3b = (w.astype(jnp.bfloat16) for w in (w1, w2, w3))
    b1f, b2f, b3f = (b.astype(jnp.float32) for b in (b1, b2, b3))

    # Augmented head: [I_hdim | Wh | 0] so the kernel emits [h | logits | 0].
    wh_slab = jnp.zeros((h_dim, slab_w), jnp.float32)
    wh_slab = wh_slab.at[:, :h_dim].set(jnp.eye(h_dim, dtype=jnp.float32))
    wh_slab = wh_slab.at[:, h_dim:h_dim + n_cls].set(wh.astype(jnp.float32))
    wh_slab = wh_slab.astype(jnp.bfloat16)
    bh_slab = jnp.zeros((1, slab_w), jnp.float32)
    bh_slab = bh_slab.at[:, h_dim:h_dim + n_cls].set(bh.astype(jnp.float32))

    # Pad batch to a tile multiple so the grid is static; slice remainder off.
    n_tiles = pl.cdiv(batch, tile_b)
    padded = n_tiles * tile_b
    if padded != batch:
        xb = jnp.pad(xb, ((0, padded - batch), (0, 0)))

    x_map = lambda i: (i, 0)   # stream batch tiles
    w_map = lambda i: (0, 0)   # weights/biases resident across all grid steps

    kernel = functools.partial(_mlp_kernel, h_dim=h_dim, n_cls=n_cls)
    slab = pl.pallas_call(
        kernel,
        out_shape=jax.ShapeDtypeStruct((padded, slab_w), jnp.float32),
        grid=(n_tiles,),
        in_specs=[
            pl.BlockSpec((tile_b, n_features), x_map),
            pl.BlockSpec(w1b.shape, w_map), pl.BlockSpec(b1f.shape, w_map),
            pl.BlockSpec(w2b.shape, w_map), pl.BlockSpec(b2f.shape, w_map),
            pl.BlockSpec(w3b.shape, w_map), pl.BlockSpec(b3f.shape, w_map),
            pl.BlockSpec(wh_slab.shape, w_map), pl.BlockSpec(bh_slab.shape, w_map),
        ],
        out_specs=pl.BlockSpec((tile_b, slab_w), x_map),
        compiler_params=pltpu.CompilerParams(
            dimension_semantics=("parallel",),   # 2 TensorCores on v7x
            vmem_limit_bytes=32 * 1024 * 1024,   # comfortable on v5e/v6e/v7x
        ),
    )(xb, w1b, b1f, w2b, b2f, w3b, b3f, wh_slab, bh_slab)

    h = slab[:batch, :h_dim]
    y = slab[:batch, h_dim:h_dim + n_cls]
    return h, y


def init_params(key, n_features, mlp_layers, num_classes):
    """Deterministic init, mimicking nn.Linear's U(-1/sqrt(in), 1/sqrt(in))."""
    dims = [n_features] + list(mlp_layers)
    params = []
    keys = jax.random.split(key, len(dims))
    for i, (din, dout) in enumerate(zip(dims[:-1], dims[1:])):
        kw, kb = jax.random.split(keys[i])
        bound = 1.0 / jnp.sqrt(din)
        params.append(jax.random.uniform(kw, (din, dout), jnp.float32, -bound, bound))
        params.append(jax.random.uniform(kb, (1, dout), jnp.float32, -bound, bound))
    din = dims[-1]
    kw, kb = jax.random.split(keys[-1])
    bound = 1.0 / jnp.sqrt(din)
    params.append(jax.random.uniform(kw, (din, num_classes), jnp.float32, -bound, bound))
    params.append(jax.random.uniform(kb, (1, num_classes), jnp.float32, -bound, bound))
    return tuple(params)


def reference_forward(x, params):
    """Pure-JAX reference mirroring the kernel's bf16-operand / f32-acc strategy."""
    w1, b1, w2, b2, w3, b3, wh, bh = params
    a = x.astype(jnp.bfloat16)
    for w, b in ((w1, b1), (w2, b2), (w3, b3)):
        a = jnp.dot(a, w.astype(jnp.bfloat16), preferred_element_type=jnp.float32) + b
        a = jnp.maximum(a, 0.0).astype(jnp.bfloat16)
    h = a.astype(jnp.float32)   # kernel returns h at bf16 precision
    logits = jnp.dot(a, wh.astype(jnp.bfloat16), preferred_element_type=jnp.float32) + bh
    y = jax.nn.sigmoid(logits)
    return h, y


if __name__ == "__main__":
    # Shapes consistent with the module defaults (mlp_layers=[512,256,64], num_classes=1).
    batch = 512
    n_features = 256
    mlp_layers = [512, 256, 64]
    num_classes = 1

    key = jax.random.PRNGKey(0)
    kx, kp = jax.random.split(key)
    x = jax.random.normal(kx, (batch, n_features), jnp.float32)
    params = init_params(kp, n_features, mlp_layers, num_classes)

    h, y = mlp_forward(x, params, tile_b=256)
    h = jax.block_until_ready(h)
    y = jax.block_until_ready(y)

    h_ref, y_ref = reference_forward(x, params)
    assert h.shape == (batch, mlp_layers[-1])
    assert y.shape == (batch, num_classes)
    # bf16 matmul operands + approx-reciprocal sigmoid => modest tolerance.
    assert jnp.allclose(h, h_ref, atol=2e-2, rtol=2e-2), float(jnp.max(jnp.abs(h - h_ref)))
    assert jnp.allclose(y, y_ref, atol=2e-2, rtol=2e-2), float(jnp.max(jnp.abs(y - y_ref)))

    print("KERNEL_OK")
</pallas_src>

<mosaic_0001>
module attributes {stable_mosaic.version = 11 : i64} {
  func.func @_mlp_kernel(%arg0: i32, %arg1: memref<256x256xbf16, #tpu.memory_space<vmem>>, %arg2: memref<256x512xbf16, #tpu.memory_space<vmem>>, %arg3: memref<1x512xf32, #tpu.memory_space<vmem>>, %arg4: memref<512x256xbf16, #tpu.memory_space<vmem>>, %arg5: memref<1x256xf32, #tpu.memory_space<vmem>>, %arg6: memref<256x64xbf16, #tpu.memory_space<vmem>>, %arg7: memref<1x64xf32, #tpu.memory_space<vmem>>, %arg8: memref<64x128xbf16, #tpu.memory_space<vmem>>, %arg9: memref<1x128xf32, #tpu.memory_space<vmem>>, %arg10: memref<256x128xf32, #tpu.memory_space<vmem>>) attributes {dimension_semantics = [#tpu.dimension_semantics<parallel>], iteration_bounds = array<i64: 2>, scalar_prefetch = 0 : i64, scratch_operands = 0 : i64, tpu.core_type = #tpu.core_type<tc>, window_params = [{transform_indices = @transform_0, window_bounds = array<i64: 256, 256>}, {pipeline_mode = #tpu.pipeline_mode<synchronous>, transform_indices = @transform_1, window_bounds = array<i64: 256, 512>}, {pipeline_mode = #tpu.pipeline_mode<synchronous>, transform_indices = @transform_2, window_bounds = array<i64: 1, 512>}, {pipeline_mode = #tpu.pipeline_mode<synchronous>, transform_indices = @transform_3, window_bounds = array<i64: 512, 256>}, {pipeline_mode = #tpu.pipeline_mode<synchronous>, transform_indices = @transform_4, window_bounds = array<i64: 1, 256>}, {pipeline_mode = #tpu.pipeline_mode<synchronous>, transform_indices = @transform_5, window_bounds = array<i64: 256, 64>}, {pipeline_mode = #tpu.pipeline_mode<synchronous>, transform_indices = @transform_6, window_bounds = array<i64: 1, 64>}, {pipeline_mode = #tpu.pipeline_mode<synchronous>, transform_indices = @transform_7, window_bounds = array<i64: 64, 128>}, {pipeline_mode = #tpu.pipeline_mode<synchronous>, transform_indices = @transform_8, window_bounds = array<i64: 1, 128>}, {transform_indices = @transform_9, window_bounds = array<i64: 256, 128>}]} {
    %c0 = arith.constant 0 : index
    %c0_0 = arith.constant 0 : index
    %0 = vector.load %arg1[%c0, %c0_0] : memref<256x256xbf16, #tpu.memory_space<vmem>>, vector<256x256xbf16>
    %c0_1 = arith.constant 0 : index
    %c0_2 = arith.constant 0 : index
    %1 = vector.load %arg2[%c0_1, %c0_2] : memref<256x512xbf16, #tpu.memory_space<vmem>>, vector<256x512xbf16>
    %cst = arith.constant dense<0.000000e+00> : vector<256x512xf32>
    %2 = tpu.matmul %0, %1, %cst {dimension_numbers = #tpu.dot_dimension_numbers<[1], [0], [0], [1], [0, 0, 1, 1], [], []>} : vector<256x256xbf16>, vector<256x512xbf16>, vector<256x512xf32> -> vector<256x512xf32>
    %c0_3 = arith.constant 0 : index
    %c0_4 = arith.constant 0 : index
    %3 = vector.load %arg3[%c0_3, %c0_4] : memref<1x512xf32, #tpu.memory_space<vmem>>, vector<1x512xf32>
    %4 = vector.broadcast %3 : vector<1x512xf32> to vector<256x512xf32>
    %5 = arith.addf %2, %4 : vector<256x512xf32>
    %cst_5 = arith.constant 0.000000e+00 : f32
    %6 = vector.broadcast %cst_5 : f32 to vector<256x512xf32>
    %7 = arith.maximumf %5, %6 : vector<256x512xf32>
    %8 = arith.truncf %7 : vector<256x512xf32> to vector<256x512xbf16>
    %c0_6 = arith.constant 0 : index
    %c0_7 = arith.constant 0 : index
    %9 = vector.load %arg4[%c0_6, %c0_7] : memref<512x256xbf16, #tpu.memory_space<vmem>>, vector<512x256xbf16>
    %cst_8 = arith.constant dense<0.000000e+00> : vector<256x256xf32>
    %10 = tpu.matmul %8, %9, %cst_8 {dimension_numbers = #tpu.dot_dimension_numbers<[1], [0], [0], [1], [0, 0, 1, 1], [], []>} : vector<256x512xbf16>, vector<512x256xbf16>, vector<256x256xf32> -> vector<256x256xf32>
    %c0_9 = arith.constant 0 : index
    %c0_10 = arith.constant 0 : index
    %11 = vector.load %arg5[%c0_9, %c0_10] : memref<1x256xf32, #tpu.memory_space<vmem>>, vector<1x256xf32>
    %12 = vector.broadcast %11 : vector<1x256xf32> to vector<256x256xf32>
    %13 = arith.addf %10, %12 : vector<256x256xf32>
    %cst_11 = arith.constant 0.000000e+00 : f32
    %14 = vector.broadcast %cst_11 : f32 to vector<256x256xf32>
    %15 = arith.maximumf %13, %14 : vector<256x256xf32>
    %16 = arith.truncf %15 : vector<256x256xf32> to vector<256x256xbf16>
    %c0_12 = arith.constant 0 : index
    %c0_13 = arith.constant 0 : index
    %17 = vector.load %arg6[%c0_12, %c0_13] : memref<256x64xbf16, #tpu.memory_space<vmem>>, vector<256x64xbf16>
    %cst_14 = arith.constant dense<0.000000e+00> : vector<256x64xf32>
    %18 = tpu.matmul %16, %17, %cst_14 {dimension_numbers = #tpu.dot_dimension_numbers<[1], [0], [0], [1], [0, 0, 1, 1], [], []>} : vector<256x256xbf16>, vector<256x64xbf16>, vector<256x64xf32> -> vector<256x64xf32>
    %c0_15 = arith.constant 0 : index
    %c0_16 = arith.constant 0 : index
    %19 = vector.load %arg7[%c0_15, %c0_16] : memref<1x64xf32, #tpu.memory_space<vmem>>, vector<1x64xf32>
    %20 = vector.broadcast %19 : vector<1x64xf32> to vector<256x64xf32>
    %21 = arith.addf %18, %20 : vector<256x64xf32>
    %cst_17 = arith.constant 0.000000e+00 : f32
    %22 = vector.broadcast %cst_17 : f32 to vector<256x64xf32>
    %23 = arith.maximumf %21, %22 : vector<256x64xf32>
    %24 = arith.truncf %23 : vector<256x64xf32> to vector<256x64xbf16>
    %c0_18 = arith.constant 0 : index
    %c0_19 = arith.constant 0 : index
    %25 = vector.load %arg8[%c0_18, %c0_19] : memref<64x128xbf16, #tpu.memory_space<vmem>>, vector<64x128xbf16>
    %cst_20 = arith.constant dense<0.000000e+00> : vector<256x128xf32>
    %26 = tpu.matmul %24, %25, %cst_20 {dimension_numbers = #tpu.dot_dimension_numbers<[1], [0], [0], [1], [0, 0, 1, 1], [], []>} : vector<256x64xbf16>, vector<64x128xbf16>, vector<256x128xf32> -> vector<256x128xf32>
    %c0_21 = arith.constant 0 : index
    %c0_22 = arith.constant 0 : index
    %27 = vector.load %arg9[%c0_21, %c0_22] : memref<1x128xf32, #tpu.memory_space<vmem>>, vector<1x128xf32>
    %28 = vector.broadcast %27 : vector<1x128xf32> to vector<256x128xf32>
    %29 = arith.addf %26, %28 : vector<256x128xf32>
    %30 = tpu.iota {dimensions = array<i32: 1>} : vector<256x128xi32>
    %c64_i32 = arith.constant 64 : i32
    %31 = vector.broadcast %c64_i32 : i32 to vector<256x128xi32>
    %32 = arith.cmpi sge, %30, %31 : vector<256x128xi32>
    %c65_i32 = arith.constant 65 : i32
    %33 = vector.broadcast %c65_i32 : i32 to vector<256x128xi32>
    %34 = arith.cmpi slt, %30, %33 : vector<256x128xi32>
    %35 = arith.andi %32, %34 : vector<256x128xi1>
    %cst_23 = arith.constant 0.000000e+00 : f32
    %36 = vector.broadcast %cst_23 : f32 to vector<256x128xf32>
    %37 = arith.subf %36, %29 : vector<256x128xf32>
    %38 = math.exp %37 : vector<256x128xf32>
    %cst_24 = arith.constant 1.000000e+00 : f32
    %39 = vector.broadcast %cst_24 : f32 to vector<256x128xf32>
    %40 = arith.addf %39, %38 : vector<256x128xf32>
    %41 = tpu.reciprocal %40 {approx = true} : vector<256x128xf32> -> vector<256x128xf32>
    %42 = arith.select %35, %41, %29 : vector<256x128xi1>, vector<256x128xf32>
    %c0_25 = arith.constant 0 : index
    %c0_26 = arith.constant 0 : index
    %43 = vector.load %arg10[%c0_25, %c0_26] : memref<256x128xf32, #tpu.memory_space<vmem>>, vector<256x128xf32>
    tpu.vector_store %arg10[%c0_25, %c0_26], %42 {strides = array<i32>} : memref<256x128xf32, #tpu.memory_space<vmem>>, vector<256x128xf32>,
    return
  }
  func.func @transform_0(%arg0: i32) -> (i32, i32) {
    %c0_i32 = arith.constant 0 : i32
    %c0_i32_0 = arith.constant 0 : i32
    return %arg0, %c0_i32 : i32, i32
  }
  func.func @transform_1(%arg0: i32) -> (i32, i32) {
    %c0_i32 = arith.constant 0 : i32
    %c0_i32_0 = arith.constant 0 : i32
    %c0_i32_1 = arith.constant 0 : i32
    return %c0_i32, %c0_i32_0 : i32, i32
  }
  func.func @transform_2(%arg0: i32) -> (i32, i32) {
    %c0_i32 = arith.constant 0 : i32
    %c0_i32_0 = arith.constant 0 : i32
    %c0_i32_1 = arith.constant 0 : i32
    return %c0_i32, %c0_i32_0 : i32, i32
  }
  func.func @transform_3(%arg0: i32) -> (i32, i32) {
    %c0_i32 = arith.constant 0 : i32
    %c0_i32_0 = arith.constant 0 : i32
    %c0_i32_1 = arith.constant 0 : i32
    return %c0_i32, %c0_i32_0 : i32, i32
  }
  func.func @transform_4(%arg0: i32) -> (i32, i32) {
    %c0_i32 = arith.constant 0 : i32
    %c0_i32_0 = arith.constant 0 : i32
    %c0_i32_1 = arith.constant 0 : i32
    return %c0_i32, %c0_i32_0 : i32, i32
  }
  func.func @transform_5(%arg0: i32) -> (i32, i32) {
    %c0_i32 = arith.constant 0 : i32
    %c0_i32_0 = arith.constant 0 : i32
    %c0_i32_1 = arith.constant 0 : i32
    return %c0_i32, %c0_i32_0 : i32, i32
  }
  func.func @transform_6(%arg0: i32) -> (i32, i32) {
    %c0_i32 = arith.constant 0 : i32
    %c0_i32_0 = arith.constant 0 : i32
    %c0_i32_1 = arith.constant 0 : i32
    return %c0_i32, %c0_i32_0 : i32, i32
  }
  func.func @transform_7(%arg0: i32) -> (i32, i32) {
    %c0_i32 = arith.constant 0 : i32
    %c0_i32_0 = arith.constant 0 : i32
    %c0_i32_1 = arith.constant 0 : i32
    return %c0_i32, %c0_i32_0 : i32, i32
  }
  func.func @transform_8(%arg0: i32) -> (i32, i32) {
    %c0_i32 = arith.constant 0 : i32
    %c0_i32_0 = arith.constant 0 : i32
    %c0_i32_1 = arith.constant 0 : i32
    return %c0_i32, %c0_i32_0 : i32, i32
  }
  func.func @transform_9(%arg0: i32) -> (i32, i32) {
    %c0_i32 = arith.constant 0 : i32
    %c0_i32_0 = arith.constant 0 : i32
    return %arg0, %c0_i32 : i32, i32
  }
}

</mosaic_0001>

<llo_original>
// kernel: tpu_custom_call.1
$region0: #{tpu_custom_call.1}
  #allocation0 [shape = 'u32[]', space=smem, size = 0x4, offset = 0x4, fixed_abs, tag = 'smem constant byte address 0x4 - core index']
  #allocation1 [shape = 'u32[72,128]{1,0:T(1,128)}', space=vmem, size = 0x9000, scoped, tag = 'internal scratch']
  %s0 = inlined_call_operand.hbm [shape: bf16[512,256], index: 0, kind: input, shape index: {}]
  %s1 = inlined_call_operand.hbm [shape: bf16[256,512], index: 1, kind: input, shape index: {}]
  %s2 = inlined_call_operand.vmem [shape: f32[1,512], index: 2, kind: input, shape index: {}]
  %s3 = inlined_call_operand.hbm [shape: bf16[512,256], index: 3, kind: input, shape index: {}]
  %s4 = inlined_call_operand.vmem [shape: f32[1,256], index: 4, kind: input, shape index: {}]
  %s5 = inlined_call_operand.vmem [shape: bf16[256,64], index: 5, kind: input, shape index: {}]
  %s6 = inlined_call_operand.vmem [shape: f32[1,64], index: 6, kind: input, shape index: {}]
  %s7 = inlined_call_operand.vmem [shape: bf16[64,128], index: 7, kind: input, shape index: {}]
  %s8 = inlined_call_operand.vmem [shape: f32[1,128], index: 8, kind: input, shape index: {}]
  %s9 = inlined_call_operand.hbm [shape: f32[512,128], index: 9, kind: output, shape index: {}]
  %s10 = sld [smem:[#allocation0]]
  $region81: #{tpu_custom_call.1} parent=0
    _
  %s12 = ssub.s32 1, %s10
  %s13 = scalar_select 0, %s12, %s10
  $region1: #{tpu_custom_call.1} parent=0
    #allocation2 [shape = 'u8[262144]{0}', space=vmem, size = 0x40000, scoped, tag = 'input window, operand 0']
    #allocation3 [shape = 's32[2]{0}', space=sflag, size = 0x8, scoped, tag = 'scoped memory for tpu_custom_call.1']
    #allocation4 [shape = 's32[2]{0}', space=sflag, size = 0x8, scoped, tag = 'scoped memory for tpu_custom_call.1']
    #allocation5 [shape = 'u8[262144]{0}', space=vmem, size = 0x40000, scoped, tag = 'input window, operand 1, single buffered']
    #allocation6 [shape = 's32[1]{0}', space=sflag, size = 0x4, scoped, tag = 'scoped memory for tpu_custom_call.1']
    #allocation7 [shape = 'u8[262144]{0}', space=vmem, size = 0x40000, scoped, tag = 'input window, operand 3, single buffered']
    #allocation8 [shape = 'u8[262144]{0}', space=vmem, size = 0x40000, scoped, tag = 'output window, operand 0']
    %14 = vsyncpa [#allocation3], 0
    %s15 = scalar_lea.sflag [#allocation3], 1
    %16 = vsyncpa %s15, 0
    %17 = vsyncpa [#allocation6], 0
    %18 = vsyncpa [#allocation4], 0
    %s19 = scalar_lea.sflag [#allocation4], 1
    %20 = vsyncpa %s19, 0
    loop: start=0, step=1, limit=4
    $region2: #{tpu_custom_call.1} parent=1 // loop_pre_header
      _
    $region3: #{tpu_custom_call.1} parent=1 // loop_header
      %s22 = sphi 0, %s26
      %p23 = scmp.ge.s32.totalorder %s22, 4
      %s32 = sphi 0, %s34
      %s35 = sphi 0, %s32
      %s36 = sphi 0, %s35
      %s52 = sphi 0, %s36
      %s56 = sphi 0, %s56
      %s58 = sphi 0, %s56
      %s59 = sphi 0, %s58
      %s73 = sphi 0, %s59
      %s77 = sphi 0, %s77
      %s79 = sphi 0, %s77
      %s80 = sphi 0, %s79
      %s94 = sphi 0, %s80
      %s98 = sphi 0, %s98
      %s100 = sphi 0, %s98
      %s101 = sphi 0, %s100
      %s115 = sphi 0, %s101
      %s119 = sphi 0, %s119
      %s121 = sphi 0, %s119
      %s122 = sphi 0, %s121
      %s136 = sphi 0, %s122
      %s140 = sphi 0, %s140
      %s142 = sphi 0, %s140
      %s143 = sphi 0, %s142
      %s157 = sphi 0, %s143
      %s161 = sphi 0, %s161
      %s163 = sphi 0, %s161
      %s164 = sphi 0, %s163
      %s178 = sphi 0, %s164
      %s182 = sphi 0, %s182
      %s184 = sphi 0, %s182
      %s185 = sphi 0, %s184
      %s199 = sphi 0, %s185
      %s203 = sphi 0, %s203
      %s205 = sphi 0, %s203
      %s206 = sphi 0, %s205
      %s220 = sphi 0, %s206
      %s226 = sphi 0, %s228
      %s229 = sphi 0, %s226
      %s230 = sphi 0, %s229
      %s246 = sphi 0, %s230
    $region4: #{tpu_custom_call.1} parent=1 // loop_header_branch
      %25 = sbr.rel (%p23) target = $region8
    $region5: #{tpu_custom_call.1} parent=1 // loop_body
      %s27 = ssub.s32 %s22, 1
      %s28 = ssub.s32 %s22, 2
      %s29 = sadd.s32 %s22, 1
      %s30 = ssub.s32 %s22, %s29
      %p31 = scmp.eq.s32.totalorder %s30, 0
      %s33 = sadd.s32 %s32, 1
      %s34 = scalar_select %p31, %s32, %s33
      %p37 = pneg %p31
      %p38 = scmp.eq.s32.totalorder %s22, 1
      %p39 = por %p37, %p38
      %p40 = scmp.ne.s32.totalorder %s32, %s35
      %p41 = scmp.eq.s32.totalorder %s22, 0
      %p42 = por %p40, %p41
      %p43 = scmp.ne.s32.totalorder %s32, %s35
      %p44 = scmp.eq.s32.totalorder %s27, 1
      %p45 = por %p43, %p44
      %p46 = scmp.ne.s32.totalorder %s35, %s36
      %p47 = scmp.eq.s32.totalorder %s27, 0
      %p48 = por %p46, %p47
      %p49 = scmp.ne.s32.totalorder %s35, %s36
      %p50 = scmp.eq.s32.totalorder %s28, 1
      %p51 = por %p49, %p50
      %p53 = scmp.ne.s32.totalorder %s36, %s52
      %p54 = scmp.eq.s32.totalorder %s28, 0
      %p55 = por %p53, %p54
      %s57 = sadd.s32 %s56, 1
      %p60 = scmp.eq.s32.totalorder %s22, 1
      %p61 = scmp.ne.s32.totalorder %s56, %s58
      %p62 = scmp.eq.s32.totalorder %s22, 0
      %p63 = por %p61, %p62
      %p64 = scmp.ne.s32.totalorder %s56, %s58
      %p65 = scmp.eq.s32.totalorder %s27, 1
      %p66 = por %p64, %p65
      %p67 = scmp.ne.s32.totalorder %s58, %s59
      %p68 = scmp.eq.s32.totalorder %s27, 0
      %p69 = por %p67, %p68
      %p70 = scmp.ne.s32.totalorder %s58, %s59
      %p71 = scmp.eq.s32.totalorder %s28, 1
      %p72 = por %p70, %p71
      %p74 = scmp.ne.s32.totalorder %s59, %s73
      %p75 = scmp.eq.s32.totalorder %s28, 0
      %p76 = por %p74, %p75
      %s78 = sadd.s32 %s77, 1
      %p81 = scmp.eq.s32.totalorder %s22, 1
      %p82 = scmp.ne.s32.totalorder %s77, %s79
      %p83 = scmp.eq.s32.totalorder %s22, 0
      %p84 = por %p82, %p83
      %p85 = scmp.ne.s32.totalorder %s77, %s79
      %p86 = scmp.eq.s32.totalorder %s27, 1
      %p87 = por %p85, %p86
      %p88 = scmp.ne.s32.totalorder %s79, %s80
      %p89 = scmp.eq.s32.totalorder %s27, 0
      %p90 = por %p88, %p89
      %p91 = scmp.ne.s32.totalorder %s79, %s80
      %p92 = scmp.eq.s32.totalorder %s28, 1
      %p93 = por %p91, %p92
      %p95 = scmp.ne.s32.totalorder %s80, %s94
      %p96 = scmp.eq.s32.totalorder %s28, 0
      %p97 = por %p95, %p96
      %s99 = sadd.s32 %s98, 1
      %p102 = scmp.eq.s32.totalorder %s22, 1
      %p103 = scmp.ne.s32.totalorder %s98, %s100
      %p104 = scmp.eq.s32.totalorder %s22, 0
      %p105 = por %p103, %p104
      %p106 = scmp.ne.s32.totalorder %s98, %s100
      %p107 = scmp.eq.s32.totalorder %s27, 1
      %p108 = por %p106, %p107
      %p109 = scmp.ne.s32.totalorder %s100, %s101
      %p110 = scmp.eq.s32.totalorder %s27, 0
      %p111 = por %p109, %p110
      %p112 = scmp.ne.s32.totalorder %s100, %s101
      %p113 = scmp.eq.s32.totalorder %s28, 1
      %p114 = por %p112, %p113
      %p116 = scmp.ne.s32.totalorder %s101, %s115
      %p117 = scmp.eq.s32.totalorder %s28, 0
      %p118 = por %p116, %p117
      %s120 = sadd.s32 %s119, 1
      %p123 = scmp.eq.s32.totalorder %s22, 1
      %p124 = scmp.ne.s32.totalorder %s119, %s121
      %p125 = scmp.eq.s32.totalorder %s22, 0
      %p126 = por %p124, %p125
      %p127 = scmp.ne.s32.totalorder %s119, %s121
      %p128 = scmp.eq.s32.totalorder %s27, 1
      %p129 = por %p127, %p128
      %p130 = scmp.ne.s32.totalorder %s121, %s122
      %p131 = scmp.eq.s32.totalorder %s27, 0
      %p132 = por %p130, %p131
      %p133 = scmp.ne.s32.totalorder %s121, %s122
      %p134 = scmp.eq.s32.totalorder %s28, 1
      %p135 = por %p133, %p134
      %p137 = scmp.ne.s32.totalorder %s122, %s136
      %p138 = scmp.eq.s32.totalorder %s28, 0
      %p139 = por %p137, %p138
      %s141 = sadd.s32 %s140, 1
      %p144 = scmp.eq.s32.totalorder %s22, 1
      %p145 = scmp.ne.s32.totalorder %s140, %s142
      %p146 = scmp.eq.s32.totalorder %s22, 0
      %p147 = por %p145, %p146
      %p148 = scmp.ne.s32.totalorder %s140, %s142
      %p149 = scmp.eq.s32.totalorder %s27, 1
      %p150 = por %p148, %p149
      %p151 = scmp.ne.s32.totalorder %s142, %s143
      %p152 = scmp.eq.s32.totalorder %s27, 0
      %p153 = por %p151, %p152
      %p154 = scmp.ne.s32.totalorder %s142, %s143
      %p155 = scmp.eq.s32.totalorder %s28, 1
      %p156 = por %p154, %p155
      %p158 = scmp.ne.s32.totalorder %s143, %s157
      %p159 = scmp.eq.s32.totalorder %s28, 0
      %p160 = por %p158, %p159
      %s162 = sadd.s32 %s161, 1
      %p165 = scmp.eq.s32.totalorder %s22, 1
      %p166 = scmp.ne.s32.totalorder %s161, %s163
      %p167 = scmp.eq.s32.totalorder %s22, 0
      %p168 = por %p166, %p167
      %p169 = scmp.ne.s32.totalorder %s161, %s163
      %p170 = scmp.eq.s32.totalorder %s27, 1
      %p171 = por %p169, %p170
      %p172 = scmp.ne.s32.totalorder %s163, %s164
      %p173 = scmp.eq.s32.totalorder %s27, 0
      %p174 = por %p172, %p173
      %p175 = scmp.ne.s32.totalorder %s163, %s164
      %p176 = scmp.eq.s32.totalorder %s28, 1
      %p177 = por %p175, %p176
      %p179 = scmp.ne.s32.totalorder %s164, %s178
      %p180 = scmp.eq.s32.totalorder %s28, 0
      %p181 = por %p179, %p180
      %s183 = sadd.s32 %s182, 1
      %p186 = scmp.eq.s32.totalorder %s22, 1
      %p187 = scmp.ne.s32.totalorder %s182, %s184
      %p188 = scmp.eq.s32.totalorder %s22, 0
      %p189 = por %p187, %p188
      %p190 = scmp.ne.s32.totalorder %s182, %s184
      %p191 = scmp.eq.s32.totalorder %s27, 1
      %p192 = por %p190, %p191
      %p193 = scmp.ne.s32.totalorder %s184, %s185
      %p194 = scmp.eq.s32.totalorder %s27, 0
      %p195 = por %p193, %p194
      %p196 = scmp.ne.s32.totalorder %s184, %s185
      %p197 = scmp.eq.s32.totalorder %s28, 1
      %p198 = por %p196, %p197
      %p200 = scmp.ne.s32.totalorder %s185, %s199
      %p201 = scmp.eq.s32.totalorder %s28, 0
      %p202 = por %p200, %p201
      %s204 = sadd.s32 %s203, 1
      %p207 = scmp.eq.s32.totalorder %s22, 1
      %p208 = scmp.ne.s32.totalorder %s203, %s205
      %p209 = scmp.eq.s32.totalorder %s22, 0
      %p210 = por %p208, %p209
      %p211 = scmp.ne.s32.totalorder %s203, %s205
      %p212 = scmp.eq.s32.totalorder %s27, 1
      %p213 = por %p211, %p212
      %p214 = scmp.ne.s32.totalorder %s205, %s206
      %p215 = scmp.eq.s32.totalorder %s27, 0
      %p216 = por %p214, %p215
      %p217 = scmp.ne.s32.totalorder %s205, %s206
      %p218 = scmp.eq.s32.totalorder %s28, 1
      %p219 = por %p217, %p218
      %p221 = scmp.ne.s32.totalorder %s206, %s220
      %p222 = scmp.eq.s32.totalorder %s28, 0
      %p223 = por %p221, %p222
      %s224 = ssub.s32 %s22, %s29
      %p225 = scmp.eq.s32.totalorder %s224, 0
      %s227 = sadd.s32 %s226, 1
      %s228 = scalar_select %p225, %s226, %s227
      %p231 = pneg %p225
      %p232 = scmp.eq.s32.totalorder %s22, 1
      %p233 = por %p231, %p232
      %p234 = scmp.ne.s32.totalorder %s226, %s229
      %p235 = scmp.eq.s32.totalorder %s22, 0
      %p236 = por %p234, %p235
      %p237 = scmp.ne.s32.totalorder %s226, %s229
      %p238 = scmp.eq.s32.totalorder %s27, 1
      %p239 = por %p237, %p238
      %p240 = scmp.ne.s32.totalorder %s229, %s230
      %p241 = scmp.eq.s32.totalorder %s27, 0
      %p242 = por %p240, %p241
      %p243 = scmp.ne.s32.totalorder %s229, %s230
      %p244 = scmp.eq.s32.totalorder %s28, 1
      %p245 = por %p243, %p244
      %p247 = scmp.ne.s32.totalorder %s230, %s246
      %p248 = scmp.eq.s32.totalorder %s28, 0
      %p249 = por %p247, %p248
      %p250 = scmp.le.s32.totalorder 1, %s22
      %p251 = scmp.lt.s32.totalorder %s22, 3
      %p252 = pnand %p250, %p251
      %p253 = pneg %p252
      // Predicated region
      $region9: #{tpu_custom_call.1} parent=5 // pred_check
        _
      $region10: #{tpu_custom_call.1} parent=5 // pred_check_branch
        %255 = sbr.rel (%p252) target = $region12
      $region11: #{tpu_custom_call.1} parent=5 // pred_region
        %s256 = ssub.s32 %s22, 1
        // Predicated region
        $region13: #{tpu_custom_call.1} parent=11 // pred_check
          %p257 = pneg %p69
        $region14: #{tpu_custom_call.1} parent=11 // pred_check_branch
          %259 = sbr.rel (%p257) target = $region16
        $region15: #{tpu_custom_call.1} parent=11 // pred_region
          %261 = vsyncadd [#allocation6], 0
          %s262 = sshll.u32 %s1, 4
          %s263 = int_to_ptr.hbm [resolvable:$true] %s262
          %s264 = sshll.u32 [#allocation5], 4
          %s265 = int_to_ptr.vmem [resolvable:$true] %s264
          %270 = dma.hbm_to_vmem [thread:$0]  %s263, 8192, %s265, [#allocation6], 256, 256, 16
        $region16: #{tpu_custom_call.1} parent=11 // pred_fallthru
          _
        // Predicated region
        $region17: #{tpu_custom_call.1} parent=11 // pred_check
          %p271 = pneg %p90
        $region18: #{tpu_custom_call.1} parent=11 // pred_check_branch
          %273 = sbr.rel (%p271) target = $region20
        $region19: #{tpu_custom_call.1} parent=11 // pred_region
          _
        $region20: #{tpu_custom_call.1} parent=11 // pred_fallthru
          _
        // Predicated region
        $region21: #{tpu_custom_call.1} parent=11 // pred_check
          %p274 = pneg %p111
        $region22: #{tpu_custom_call.1} parent=11 // pred_check_branch
          %276 = sbr.rel (%p274) target = $region24
        $region23: #{tpu_custom_call.1} parent=11 // pred_region
          %278 = vsyncadd [#allocation6], 0
          %s279 = sshll.u32 %s3, 4
          %s280 = int_to_ptr.hbm [resolvable:$true] %s279
          %s281 = sshll.u32 [#allocation7], 4
          %s282 = int_to_ptr.vmem [resolvable:$true] %s281
          %287 = dma.hbm_to_vmem [thread:$0]  %s280, 8192, %s282, [#allocation6], 128, 128, 8
        $region24: #{tpu_custom_call.1} parent=11 // pred_fallthru
          _
        // Predicated region
        $region25: #{tpu_custom_call.1} parent=11 // pred_check
          %p288 = pneg %p132
        $region26: #{tpu_custom_call.1} parent=11 // pred_check_branch
          %290 = sbr.rel (%p288) target = $region28
        $region27: #{tpu_custom_call.1} parent=11 // pred_region
          _
        $region28: #{tpu_custom_call.1} parent=11 // pred_fallthru
          _
        // Predicated region
        $region29: #{tpu_custom_call.1} parent=11 // pred_check
          %p291 = pneg %p153
        $region30: #{tpu_custom_call.1} parent=11 // pred_check_branch
          %293 = sbr.rel (%p291) target = $region32
        $region31: #{tpu_custom_call.1} parent=11 // pred_region
          _
        $region32: #{tpu_custom_call.1} parent=11 // pred_fallthru
          _
        // Predicated region
        $region33: #{tpu_custom_call.1} parent=11 // pred_check
          %p294 = pneg %p174
        $region34: #{tpu_custom_call.1} parent=11 // pred_check_branch
          %296 = sbr.rel (%p294) target = $region36
        $region35: #{tpu_custom_call.1} parent=11 // pred_region
          _
        $region36: #{tpu_custom_call.1} parent=11 // pred_fallthru
          _
        // Predicated region
        $region37: #{tpu_custom_call.1} parent=11 // pred_check
          %p297 = pneg %p195
        $region38: #{tpu_custom_call.1} parent=11 // pred_check_branch
          %299 = sbr.rel (%p297) target = $region40
        $region39: #{tpu_custom_call.1} parent=11 // pred_region
          _
        $region40: #{tpu_custom_call.1} parent=11 // pred_fallthru
          _
        // Predicated region
        $region41: #{tpu_custom_call.1} parent=11 // pred_check
          %p300 = pneg %p216
        $region42: #{tpu_custom_call.1} parent=11 // pred_check_branch
          %302 = sbr.rel (%p300) target = $region44
        $region43: #{tpu_custom_call.1} parent=11 // pred_region
          _
        $region44: #{tpu_custom_call.1} parent=11 // pred_fallthru
          _
      $region12: #{tpu_custom_call.1} parent=5 // pred_fallthru
        _
      %p303 = scmp.lt.s32.totalorder %s22, 2
      // Predicated region
      $region45: #{tpu_custom_call.1} parent=5 // pred_check
        %p304 = pneg %p303
      $region46: #{tpu_custom_call.1} parent=5 // pred_check_branch
        %306 = sbr.rel (%p304) target = $region48
      $region47: #{tpu_custom_call.1} parent=5 // pred_region
        // Predicated region
        $region49: #{tpu_custom_call.1} parent=47 // pred_check
          %p307 = pneg %p42
        $region50: #{tpu_custom_call.1} parent=47 // pred_check_branch
          %309 = sbr.rel (%p307) target = $region52
        $region51: #{tpu_custom_call.1} parent=47 // pred_region
          %s310 = sand.u32 %s32, 1
          %s311 = scalar_lea.sflag [#allocation3], %s310
          %s312 = sand.u32 %s32, 1
          %s313 = smul.addr %s312, 256
          %s314 = scalar_lea.vmem [#allocation2], %s313
          %s315 = smul.u32 32, %s22
          %317 = vsyncadd %s311, 0
          %s318 = smul.addr %s315, 2
          %s319 = smul.addr %s318, 4
          %s320 = scalar_lea.hbm %s0, %s319
          %s321 = sshll.u32 %s320, 4
          %s322 = int_to_ptr.hbm [resolvable:$true] %s321
          %s323 = sshll.u32 %s314, 4
          %s324 = int_to_ptr.vmem [resolvable:$true] %s323
          %329 = dma.hbm_to_vmem [thread:$0]  %s322, 4096, %s324, %s311, 128, 128, 8
        $region52: #{tpu_custom_call.1} parent=47 // pred_fallthru
          _
      $region48: #{tpu_custom_call.1} parent=5 // pred_fallthru
        _
      %p330 = scmp.le.s32.totalorder 1, %s22
      %p331 = scmp.lt.s32.totalorder %s22, 3
      %p332 = pnand %p330, %p331
      %p333 = pneg %p332
      // Predicated region
      $region53: #{tpu_custom_call.1} parent=5 // pred_check
        _
      $region54: #{tpu_custom_call.1} parent=5 // pred_check_branch
        %335 = sbr.rel (%p332) target = $region56
      $region55: #{tpu_custom_call.1} parent=5 // pred_region
        %s336 = ssub.s32 %s22, 1
        %s337 = sand.u32 %s35, 1
        %s338 = scalar_lea.sflag [#allocation3], %s337
        %s339 = sand.u32 %s35, 1
        %s340 = smul.addr %s339, 256
        %s341 = scalar_lea.vmem [#allocation2], %s340
        // Predicated region
        $region57: #{tpu_custom_call.1} parent=55 // pred_check
          %p342 = pneg %p48
        $region58: #{tpu_custom_call.1} parent=55 // pred_check_branch
          %344 = sbr.rel (%p342) target = $region60
        $region59: #{tpu_custom_call.1} parent=55 // pred_region
          %346 = dma.done %s338, 4096
        $region60: #{tpu_custom_call.1} parent=55 // pred_fallthru
          _
        // Predicated region
        $region61: #{tpu_custom_call.1} parent=55 // pred_check
          %p347 = pneg %p69
        $region62: #{tpu_custom_call.1} parent=55 // pred_check_branch
          %349 = sbr.rel (%p347) target = $region64
        $region63: #{tpu_custom_call.1} parent=55 // pred_region
          %351 = dma.done [#allocation6], 8192
        $region64: #{tpu_custom_call.1} parent=55 // pred_fallthru
          _
        // Predicated region
        $region65: #{tpu_custom_call.1} parent=55 // pred_check
          %p352 = pneg %p111
        $region66: #{tpu_custom_call.1} parent=55 // pred_check_branch
          %354 = sbr.rel (%p352) target = $region68
        $region67: #{tpu_custom_call.1} parent=55 // pred_region
          %356 = dma.done [#allocation6], 8192
        $region68: #{tpu_custom_call.1} parent=55 // pred_fallthru
          _
        %s357 = sand.u32 %s35, 1
        %s358 = scalar_lea.sflag [#allocation3], %s357
        %s359 = sand.u32 %s35, 1
        %s360 = smul.addr %s359, 256
        %s361 = scalar_lea.vmem [#allocation2], %s360
        %p362 = pneg %p48
        %p363 = pneg %p45
        %p364 = pneg %p69
        %p365 = pneg %p66
        %p366 = pneg %p90
        %p367 = pneg %p87
        %p368 = pneg %p111
        %p369 = pneg %p108
        %p370 = pneg %p132
        %p371 = pneg %p129
        %p372 = pneg %p153
        %p373 = pneg %p150
        %p374 = pneg %p174
        %p375 = pneg %p171
        %p376 = pneg %p195
        %p377 = pneg %p192
        %p378 = pneg %p216
        %p379 = pneg %p213
        %p380 = pneg %p242
        %p381 = pneg %p239
        %s382 = sand.u32 %s229, 1
        %s383 = scalar_lea.sflag [#allocation4], %s382
        %s384 = sand.u32 %s229, 1
        %s385 = smul.addr %s384, 256
        %s386 = scalar_lea.vmem [#allocation8], %s385
        %s387 = smul.u32 32, %s27
        %s388 = smul.u32 32, %s27
        %v390 = vld [vmem:[%s341] sm:$0xff]
        %v391 = vld [vmem:[%s341 + $0x8] sm:$0xff]
        %v392 = vld [vmem:[%s341 + $0x10] sm:$0xff]
        %v393 = vld [vmem:[%s341 + $0x18] sm:$0xff]
        %v394 = vld [vmem:[%s341 + $0x20] sm:$0xff]
        %v395 = vld [vmem:[%s341 + $0x28] sm:$0xff]
        %v396 = vld [vmem:[%s341 + $0x30] sm:$0xff]
        %v397 = vld [vmem:[%s341 + $0x38] sm:$0xff]
        %v398 = vld [vmem:[%s341 + $0x40] sm:$0xff]
        %v399 = vld [vmem:[%s341 + $0x48] sm:$0xff]
        %v400 = vld [vmem:[%s341 + $0x50] sm:$0xff]
        %v401 = vld [vmem:[%s341 + $0x58] sm:$0xff]
        %v402 = vld [vmem:[%s341 + $0x60] sm:$0xff]
        %v403 = vld [vmem:[%s341 + $0x68] sm:$0xff]
        %v404 = vld [vmem:[%s341 + $0x70] sm:$0xff]
        %v405 = vld [vmem:[%s341 + $0x78] sm:$0xff]
        %v406 = vld [vmem:[%s341 + $0x80] sm:$0xff]
        %v407 = vld [vmem:[%s341 + $0x88] sm:$0xff]
        %v408 = vld [vmem:[%s341 + $0x90] sm:$0xff]
        %v409 = vld [vmem:[%s341 + $0x98] sm:$0xff]
        %v410 = vld [vmem:[%s341 + $0xa0] sm:$0xff]
        %v411 = vld [vmem:[%s341 + $0xa8] sm:$0xff]
        %v412 = vld [vmem:[%s341 + $0xb0] sm:$0xff]
        %v413 = vld [vmem:[%s341 + $0xb8] sm:$0xff]
        %v414 = vld [vmem:[%s341 + $0xc0] sm:$0xff]
        %v415 = vld [vmem:[%s341 + $0xc8] sm:$0xff]
        %v416 = vld [vmem:[%s341 + $0xd0] sm:$0xff]
        %v417 = vld [vmem:[%s341 + $0xd8] sm:$0xff]
        %v418 = vld [vmem:[%s341 + $0xe0] sm:$0xff]
        %v419 = vld [vmem:[%s341 + $0xe8] sm:$0xff]
        %v420 = vld [vmem:[%s341 + $0xf0] sm:$0xff]
        %v421 = vld [vmem:[%s341 + $0xf8] sm:$0xff]
        %v422 = vld [vmem:[#allocation5] sm:$0xff]
        %v423 = vld [vmem:[#allocation5 + $0x8] sm:$0xff]
        %v424 = vld [vmem:[#allocation5 + $0x10] sm:$0xff]
        %v425 = vld [vmem:[#allocation5 + $0x18] sm:$0xff]
        %v426 = vld [vmem:[#allocation5 + $0x20] sm:$0xff]
        %v427 = vld [vmem:[#allocation5 + $0x28] sm:$0xff]
        %v428 = vld [vmem:[#allocation5 + $0x30] sm:$0xff]
        %v429 = vld [vmem:[#allocation5 + $0x38] sm:$0xff]
        %v430 = vld [vmem:[#allocation5 + $0x40] sm:$0xff]
        %v431 = vld [vmem:[#allocation5 + $0x48] sm:$0xff]
        %v432 = vld [vmem:[#allocation5 + $0x50] sm:$0xff]
        %v433 = vld [vmem:[#allocation5 + $0x58] sm:$0xff]
        %v434 = vld [vmem:[#allocation5 + $0x60] sm:$0xff]
        %v435 = vld [vmem:[#allocation5 + $0x68] sm:$0xff]
        %v436 = vld [vmem:[#allocation5 + $0x70] sm:$0xff]
        %v437 = vld [vmem:[#allocation5 + $0x78] sm:$0xff]
        %v438 = vld [vmem:[#allocation5 + $0x80] sm:$0xff]
        %v439 = vld [vmem:[#allocation5 + $0x88] sm:$0xff]
        %v440 = vld [vmem:[#allocation5 + $0x90] sm:$0xff]
        %v441 = vld [vmem:[#allocation5 + $0x98] sm:$0xff]
        %v442 = vld [vmem:[#allocation5 + $0xa0] sm:$0xff]
        %v443 = vld [vmem:[#allocation5 + $0xa8] sm:$0xff]
        %v444 = vld [vmem:[#allocation5 + $0xb0] sm:$0xff]
        %v445 = vld [vmem:[#allocation5 + $0xb8] sm:$0xff]
        %v446 = vld [vmem:[#allocation5 + $0xc0] sm:$0xff]
        %v447 = vld [vmem:[#allocation5 + $0xc8] sm:$0xff]
        %v448 = vld [vmem:[#allocation5 + $0xd0] sm:$0xff]
        %v449 = vld [vmem:[#allocation5 + $0xd8] sm:$0xff]
        %v450 = vld [vmem:[#allocation5 + $0xe0] sm:$0xff]
        %v451 = vld [vmem:[#allocation5 + $0xe8] sm:$0xff]
        %v452 = vld [vmem:[#allocation5 + $0xf0] sm:$0xff]
        %v453 = vld [vmem:[#allocation5 + $0xf8] sm:$0xff]
        %v454 = vld [vmem:[#allocation5 + $0x100] sm:$0xff]
        %v455 = vld [vmem:[#allocation5 + $0x108] sm:$0xff]
        %v456 = vld [vmem:[#allocation5 + $0x110] sm:$0xff]
        %v457 = vld [vmem:[#allocation5 + $0x118] sm:$0xff]
        %v458 = vld [vmem:[#allocation5 + $0x120] sm:$0xff]
        %v459 = vld [vmem:[#allocation5 + $0x128] sm:$0xff]
        %v460 = vld [vmem:[#allocation5 + $0x130] sm:$0xff]
        %v461 = vld [vmem:[#allocation5 + $0x138] sm:$0xff]
        %v462 = vld [vmem:[#allocation5 + $0x140] sm:$0xff]
        %v463 = vld [vmem:[#allocation5 + $0x148] sm:$0xff]
        %v464 = vld [vmem:[#allocation5 + $0x150] sm:$0xff]
        %v465 = vld [vmem:[#allocation5 + $0x158] sm:$0xff]
        %v466 = vld [vmem:[#allocation5 + $0x160] sm:$0xff]
        %v467 = vld [vmem:[#allocation5 + $0x168] sm:$0xff]
        %v468 = vld [vmem:[#allocation5 + $0x170] sm:$0xff]
        %v469 = vld [vmem:[#allocation5 + $0x178] sm:$0xff]
        %v470 = vld [vmem:[#allocation5 + $0x180] sm:$0xff]
        %v471 = vld [vmem:[#allocation5 + $0x188] sm:$0xff]
        %v472 = vld [vmem:[#allocation5 + $0x190] sm:$0xff]
        %v473 = vld [vmem:[#allocation5 + $0x198] sm:$0xff]
        %v474 = vld [vmem:[#allocation5 + $0x1a0] sm:$0xff]
        %v475 = vld [vmem:[#allocation5 + $0x1a8] sm:$0xff]
        %v476 = vld [vmem:[#allocation5 + $0x1b0] sm:$0xff]
        %v477 = vld [vmem:[#allocation5 + $0x1b8] sm:$0xff]
        %v478 = vld [vmem:[#allocation5 + $0x1c0] sm:$0xff]
        %v479 = vld [vmem:[#allocation5 + $0x1c8] sm:$0xff]
        %v480 = vld [vmem:[#allocation5 + $0x1d0] sm:$0xff]
        %v481 = vld [vmem:[#allocation5 + $0x1d8] sm:$0xff]
        %v482 = vld [vmem:[#allocation5 + $0x1e0] sm:$0xff]
        %v483 = vld [vmem:[#allocation5 + $0x1e8] sm:$0xff]
        %v484 = vld [vmem:[#allocation5 + $0x1f0] sm:$0xff]
        %v485 = vld [vmem:[#allocation5 + $0x1f8] sm:$0xff]
        %v486 = vld [vmem:[%s2] sm:$0xf]
        %v488 = vperm.slane %v486, 0
        %v489 = vperm.slane %v486, 1
        %v490 = vperm.slane %v486, 2
        %v491 = vperm.slane %v486, 3
        %v528 = vunpack.c.l.b16 %v390
        %v529 = vunpack.c.h.b16 %v390
        %v530 = vunpack.c.l.b16 %v391
        %v531 = vunpack.c.h.b16 %v391
        %v532 = vunpack.c.l.b16 %v392
        %v533 = vunpack.c.h.b16 %v392
        %v534 = vunpack.c.l.b16 %v393
        %v535 = vunpack.c.h.b16 %v393
        %v536 = vunpack.c.l.b16 %v394
        %v537 = vunpack.c.h.b16 %v394
        %v538 = vunpack.c.l.b16 %v395
        %v539 = vunpack.c.h.b16 %v395
        %v540 = vunpack.c.l.b16 %v396
        %v541 = vunpack.c.h.b16 %v396
        %v542 = vunpack.c.l.b16 %v397
        %v543 = vunpack.c.h.b16 %v397
        %v544 = vunpack.c.l.b16 %v398
        %v545 = vunpack.c.h.b16 %v398
        %v546 = vunpack.c.l.b16 %v399
        %v547 = vunpack.c.h.b16 %v399
        %v548 = vunpack.c.l.b16 %v400
        %v549 = vunpack.c.h.b16 %v400
        %v550 = vunpack.c.l.b16 %v401
        %v551 = vunpack.c.h.b16 %v401
        %v552 = vunpack.c.l.b16 %v402
        %v553 = vunpack.c.h.b16 %v402
        %v554 = vunpack.c.l.b16 %v403
        %v555 = vunpack.c.h.b16 %v403
        %v556 = vunpack.c.l.b16 %v404
        %v557 = vunpack.c.h.b16 %v404
        %v558 = vunpack.c.l.b16 %v405
        %v559 = vunpack.c.h.b16 %v405
        %v560 = vunpack.c.l.b16 %v406
        %v561 = vunpack.c.h.b16 %v406
        %v562 = vunpack.c.l.b16 %v407
        %v563 = vunpack.c.h.b16 %v407
        %v564 = vunpack.c.l.b16 %v408
        %v565 = vunpack.c.h.b16 %v408
        %v566 = vunpack.c.l.b16 %v409
        %v567 = vunpack.c.h.b16 %v409
        %v568 = vunpack.c.l.b16 %v410
        %v569 = vunpack.c.h.b16 %v410
        %v570 = vunpack.c.l.b16 %v411
        %v571 = vunpack.c.h.b16 %v411
        %v572 = vunpack.c.l.b16 %v412
        %v573 = vunpack.c.h.b16 %v412
        %v574 = vunpack.c.l.b16 %v413
        %v575 = vunpack.c.h.b16 %v413
        %v576 = vunpack.c.l.b16 %v414
        %v577 = vunpack.c.h.b16 %v414
        %v578 = vunpack.c.l.b16 %v415
        %v579 = vunpack.c.h.b16 %v415
        %v580 = vunpack.c.l.b16 %v416
        %v581 = vunpack.c.h.b16 %v416
        %v582 = vunpack.c.l.b16 %v417
        %v583 = vunpack.c.h.b16 %v417
        %v584 = vunpack.c.l.b16 %v418
        %v585 = vunpack.c.h.b16 %v418
        %v586 = vunpack.c.l.b16 %v419
        %v587 = vunpack.c.h.b16 %v419
        %v588 = vunpack.c.l.b16 %v420
        %v589 = vunpack.c.h.b16 %v420
        %v590 = vunpack.c.l.b16 %v421
        %v591 = vunpack.c.h.b16 %v421
        %v592 = vpack.c.b16 %v530, %v528
        %v593 = vpack.c.b16 %v531, %v529
        %v594 = vpack.c.b16 %v534, %v532
        %v595 = vpack.c.b16 %v535, %v533
        %v596 = vpack.c.b16 %v538, %v536
        %v597 = vpack.c.b16 %v539, %v537
        %v598 = vpack.c.b16 %v542, %v540
        %v599 = vpack.c.b16 %v543, %v541
        %v600 = vpack.c.b16 %v546, %v544
        %v601 = vpack.c.b16 %v547, %v545
        %v602 = vpack.c.b16 %v550, %v548
        %v603 = vpack.c.b16 %v551, %v549
        %v604 = vpack.c.b16 %v554, %v552
        %v605 = vpack.c.b16 %v555, %v553
        %v606 = vpack.c.b16 %v558, %v556
        %v607 = vpack.c.b16 %v559, %v557
        %v608 = vpack.c.b16 %v562, %v560
        %v609 = vpack.c.b16 %v563, %v561
        %v610 = vpack.c.b16 %v566, %v564
        %v611 = vpack.c.b16 %v567, %v565
        %v612 = vpack.c.b16 %v570, %v568
        %v613 = vpack.c.b16 %v571, %v569
        %v614 = vpack.c.b16 %v574, %v572
        %v615 = vpack.c.b16 %v575, %v573
        %v616 = vpack.c.b16 %v578, %v576
        %v617 = vpack.c.b16 %v579, %v577
        %v618 = vpack.c.b16 %v582, %v580
        %v619 = vpack.c.b16 %v583, %v581
        %v620 = vpack.c.b16 %v586, %v584
        %v621 = vpack.c.b16 %v587, %v585
        %v622 = vpack.c.b16 %v590, %v588
        %v623 = vpack.c.b16 %v591, %v589
        %v720 = vunpack.c.l.b16 %v422
        %v721 = vunpack.c.h.b16 %v422
        %v722 = vunpack.c.l.b16 %v423
        %v723 = vunpack.c.h.b16 %v423
        %v724 = vunpack.c.l.b16 %v424
        %v725 = vunpack.c.h.b16 %v424
        %v726 = vunpack.c.l.b16 %v425
        %v727 = vunpack.c.h.b16 %v425
        %v728 = vunpack.c.l.b16 %v426
        %v729 = vunpack.c.h.b16 %v426
        %v730 = vunpack.c.l.b16 %v427
        %v731 = vunpack.c.h.b16 %v427
        %v732 = vunpack.c.l.b16 %v428
        %v733 = vunpack.c.h.b16 %v428
        %v734 = vunpack.c.l.b16 %v429
        %v735 = vunpack.c.h.b16 %v429
        %v736 = vunpack.c.l.b16 %v430
        %v737 = vunpack.c.h.b16 %v430
        %v738 = vunpack.c.l.b16 %v431
        %v739 = vunpack.c.h.b16 %v431
        %v740 = vunpack.c.l.b16 %v432
        %v741 = vunpack.c.h.b16 %v432
        %v742 = vunpack.c.l.b16 %v433
        %v743 = vunpack.c.h.b16 %v433
        %v744 = vunpack.c.l.b16 %v434
        %v745 = vunpack.c.h.b16 %v434
        %v746 = vunpack.c.l.b16 %v435
        %v747 = vunpack.c.h.b16 %v435
        %v748 = vunpack.c.l.b16 %v436
        %v749 = vunpack.c.h.b16 %v436
        %v750 = vunpack.c.l.b16 %v437
        %v751 = vunpack.c.h.b16 %v437
        %v752 = vunpack.c.l.b16 %v438
        %v753 = vunpack.c.h.b16 %v438
        %v754 = vunpack.c.l.b16 %v439
        %v755 = vunpack.c.h.b16 %v439
        %v756 = vunpack.c.l.b16 %v440
        %v757 = vunpack.c.h.b16 %v440
        %v758 = vunpack.c.l.b16 %v441
        %v759 = vunpack.c.h.b16 %v441
        %v760 = vunpack.c.l.b16 %v442
        %v761 = vunpack.c.h.b16 %v442
        %v762 = vunpack.c.l.b16 %v443
        %v763 = vunpack.c.h.b16 %v443
        %v764 = vunpack.c.l.b16 %v444
        %v765 = vunpack.c.h.b16 %v444
        %v766 = vunpack.c.l.b16 %v445
        %v767 = vunpack.c.h.b16 %v445
        %v768 = vunpack.c.l.b16 %v446
        %v769 = vunpack.c.h.b16 %v446
        %v770 = vunpack.c.l.b16 %v447
        %v771 = vunpack.c.h.b16 %v447
        %v772 = vunpack.c.l.b16 %v448
        %v773 = vunpack.c.h.b16 %v448
        %v774 = vunpack.c.l.b16 %v449
        %v775 = vunpack.c.h.b16 %v449
        %v776 = vunpack.c.l.b16 %v450
        %v777 = vunpack.c.h.b16 %v450
        %v778 = vunpack.c.l.b16 %v451
        %v779 = vunpack.c.h.b16 %v451
        %v780 = vunpack.c.l.b16 %v452
        %v781 = vunpack.c.h.b16 %v452
        %v782 = vunpack.c.l.b16 %v453
        %v783 = vunpack.c.h.b16 %v453
        %v784 = vunpack.c.l.b16 %v454
        %v785 = vunpack.c.h.b16 %v454
        %v786 = vunpack.c.l.b16 %v455
        %v787 = vunpack.c.h.b16 %v455
        %v788 = vunpack.c.l.b16 %v456
        %v789 = vunpack.c.h.b16 %v456
        %v790 = vunpack.c.l.b16 %v457
        %v791 = vunpack.c.h.b16 %v457
        %v792 = vunpack.c.l.b16 %v458
        %v793 = vunpack.c.h.b16 %v458
        %v794 = vunpack.c.l.b16 %v459
        %v795 = vunpack.c.h.b16 %v459
        %v796 = vunpack.c.l.b16 %v460
        %v797 = vunpack.c.h.b16 %v460
        %v798 = vunpack.c.l.b16 %v461
        %v799 = vunpack.c.h.b16 %v461
        %v800 = vunpack.c.l.b16 %v462
        %v801 = vunpack.c.h.b16 %v462
        %v802 = vunpack.c.l.b16 %v463
        %v803 = vunpack.c.h.b16 %v463
        %v804 = vunpack.c.l.b16 %v464
        %v805 = vunpack.c.h.b16 %v464
        %v806 = vunpack.c.l.b16 %v465
        %v807 = vunpack.c.h.b16 %v465
        %v808 = vunpack.c.l.b16 %v466
        %v809 = vunpack.c.h.b16 %v466
        %v810 = vunpack.c.l.b16 %v467
        %v811 = vunpack.c.h.b16 %v467
        %v812 = vunpack.c.l.b16 %v468
        %v813 = vunpack.c.h.b16 %v468
        %v814 = vunpack.c.l.b16 %v469
        %v815 = vunpack.c.h.b16 %v469
        %v816 = vunpack.c.l.b16 %v470
        %v817 = vunpack.c.h.b16 %v470
        %v818 = vunpack.c.l.b16 %v471
        %v819 = vunpack.c.h.b16 %v471
        %v820 = vunpack.c.l.b16 %v472
        %v821 = vunpack.c.h.b16 %v472
        %v822 = vunpack.c.l.b16 %v473
        %v823 = vunpack.c.h.b16 %v473
        %v824 = vunpack.c.l.b16 %v474
        %v825 = vunpack.c.h.b16 %v474
        %v826 = vunpack.c.l.b16 %v475
        %v827 = vunpack.c.h.b16 %v475
        %v828 = vunpack.c.l.b16 %v476
        %v829 = vunpack.c.h.b16 %v476
        %v830 = vunpack.c.l.b16 %v477
        %v831 = vunpack.c.h.b16 %v477
        %v832 = vunpack.c.l.b16 %v478
        %v833 = vunpack.c.h.b16 %v478
        %v834 = vunpack.c.l.b16 %v479
        %v835 = vunpack.c.h.b16 %v479
        %v836 = vunpack.c.l.b16 %v480
        %v837 = vunpack.c.h.b16 %v480
        %v838 = vunpack.c.l.b16 %v481
        %v839 = vunpack.c.h.b16 %v481
        %v840 = vunpack.c.l.b16 %v482
        %v841 = vunpack.c.h.b16 %v482
        %v842 = vunpack.c.l.b16 %v483
        %v843 = vunpack.c.h.b16 %v483
        %v844 = vunpack.c.l.b16 %v484
        %v845 = vunpack.c.h.b16 %v484
        %v846 = vunpack.c.l.b16 %v485
        %v847 = vunpack.c.h.b16 %v485
        %v848 = vpack.c.b16 %v724, %v720
        %v849 = vpack.c.b16 %v725, %v721
        %v850 = vpack.c.b16 %v726, %v722
        %v851 = vpack.c.b16 %v727, %v723
        %v852 = vpack.c.b16 %v732, %v728
        %v853 = vpack.c.b16 %v733, %v729
        %v854 = vpack.c.b16 %v734, %v730
        %v855 = vpack.c.b16 %v735, %v731
        %v856 = vpack.c.b16 %v740, %v736
        %v857 = vpack.c.b16 %v741, %v737
        %v858 = vpack.c.b16 %v742, %v738
        %v859 = vpack.c.b16 %v743, %v739
        %v860 = vpack.c.b16 %v748, %v744
        %v861 = vpack.c.b16 %v749, %v745
        %v862 = vpack.c.b16 %v750, %v746
        %v863 = vpack.c.b16 %v751, %v747
        %v864 = vpack.c.b16 %v756, %v752
        %v865 = vpack.c.b16 %v757, %v753
        %v866 = vpack.c.b16 %v758, %v754
        %v867 = vpack.c.b16 %v759, %v755
        %v868 = vpack.c.b16 %v764, %v760
        %v869 = vpack.c.b16 %v765, %v761
        %v870 = vpack.c.b16 %v766, %v762
        %v871 = vpack.c.b16 %v767, %v763
        %v872 = vpack.c.b16 %v772, %v768
        %v873 = vpack.c.b16 %v773, %v769
        %v874 = vpack.c.b16 %v774, %v770
        %v875 = vpack.c.b16 %v775, %v771
        %v876 = vpack.c.b16 %v780, %v776
        %v877 = vpack.c.b16 %v781, %v777
        %v878 = vpack.c.b16 %v782, %v778
        %v879 = vpack.c.b16 %v783, %v779
        %v880 = vpack.c.b16 %v788, %v784
        %v881 = vpack.c.b16 %v789, %v785
        %v882 = vpack.c.b16 %v790, %v786
        %v883 = vpack.c.b16 %v791, %v787
        %v884 = vpack.c.b16 %v796, %v792
        %v885 = vpack.c.b16 %v797, %v793
        %v886 = vpack.c.b16 %v798, %v794
        %v887 = vpack.c.b16 %v799, %v795
        %v888 = vpack.c.b16 %v804, %v800
        %v889 = vpack.c.b16 %v805, %v801
        %v890 = vpack.c.b16 %v806, %v802
        %v891 = vpack.c.b16 %v807, %v803
        %v892 = vpack.c.b16 %v812, %v808
        %v893 = vpack.c.b16 %v813, %v809
        %v894 = vpack.c.b16 %v814, %v810
        %v895 = vpack.c.b16 %v815, %v811
        %v896 = vpack.c.b16 %v820, %v816
        %v897 = vpack.c.b16 %v821, %v817
        %v898 = vpack.c.b16 %v822, %v818
        %v899 = vpack.c.b16 %v823, %v819
        %v900 = vpack.c.b16 %v828, %v824
        %v901 = vpack.c.b16 %v829, %v825
        %v902 = vpack.c.b16 %v830, %v826
        %v903 = vpack.c.b16 %v831, %v827
        %v904 = vpack.c.b16 %v836, %v832
        %v905 = vpack.c.b16 %v837, %v833
        %v906 = vpack.c.b16 %v838, %v834
        %v907 = vpack.c.b16 %v839, %v835
        %v908 = vpack.c.b16 %v844, %v840
        %v909 = vpack.c.b16 %v845, %v841
        %v910 = vpack.c.b16 %v846, %v842
        %v911 = vpack.c.b16 %v847, %v843
        %976 = vmatpush.bf16.msra.mxu0 %v876
        %977 = vmatpush.bf16.msra.mxu0 %v872
        %978 = vmatpush.bf16.msra.mxu0 %v868
        %979 = vmatpush.bf16.msra.mxu0 %v864
        %980 = vmatpush.bf16.msra.mxu0 %v860
        %981 = vmatpush.bf16.msra.mxu0 %v856
        %982 = vmatpush.bf16.msra.mxu0 %v852
        %983 = vmatpush.bf16.msra.mxu0 %v848
        %984 = vmatmul.bf16.gmra.mxu0 %v592
        %v985 = vpop.f32.mrf.mxu0
        %v986 = vadd.f32 %v488, %v985
        %v987 = vpop.f32.mrf.mxu0
        %v988 = vadd.f32 %v488, %v987
        %989 = vmatmul.bf16.gmra.mxu0 %v594
        %v990 = vpop.f32.mrf.mxu0
        %v991 = vadd.f32 %v488, %v990
        %v992 = vpop.f32.mrf.mxu0
        %v993 = vadd.f32 %v488, %v992
        %994 = vmatmul.bf16.gmra.mxu0 %v596
        %v995 = vpop.f32.mrf.mxu0
        %v996 = vadd.f32 %v488, %v995
        %v997 = vpop.f32.mrf.mxu0
        %v998 = vadd.f32 %v488, %v997
        %999 = vmatmul.bf16.gmra.mxu0 %v598
        %v1000 = vpop.f32.mrf.mxu0
        %v1001 = vadd.f32 %v488, %v1000
        %v1002 = vpop.f32.mrf.mxu0
        %v1003 = vadd.f32 %v488, %v1002
        %1004 = vmatmul.bf16.gmra.mxu0 %v600
        %v1005 = vpop.f32.mrf.mxu0
        %v1006 = vadd.f32 %v488, %v1005
        %v1007 = vpop.f32.mrf.mxu0
        %v1008 = vadd.f32 %v488, %v1007
        %1009 = vmatmul.bf16.gmra.mxu0 %v602
        %v1010 = vpop.f32.mrf.mxu0
        %v1011 = vadd.f32 %v488, %v1010
        %v1012 = vpop.f32.mrf.mxu0
        %v1013 = vadd.f32 %v488, %v1012
        %1014 = vmatmul.bf16.gmra.mxu0 %v604
        %v1015 = vpop.f32.mrf.mxu0
        %v1016 = vadd.f32 %v488, %v1015
        %v1017 = vpop.f32.mrf.mxu0
        %v1018 = vadd.f32 %v488, %v1017
        %1019 = vmatmul.bf16.gmra.mxu0 %v606
        %v1020 = vpop.f32.mrf.mxu0
        %v1021 = vadd.f32 %v488, %v1020
        %v1022 = vpop.f32.mrf.mxu0
        %v1023 = vadd.f32 %v488, %v1022
        %1024 = vmatmul.bf16.gmra.mxu0 %v608
        %v1025 = vpop.f32.mrf.mxu0
        %v1026 = vadd.f32 %v488, %v1025
        %v1027 = vpop.f32.mrf.mxu0
        %v1028 = vadd.f32 %v488, %v1027
        %1029 = vmatmul.bf16.gmra.mxu0 %v610
        %v1030 = vpop.f32.mrf.mxu0
        %v1031 = vadd.f32 %v488, %v1030
        %v1032 = vpop.f32.mrf.mxu0
        %v1033 = vadd.f32 %v488, %v1032
        %1034 = vmatmul.bf16.gmra.mxu0 %v612
        %v1035 = vpop.f32.mrf.mxu0
        %v1036 = vadd.f32 %v488, %v1035
        %v1037 = vpop.f32.mrf.mxu0
        %v1038 = vadd.f32 %v488, %v1037
        %1039 = vmatmul.bf16.gmra.mxu0 %v614
        %v1040 = vpop.f32.mrf.mxu0
        %v1041 = vadd.f32 %v488, %v1040
        %v1042 = vpop.f32.mrf.mxu0
        %v1043 = vadd.f32 %v488, %v1042
        %1044 = vmatmul.bf16.gmra.mxu0 %v616
        %v1045 = vpop.f32.mrf.mxu0
        %v1046 = vadd.f32 %v488, %v1045
        %v1047 = vpop.f32.mrf.mxu0
        %v1048 = vadd.f32 %v488, %v1047
        %1049 = vmatmul.bf16.gmra.mxu0 %v618
        %v1050 = vpop.f32.mrf.mxu0
        %v1051 = vadd.f32 %v488, %v1050
        %v1052 = vpop.f32.mrf.mxu0
        %v1053 = vadd.f32 %v488, %v1052
        %1054 = vmatmul.bf16.gmra.mxu0 %v620
        %v1055 = vpop.f32.mrf.mxu0
        %v1056 = vadd.f32 %v488, %v1055
        %v1057 = vpop.f32.mrf.mxu0
        %v1058 = vadd.f32 %v488, %v1057
        %1059 = vmatmul.bf16.gmra.mxu0 %v622
        %v1060 = vpop.f32.mrf.mxu0
        %v1061 = vadd.f32 %v488, %v1060
        %v1062 = vpop.f32.mrf.mxu0
        %v1063 = vadd.f32 %v488, %v1062
        %1064 = vdwg.mxu0
        %1065 = vmatpush.bf16.msra.mxu0 %v908
        %1066 = vmatpush.bf16.msra.mxu0 %v904
        %1067 = vmatpush.bf16.msra.mxu0 %v900
        %1068 = vmatpush.bf16.msra.mxu0 %v896
        %1069 = vmatpush.bf16.msra.mxu0 %v892
        %1070 = vmatpush.bf16.msra.mxu0 %v888
        %1071 = vmatpush.bf16.msra.mxu0 %v884
        %1072 = vmatpush.bf16.msra.mxu0 %v880
        %1073 = vmatmul.bf16.gmra.mxu0 %v593
        %v1074 = vpop.f32.mrf.mxu0
        %v1075 = vadd.f32 %v986, %v1074
        %v1076 = vpop.f32.mrf.mxu0
        %v1077 = vadd.f32 %v988, %v1076
        %1078 = vmatmul.bf16.gmra.mxu0 %v595
        %v1079 = vpop.f32.mrf.mxu0
        %v1080 = vadd.f32 %v991, %v1079
        %v1081 = vpop.f32.mrf.mxu0
        %v1082 = vadd.f32 %v993, %v1081
        %1083 = vmatmul.bf16.gmra.mxu0 %v597
        %v1084 = vpop.f32.mrf.mxu0
        %v1085 = vadd.f32 %v996, %v1084
        %v1086 = vpop.f32.mrf.mxu0
        %v1087 = vadd.f32 %v998, %v1086
        %1088 = vmatmul.bf16.gmra.mxu0 %v599
        %v1089 = vpop.f32.mrf.mxu0
        %v1090 = vadd.f32 %v1001, %v1089
        %v1091 = vpop.f32.mrf.mxu0
        %v1092 = vadd.f32 %v1003, %v1091
        %1093 = vmatmul.bf16.gmra.mxu0 %v601
        %v1094 = vpop.f32.mrf.mxu0
        %v1095 = vadd.f32 %v1006, %v1094
        %v1096 = vpop.f32.mrf.mxu0
        %v1097 = vadd.f32 %v1008, %v1096
        %1098 = vmatmul.bf16.gmra.mxu0 %v603
        %v1099 = vpop.f32.mrf.mxu0
        %v1100 = vadd.f32 %v1011, %v1099
        %v1101 = vpop.f32.mrf.mxu0
        %v1102 = vadd.f32 %v1013, %v1101
        %1103 = vmatmul.bf16.gmra.mxu0 %v605
        %v1104 = vpop.f32.mrf.mxu0
        %v1105 = vadd.f32 %v1016, %v1104
        %v1106 = vpop.f32.mrf.mxu0
        %v1107 = vadd.f32 %v1018, %v1106
        %1108 = vmatmul.bf16.gmra.mxu0 %v607
        %v1109 = vpop.f32.mrf.mxu0
        %v1110 = vadd.f32 %v1021, %v1109
        %v1111 = vpop.f32.mrf.mxu0
        %v1112 = vadd.f32 %v1023, %v1111
        %1113 = vmatmul.bf16.gmra.mxu0 %v609
        %v1114 = vpop.f32.mrf.mxu0
        %v1115 = vadd.f32 %v1026, %v1114
        %v1116 = vpop.f32.mrf.mxu0
        %v1117 = vadd.f32 %v1028, %v1116
        %1118 = vmatmul.bf16.gmra.mxu0 %v611
        %v1119 = vpop.f32.mrf.mxu0
        %v1120 = vadd.f32 %v1031, %v1119
        %v1121 = vpop.f32.mrf.mxu0
        %v1122 = vadd.f32 %v1033, %v1121
        %1123 = vmatmul.bf16.gmra.mxu0 %v613
        %v1124 = vpop.f32.mrf.mxu0
        %v1125 = vadd.f32 %v1036, %v1124
        %v1126 = vpop.f32.mrf.mxu0
        %v1127 = vadd.f32 %v1038, %v1126
        %1128 = vmatmul.bf16.gmra.mxu0 %v615
        %v1129 = vpop.f32.mrf.mxu0
        %v1130 = vadd.f32 %v1041, %v1129
        %v1131 = vpop.f32.mrf.mxu0
        %v1132 = vadd.f32 %v1043, %v1131
        %1133 = vmatmul.bf16.gmra.mxu0 %v617
        %v1134 = vpop.f32.mrf.mxu0
        %v1135 = vadd.f32 %v1046, %v1134
        %v1136 = vpop.f32.mrf.mxu0
        %v1137 = vadd.f32 %v1048, %v1136
        %1138 = vmatmul.bf16.gmra.mxu0 %v619
        %v1139 = vpop.f32.mrf.mxu0
        %v1140 = vadd.f32 %v1051, %v1139
        %v1141 = vpop.f32.mrf.mxu0
        %v1142 = vadd.f32 %v1053, %v1141
        %1143 = vmatmul.bf16.gmra.mxu0 %v621
        %v1144 = vpop.f32.mrf.mxu0
        %v1145 = vadd.f32 %v1056, %v1144
        %v1146 = vpop.f32.mrf.mxu0
        %v1147 = vadd.f32 %v1058, %v1146
        %1148 = vmatmul.bf16.gmra.mxu0 %v623
        %v1149 = vpop.f32.mrf.mxu0
        %v1150 = vadd.f32 %v1061, %v1149
        %v1151 = vpop.f32.mrf.mxu0
        %v1152 = vadd.f32 %v1063, %v1151
        %1153 = vdwg.mxu0
        %1154 = vmatpush.bf16.msra.mxu0 %v877
        %1155 = vmatpush.bf16.msra.mxu0 %v873
        %1156 = vmatpush.bf16.msra.mxu0 %v869
        %1157 = vmatpush.bf16.msra.mxu0 %v865
        %1158 = vmatpush.bf16.msra.mxu0 %v861
        %1159 = vmatpush.bf16.msra.mxu0 %v857
        %1160 = vmatpush.bf16.msra.mxu0 %v853
        %1161 = vmatpush.bf16.msra.mxu0 %v849
        %1162 = vmatmul.bf16.gmra.mxu0 %v592
        %v1163 = vpop.f32.mrf.mxu0
        %v1164 = vadd.f32 %v489, %v1163
        %v1165 = vpop.f32.mrf.mxu0
        %v1166 = vadd.f32 %v489, %v1165
        %1167 = vmatmul.bf16.gmra.mxu0 %v594
        %v1168 = vpop.f32.mrf.mxu0
        %v1169 = vadd.f32 %v489, %v1168
        %v1170 = vpop.f32.mrf.mxu0
        %v1171 = vadd.f32 %v489, %v1170
        %1172 = vmatmul.bf16.gmra.mxu0 %v596
        %v1173 = vpop.f32.mrf.mxu0
        %v1174 = vadd.f32 %v489, %v1173
        %v1175 = vpop.f32.mrf.mxu0
        %v1176 = vadd.f32 %v489, %v1175
        %1177 = vmatmul.bf16.gmra.mxu0 %v598
        %v1178 = vpop.f32.mrf.mxu0
        %v1179 = vadd.f32 %v489, %v1178
        %v1180 = vpop.f32.mrf.mxu0
        %v1181 = vadd.f32 %v489, %v1180
        %1182 = vmatmul.bf16.gmra.mxu0 %v600
        %v1183 = vpop.f32.mrf.mxu0
        %v1184 = vadd.f32 %v489, %v1183
        %v1185 = vpop.f32.mrf.mxu0
        %v1186 = vadd.f32 %v489, %v1185
        %1187 = vmatmul.bf16.gmra.mxu0 %v602
        %v1188 = vpop.f32.mrf.mxu0
        %v1189 = vadd.f32 %v489, %v1188
        %v1190 = vpop.f32.mrf.mxu0
        %v1191 = vadd.f32 %v489, %v1190
        %1192 = vmatmul.bf16.gmra.mxu0 %v604
        %v1193 = vpop.f32.mrf.mxu0
        %v1194 = vadd.f32 %v489, %v1193
        %v1195 = vpop.f32.mrf.mxu0
        %v1196 = vadd.f32 %v489, %v1195
        %1197 = vmatmul.bf16.gmra.mxu0 %v606
        %v1198 = vpop.f32.mrf.mxu0
        %v1199 = vadd.f32 %v489, %v1198
        %v1200 = vpop.f32.mrf.mxu0
        %v1201 = vadd.f32 %v489, %v1200
        %1202 = vmatmul.bf16.gmra.mxu0 %v608
        %v1203 = vpop.f32.mrf.mxu0
        %v1204 = vadd.f32 %v489, %v1203
        %v1205 = vpop.f32.mrf.mxu0
        %v1206 = vadd.f32 %v489, %v1205
        %1207 = vmatmul.bf16.gmra.mxu0 %v610
        %v1208 = vpop.f32.mrf.mxu0
        %v1209 = vadd.f32 %v489, %v1208
        %v1210 = vpop.f32.mrf.mxu0
        %v1211 = vadd.f32 %v489, %v1210
        %1212 = vmatmul.bf16.gmra.mxu0 %v612
        %v1213 = vpop.f32.mrf.mxu0
        %v1214 = vadd.f32 %v489, %v1213
        %v1215 = vpop.f32.mrf.mxu0
        %v1216 = vadd.f32 %v489, %v1215
        %1217 = vmatmul.bf16.gmra.mxu0 %v614
        %v1218 = vpop.f32.mrf.mxu0
        %v1219 = vadd.f32 %v489, %v1218
        %v1220 = vpop.f32.mrf.mxu0
        %v1221 = vadd.f32 %v489, %v1220
        %1222 = vmatmul.bf16.gmra.mxu0 %v616
        %v1223 = vpop.f32.mrf.mxu0
        %v1224 = vadd.f32 %v489, %v1223
        %v1225 = vpop.f32.mrf.mxu0
        %v1226 = vadd.f32 %v489, %v1225
        %1227 = vmatmul.bf16.gmra.mxu0 %v618
        %v1228 = vpop.f32.mrf.mxu0
        %v1229 = vadd.f32 %v489, %v1228
        %v1230 = vpop.f32.mrf.mxu0
        %v1231 = vadd.f32 %v489, %v1230
        %1232 = vmatmul.bf16.gmra.mxu0 %v620
        %v1233 = vpop.f32.mrf.mxu0
        %v1234 = vadd.f32 %v489, %v1233
        %v1235 = vpop.f32.mrf.mxu0
        %v1236 = vadd.f32 %v489, %v1235
        %1237 = vmatmul.bf16.gmra.mxu0 %v622
        %v1238 = vpop.f32.mrf.mxu0
        %v1239 = vadd.f32 %v489, %v1238
        %v1240 = vpop.f32.mrf.mxu0
        %v1241 = vadd.f32 %v489, %v1240
        %1242 = vdwg.mxu0
        %1243 = vmatpush.bf16.msra.mxu0 %v909
        %1244 = vmatpush.bf16.msra.mxu0 %v905
        %1245 = vmatpush.bf16.msra.mxu0 %v901
        %1246 = vmatpush.bf16.msra.mxu0 %v897
        %1247 = vmatpush.bf16.msra.mxu0 %v893
        %1248 = vmatpush.bf16.msra.mxu0 %v889
        %1249 = vmatpush.bf16.msra.mxu0 %v885
        %1250 = vmatpush.bf16.msra.mxu0 %v881
        %1251 = vmatmul.bf16.gmra.mxu0 %v593
        %v1252 = vpop.f32.mrf.mxu0
        %v1253 = vadd.f32 %v1164, %v1252
        %v1254 = vpop.f32.mrf.mxu0
        %v1255 = vadd.f32 %v1166, %v1254
        %1256 = vmatmul.bf16.gmra.mxu0 %v595
        %v1257 = vpop.f32.mrf.mxu0
        %v1258 = vadd.f32 %v1169, %v1257
        %v1259 = vpop.f32.mrf.mxu0
        %v1260 = vadd.f32 %v1171, %v1259
        %1261 = vmatmul.bf16.gmra.mxu0 %v597
        %v1262 = vpop.f32.mrf.mxu0
        %v1263 = vadd.f32 %v1174, %v1262
        %v1264 = vpop.f32.mrf.mxu0
        %v1265 = vadd.f32 %v1176, %v1264
        %1266 = vmatmul.bf16.gmra.mxu0 %v599
        %v1267 = vpop.f32.mrf.mxu0
        %v1268 = vadd.f32 %v1179, %v1267
        %v1269 = vpop.f32.mrf.mxu0
        %v1270 = vadd.f32 %v1181, %v1269
        %1271 = vmatmul.bf16.gmra.mxu0 %v601
        %v1272 = vpop.f32.mrf.mxu0
        %v1273 = vadd.f32 %v1184, %v1272
        %v1274 = vpop.f32.mrf.mxu0
        %v1275 = vadd.f32 %v1186, %v1274
        %1276 = vmatmul.bf16.gmra.mxu0 %v603
        %v1277 = vpop.f32.mrf.mxu0
        %v1278 = vadd.f32 %v1189, %v1277
        %v1279 = vpop.f32.mrf.mxu0
        %v1280 = vadd.f32 %v1191, %v1279
        %1281 = vmatmul.bf16.gmra.mxu0 %v605
        %v1282 = vpop.f32.mrf.mxu0
        %v1283 = vadd.f32 %v1194, %v1282
        %v1284 = vpop.f32.mrf.mxu0
        %v1285 = vadd.f32 %v1196, %v1284
        %1286 = vmatmul.bf16.gmra.mxu0 %v607
        %v1287 = vpop.f32.mrf.mxu0
        %v1288 = vadd.f32 %v1199, %v1287
        %v1289 = vpop.f32.mrf.mxu0
        %v1290 = vadd.f32 %v1201, %v1289
        %1291 = vmatmul.bf16.gmra.mxu0 %v609
        %v1292 = vpop.f32.mrf.mxu0
        %v1293 = vadd.f32 %v1204, %v1292
        %v1294 = vpop.f32.mrf.mxu0
        %v1295 = vadd.f32 %v1206, %v1294
        %1296 = vmatmul.bf16.gmra.mxu0 %v611
        %v1297 = vpop.f32.mrf.mxu0
        %v1298 = vadd.f32 %v1209, %v1297
        %v1299 = vpop.f32.mrf.mxu0
        %v1300 = vadd.f32 %v1211, %v1299
        %1301 = vmatmul.bf16.gmra.mxu0 %v613
        %v1302 = vpop.f32.mrf.mxu0
        %v1303 = vadd.f32 %v1214, %v1302
        %v1304 = vpop.f32.mrf.mxu0
        %v1305 = vadd.f32 %v1216, %v1304
        %1306 = vmatmul.bf16.gmra.mxu0 %v615
        %v1307 = vpop.f32.mrf.mxu0
        %v1308 = vadd.f32 %v1219, %v1307
        %v1309 = vpop.f32.mrf.mxu0
        %v1310 = vadd.f32 %v1221, %v1309
        %1311 = vmatmul.bf16.gmra.mxu0 %v617
        %v1312 = vpop.f32.mrf.mxu0
        %v1313 = vadd.f32 %v1224, %v1312
        %v1314 = vpop.f32.mrf.mxu0
        %v1315 = vadd.f32 %v1226, %v1314
        %1316 = vmatmul.bf16.gmra.mxu0 %v619
        %v1317 = vpop.f32.mrf.mxu0
        %v1318 = vadd.f32 %v1229, %v1317
        %v1319 = vpop.f32.mrf.mxu0
        %v1320 = vadd.f32 %v1231, %v1319
        %1321 = vmatmul.bf16.gmra.mxu0 %v621
        %v1322 = vpop.f32.mrf.mxu0
        %v1323 = vadd.f32 %v1234, %v1322
        %v1324 = vpop.f32.mrf.mxu0
        %v1325 = vadd.f32 %v1236, %v1324
        %1326 = vmatmul.bf16.gmra.mxu0 %v623
        %v1327 = vpop.f32.mrf.mxu0
        %v1328 = vadd.f32 %v1239, %v1327
        %v1329 = vpop.f32.mrf.mxu0
        %v1330 = vadd.f32 %v1241, %v1329
        %1331 = vdwg.mxu0
        %1332 = vmatpush.bf16.msra.mxu0 %v878
        %1333 = vmatpush.bf16.msra.mxu0 %v874
        %1334 = vmatpush.bf16.msra.mxu0 %v870
        %1335 = vmatpush.bf16.msra.mxu0 %v866
        %1336 = vmatpush.bf16.msra.mxu0 %v862
        %1337 = vmatpush.bf16.msra.mxu0 %v858
        %1338 = vmatpush.bf16.msra.mxu0 %v854
        %1339 = vmatpush.bf16.msra.mxu0 %v850
        %1340 = vmatmul.bf16.gmra.mxu0 %v592
        %v1341 = vpop.f32.mrf.mxu0
        %v1342 = vadd.f32 %v490, %v1341
        %v1343 = vpop.f32.mrf.mxu0
        %v1344 = vadd.f32 %v490, %v1343
        %1345 = vmatmul.bf16.gmra.mxu0 %v594
        %v1346 = vpop.f32.mrf.mxu0
        %v1347 = vadd.f32 %v490, %v1346
        %v1348 = vpop.f32.mrf.mxu0
        %v1349 = vadd.f32 %v490, %v1348
        %1350 = vmatmul.bf16.gmra.mxu0 %v596
        %v1351 = vpop.f32.mrf.mxu0
        %v1352 = vadd.f32 %v490, %v1351
        %v1353 = vpop.f32.mrf.mxu0
        %v1354 = vadd.f32 %v490, %v1353
        %1355 = vmatmul.bf16.gmra.mxu0 %v598
        %v1356 = vpop.f32.mrf.mxu0
        %v1357 = vadd.f32 %v490, %v1356
        %v1358 = vpop.f32.mrf.mxu0
        %v1359 = vadd.f32 %v490, %v1358
        %1360 = vmatmul.bf16.gmra.mxu0 %v600
        %v1361 = vpop.f32.mrf.mxu0
        %v1362 = vadd.f32 %v490, %v1361
        %v1363 = vpop.f32.mrf.mxu0
        %v1364 = vadd.f32 %v490, %v1363
        %1365 = vmatmul.bf16.gmra.mxu0 %v602
        %v1366 = vpop.f32.mrf.mxu0
        %v1367 = vadd.f32 %v490, %v1366
        %v1368 = vpop.f32.mrf.mxu0
        %v1369 = vadd.f32 %v490, %v1368
        %1370 = vmatmul.bf16.gmra.mxu0 %v604
        %v1371 = vpop.f32.mrf.mxu0
        %v1372 = vadd.f32 %v490, %v1371
        %v1373 = vpop.f32.mrf.mxu0
        %v1374 = vadd.f32 %v490, %v1373
        %1375 = vmatmul.bf16.gmra.mxu0 %v606
        %v1376 = vpop.f32.mrf.mxu0
        %v1377 = vadd.f32 %v490, %v1376
        %v1378 = vpop.f32.mrf.mxu0
        %v1379 = vadd.f32 %v490, %v1378
        %1380 = vmatmul.bf16.gmra.mxu0 %v608
        %v1381 = vpop.f32.mrf.mxu0
        %v1382 = vadd.f32 %v490, %v1381
        %v1383 = vpop.f32.mrf.mxu0
        %v1384 = vadd.f32 %v490, %v1383
        %1385 = vmatmul.bf16.gmra.mxu0 %v610
        %v1386 = vpop.f32.mrf.mxu0
        %v1387 = vadd.f32 %v490, %v1386
        %v1388 = vpop.f32.mrf.mxu0
        %v1389 = vadd.f32 %v490, %v1388
        %1390 = vmatmul.bf16.gmra.mxu0 %v612
        %v1391 = vpop.f32.mrf.mxu0
        %v1392 = vadd.f32 %v490, %v1391
        %v1393 = vpop.f32.mrf.mxu0
        %v1394 = vadd.f32 %v490, %v1393
        %1395 = vmatmul.bf16.gmra.mxu0 %v614
        %v1396 = vpop.f32.mrf.mxu0
        %v1397 = vadd.f32 %v490, %v1396
        %v1398 = vpop.f32.mrf.mxu0
        %v1399 = vadd.f32 %v490, %v1398
        %1400 = vmatmul.bf16.gmra.mxu0 %v616
        %v1401 = vpop.f32.mrf.mxu0
        %v1402 = vadd.f32 %v490, %v1401
        %v1403 = vpop.f32.mrf.mxu0
        %v1404 = vadd.f32 %v490, %v1403
        %1405 = vmatmul.bf16.gmra.mxu0 %v618
        %v1406 = vpop.f32.mrf.mxu0
        %v1407 = vadd.f32 %v490, %v1406
        %v1408 = vpop.f32.mrf.mxu0
        %v1409 = vadd.f32 %v490, %v1408
        %1410 = vmatmul.bf16.gmra.mxu0 %v620
        %v1411 = vpop.f32.mrf.mxu0
        %v1412 = vadd.f32 %v490, %v1411
        %v1413 = vpop.f32.mrf.mxu0
        %v1414 = vadd.f32 %v490, %v1413
        %1415 = vmatmul.bf16.gmra.mxu0 %v622
        %v1416 = vpop.f32.mrf.mxu0
        %v1417 = vadd.f32 %v490, %v1416
        %v1418 = vpop.f32.mrf.mxu0
        %v1419 = vadd.f32 %v490, %v1418
        %1420 = vdwg.mxu0
        %1421 = vmatpush.bf16.msra.mxu0 %v910
        %1422 = vmatpush.bf16.msra.mxu0 %v906
        %1423 = vmatpush.bf16.msra.mxu0 %v902
        %1424 = vmatpush.bf16.msra.mxu0 %v898
        %1425 = vmatpush.bf16.msra.mxu0 %v894
        %1426 = vmatpush.bf16.msra.mxu0 %v890
        %1427 = vmatpush.bf16.msra.mxu0 %v886
        %1428 = vmatpush.bf16.msra.mxu0 %v882
        %1429 = vmatmul.bf16.gmra.mxu0 %v593
        %v1430 = vpop.f32.mrf.mxu0
        %v1431 = vadd.f32 %v1342, %v1430
        %v1432 = vpop.f32.mrf.mxu0
        %v1433 = vadd.f32 %v1344, %v1432
        %1434 = vmatmul.bf16.gmra.mxu0 %v595
        %v1435 = vpop.f32.mrf.mxu0
        %v1436 = vadd.f32 %v1347, %v1435
        %v1437 = vpop.f32.mrf.mxu0
        %v1438 = vadd.f32 %v1349, %v1437
        %1439 = vmatmul.bf16.gmra.mxu0 %v597
        %v1440 = vpop.f32.mrf.mxu0
        %v1441 = vadd.f32 %v1352, %v1440
        %v1442 = vpop.f32.mrf.mxu0
        %v1443 = vadd.f32 %v1354, %v1442
        %1444 = vmatmul.bf16.gmra.mxu0 %v599
        %v1445 = vpop.f32.mrf.mxu0
        %v1446 = vadd.f32 %v1357, %v1445
        %v1447 = vpop.f32.mrf.mxu0
        %v1448 = vadd.f32 %v1359, %v1447
        %1449 = vmatmul.bf16.gmra.mxu0 %v601
        %v1450 = vpop.f32.mrf.mxu0
        %v1451 = vadd.f32 %v1362, %v1450
        %v1452 = vpop.f32.mrf.mxu0
        %v1453 = vadd.f32 %v1364, %v1452
        %1454 = vmatmul.bf16.gmra.mxu0 %v603
        %v1455 = vpop.f32.mrf.mxu0
        %v1456 = vadd.f32 %v1367, %v1455
        %v1457 = vpop.f32.mrf.mxu0
        %v1458 = vadd.f32 %v1369, %v1457
        %1459 = vmatmul.bf16.gmra.mxu0 %v605
        %v1460 = vpop.f32.mrf.mxu0
        %v1461 = vadd.f32 %v1372, %v1460
        %v1462 = vpop.f32.mrf.mxu0
        %v1463 = vadd.f32 %v1374, %v1462
        %1464 = vmatmul.bf16.gmra.mxu0 %v607
        %v1465 = vpop.f32.mrf.mxu0
        %v1466 = vadd.f32 %v1377, %v1465
        %v1467 = vpop.f32.mrf.mxu0
        %v1468 = vadd.f32 %v1379, %v1467
        %1469 = vmatmul.bf16.gmra.mxu0 %v609
        %v1470 = vpop.f32.mrf.mxu0
        %v1471 = vadd.f32 %v1382, %v1470
        %v1472 = vpop.f32.mrf.mxu0
        %v1473 = vadd.f32 %v1384, %v1472
        %1474 = vmatmul.bf16.gmra.mxu0 %v611
        %v1475 = vpop.f32.mrf.mxu0
        %v1476 = vadd.f32 %v1387, %v1475
        %v1477 = vpop.f32.mrf.mxu0
        %v1478 = vadd.f32 %v1389, %v1477
        %1479 = vmatmul.bf16.gmra.mxu0 %v613
        %v1480 = vpop.f32.mrf.mxu0
        %v1481 = vadd.f32 %v1392, %v1480
        %v1482 = vpop.f32.mrf.mxu0
        %v1483 = vadd.f32 %v1394, %v1482
        %1484 = vmatmul.bf16.gmra.mxu0 %v615
        %v1485 = vpop.f32.mrf.mxu0
        %v1486 = vadd.f32 %v1397, %v1485
        %v1487 = vpop.f32.mrf.mxu0
        %v1488 = vadd.f32 %v1399, %v1487
        %1489 = vmatmul.bf16.gmra.mxu0 %v617
        %v1490 = vpop.f32.mrf.mxu0
        %v1491 = vadd.f32 %v1402, %v1490
        %v1492 = vpop.f32.mrf.mxu0
        %v1493 = vadd.f32 %v1404, %v1492
        %1494 = vmatmul.bf16.gmra.mxu0 %v619
        %v1495 = vpop.f32.mrf.mxu0
        %v1496 = vadd.f32 %v1407, %v1495
        %v1497 = vpop.f32.mrf.mxu0
        %v1498 = vadd.f32 %v1409, %v1497
        %1499 = vmatmul.bf16.gmra.mxu0 %v621
        %v1500 = vpop.f32.mrf.mxu0
        %v1501 = vadd.f32 %v1412, %v1500
        %v1502 = vpop.f32.mrf.mxu0
        %v1503 = vadd.f32 %v1414, %v1502
        %1504 = vmatmul.bf16.gmra.mxu0 %v623
        %v1505 = vpop.f32.mrf.mxu0
        %v1506 = vadd.f32 %v1417, %v1505
        %v1507 = vpop.f32.mrf.mxu0
        %v1508 = vadd.f32 %v1419, %v1507
        %1509 = vdwg.mxu0
        %1510 = vmatpush.bf16.msra.mxu0 %v879
        %1511 = vmatpush.bf16.msra.mxu0 %v875
        %1512 = vmatpush.bf16.msra.mxu0 %v871
        %1513 = vmatpush.bf16.msra.mxu0 %v867
        %1514 = vmatpush.bf16.msra.mxu0 %v863
        %1515 = vmatpush.bf16.msra.mxu0 %v859
        %1516 = vmatpush.bf16.msra.mxu0 %v855
        %1517 = vmatpush.bf16.msra.mxu0 %v851
        %1518 = vmatmul.bf16.gmra.mxu0 %v592
        %v1519 = vpop.f32.mrf.mxu0
        %v1520 = vadd.f32 %v491, %v1519
        %v1521 = vpop.f32.mrf.mxu0
        %v1522 = vadd.f32 %v491, %v1521
        %1523 = vmatmul.bf16.gmra.mxu0 %v594
        %v1524 = vpop.f32.mrf.mxu0
        %v1525 = vadd.f32 %v491, %v1524
        %v1526 = vpop.f32.mrf.mxu0
        %v1527 = vadd.f32 %v491, %v1526
        %1528 = vmatmul.bf16.gmra.mxu0 %v596
        %v1529 = vpop.f32.mrf.mxu0
        %v1530 = vadd.f32 %v491, %v1529
        %v1531 = vpop.f32.mrf.mxu0
        %v1532 = vadd.f32 %v491, %v1531
        %1533 = vmatmul.bf16.gmra.mxu0 %v598
        %v1534 = vpop.f32.mrf.mxu0
        %v1535 = vadd.f32 %v491, %v1534
        %v1536 = vpop.f32.mrf.mxu0
        %v1537 = vadd.f32 %v491, %v1536
        %1538 = vmatmul.bf16.gmra.mxu0 %v600
        %v1539 = vpop.f32.mrf.mxu0
        %v1540 = vadd.f32 %v491, %v1539
        %v1541 = vpop.f32.mrf.mxu0
        %v1542 = vadd.f32 %v491, %v1541
        %1543 = vmatmul.bf16.gmra.mxu0 %v602
        %v1544 = vpop.f32.mrf.mxu0
        %v1545 = vadd.f32 %v491, %v1544
        %v1546 = vpop.f32.mrf.mxu0
        %v1547 = vadd.f32 %v491, %v1546
        %1548 = vmatmul.bf16.gmra.mxu0 %v604
        %v1549 = vpop.f32.mrf.mxu0
        %v1550 = vadd.f32 %v491, %v1549
        %v1551 = vpop.f32.mrf.mxu0
        %v1552 = vadd.f32 %v491, %v1551
        %1553 = vmatmul.bf16.gmra.mxu0 %v606
        %v1554 = vpop.f32.mrf.mxu0
        %v1555 = vadd.f32 %v491, %v1554
        %v1556 = vpop.f32.mrf.mxu0
        %v1557 = vadd.f32 %v491, %v1556
        %1558 = vmatmul.bf16.gmra.mxu0 %v608
        %v1559 = vpop.f32.mrf.mxu0
        %v1560 = vadd.f32 %v491, %v1559
        %v1561 = vpop.f32.mrf.mxu0
        %v1562 = vadd.f32 %v491, %v1561
        %1563 = vmatmul.bf16.gmra.mxu0 %v610
        %v1564 = vpop.f32.mrf.mxu0
        %v1565 = vadd.f32 %v491, %v1564
        %v1566 = vpop.f32.mrf.mxu0
        %v1567 = vadd.f32 %v491, %v1566
        %1568 = vmatmul.bf16.gmra.mxu0 %v612
        %v1569 = vpop.f32.mrf.mxu0
        %v1570 = vadd.f32 %v491, %v1569
        %v1571 = vpop.f32.mrf.mxu0
        %v1572 = vadd.f32 %v491, %v1571
        %1573 = vmatmul.bf16.gmra.mxu0 %v614
        %v1574 = vpop.f32.mrf.mxu0
        %v1575 = vadd.f32 %v491, %v1574
        %v1576 = vpop.f32.mrf.mxu0
        %v1577 = vadd.f32 %v491, %v1576
        %1578 = vmatmul.bf16.gmra.mxu0 %v616
        %v1579 = vpop.f32.mrf.mxu0
        %v1580 = vadd.f32 %v491, %v1579
        %v1581 = vpop.f32.mrf.mxu0
        %v1582 = vadd.f32 %v491, %v1581
        %1583 = vmatmul.bf16.gmra.mxu0 %v618
        %v1584 = vpop.f32.mrf.mxu0
        %v1585 = vadd.f32 %v491, %v1584
        %v1586 = vpop.f32.mrf.mxu0
        %v1587 = vadd.f32 %v491, %v1586
        %1588 = vmatmul.bf16.gmra.mxu0 %v620
        %v1589 = vpop.f32.mrf.mxu0
        %v1590 = vadd.f32 %v491, %v1589
        %v1591 = vpop.f32.mrf.mxu0
        %v1592 = vadd.f32 %v491, %v1591
        %1593 = vmatmul.bf16.gmra.mxu0 %v622
        %v1594 = vpop.f32.mrf.mxu0
        %v1595 = vadd.f32 %v491, %v1594
        %v1596 = vpop.f32.mrf.mxu0
        %v1597 = vadd.f32 %v491, %v1596
        %1598 = vdwg.mxu0
        %1599 = vmatpush.bf16.msra.mxu0 %v911
        %1600 = vmatpush.bf16.msra.mxu0 %v907
        %1601 = vmatpush.bf16.msra.mxu0 %v903
        %1602 = vmatpush.bf16.msra.mxu0 %v899
        %1603 = vmatpush.bf16.msra.mxu0 %v895
        %1604 = vmatpush.bf16.msra.mxu0 %v891
        %1605 = vmatpush.bf16.msra.mxu0 %v887
        %1606 = vmatpush.bf16.msra.mxu0 %v883
        %1607 = vmatmul.bf16.gmra.mxu0 %v593
        %v1608 = vpop.f32.mrf.mxu0
        %v1609 = vadd.f32 %v1520, %v1608
        %v1610 = vpop.f32.mrf.mxu0
        %v1611 = vadd.f32 %v1522, %v1610
        %1612 = vmatmul.bf16.gmra.mxu0 %v595
        %v1613 = vpop.f32.mrf.mxu0
        %v1614 = vadd.f32 %v1525, %v1613
        %v1615 = vpop.f32.mrf.mxu0
        %v1616 = vadd.f32 %v1527, %v1615
        %1617 = vmatmul.bf16.gmra.mxu0 %v597
        %v1618 = vpop.f32.mrf.mxu0
        %v1619 = vadd.f32 %v1530, %v1618
        %v1620 = vpop.f32.mrf.mxu0
        %v1621 = vadd.f32 %v1532, %v1620
        %1622 = vmatmul.bf16.gmra.mxu0 %v599
        %v1623 = vpop.f32.mrf.mxu0
        %v1624 = vadd.f32 %v1535, %v1623
        %v1625 = vpop.f32.mrf.mxu0
        %v1626 = vadd.f32 %v1537, %v1625
        %1627 = vmatmul.bf16.gmra.mxu0 %v601
        %v1628 = vpop.f32.mrf.mxu0
        %v1629 = vadd.f32 %v1540, %v1628
        %v1630 = vpop.f32.mrf.mxu0
        %v1631 = vadd.f32 %v1542, %v1630
        %1632 = vmatmul.bf16.gmra.mxu0 %v603
        %v1633 = vpop.f32.mrf.mxu0
        %v1634 = vadd.f32 %v1545, %v1633
        %v1635 = vpop.f32.mrf.mxu0
        %v1636 = vadd.f32 %v1547, %v1635
        %1637 = vmatmul.bf16.gmra.mxu0 %v605
        %v1638 = vpop.f32.mrf.mxu0
        %v1639 = vadd.f32 %v1550, %v1638
        %v1640 = vpop.f32.mrf.mxu0
        %v1641 = vadd.f32 %v1552, %v1640
        %1642 = vmatmul.bf16.gmra.mxu0 %v607
        %v1643 = vpop.f32.mrf.mxu0
        %v1644 = vadd.f32 %v1555, %v1643
        %v1645 = vpop.f32.mrf.mxu0
        %v1646 = vadd.f32 %v1557, %v1645
        %1647 = vmatmul.bf16.gmra.mxu0 %v609
        %v1648 = vpop.f32.mrf.mxu0
        %v1649 = vadd.f32 %v1560, %v1648
        %v1650 = vpop.f32.mrf.mxu0
        %v1651 = vadd.f32 %v1562, %v1650
        %1652 = vmatmul.bf16.gmra.mxu0 %v611
        %v1653 = vpop.f32.mrf.mxu0
        %v1654 = vadd.f32 %v1565, %v1653
        %v1655 = vpop.f32.mrf.mxu0
        %v1656 = vadd.f32 %v1567, %v1655
        %1657 = vmatmul.bf16.gmra.mxu0 %v613
        %v1658 = vpop.f32.mrf.mxu0
        %v1659 = vadd.f32 %v1570, %v1658
        %v1660 = vpop.f32.mrf.mxu0
        %v1661 = vadd.f32 %v1572, %v1660
        %1662 = vmatmul.bf16.gmra.mxu0 %v615
        %v1663 = vpop.f32.mrf.mxu0
        %v1664 = vadd.f32 %v1575, %v1663
        %v1665 = vpop.f32.mrf.mxu0
        %v1666 = vadd.f32 %v1577, %v1665
        %1667 = vmatmul.bf16.gmra.mxu0 %v617
        %v1668 = vpop.f32.mrf.mxu0
        %v1669 = vadd.f32 %v1580, %v1668
        %v1670 = vpop.f32.mrf.mxu0
        %v1671 = vadd.f32 %v1582, %v1670
        %1672 = vmatmul.bf16.gmra.mxu0 %v619
        %v1673 = vpop.f32.mrf.mxu0
        %v1674 = vadd.f32 %v1585, %v1673
        %v1675 = vpop.f32.mrf.mxu0
        %v1676 = vadd.f32 %v1587, %v1675
        %1677 = vmatmul.bf16.gmra.mxu0 %v621
        %v1678 = vpop.f32.mrf.mxu0
        %v1679 = vadd.f32 %v1590, %v1678
        %v1680 = vpop.f32.mrf.mxu0
        %v1681 = vadd.f32 %v1592, %v1680
        %1682 = vmatmul.bf16.gmra.mxu0 %v623
        %v1683 = vpop.f32.mrf.mxu0
        %v1684 = vadd.f32 %v1595, %v1683
        %v1685 = vpop.f32.mrf.mxu0
        %v1686 = vadd.f32 %v1597, %v1685
        %1687 = vdwg.mxu0
        %v1688 = vmax.f32 %v1075, 0.0
        %v1689 = vmax.f32 %v1253, 0.0
        %v1690 = vmax.f32 %v1431, 0.0
        %v1691 = vmax.f32 %v1609, 0.0
        %v1692 = vmax.f32 %v1077, 0.0
        %v1693 = vmax.f32 %v1255, 0.0
        %v1694 = vmax.f32 %v1433, 0.0
        %v1695 = vmax.f32 %v1611, 0.0
        %v1696 = vmax.f32 %v1080, 0.0
        %v1697 = vmax.f32 %v1258, 0.0
        %v1698 = vmax.f32 %v1436, 0.0
        %v1699 = vmax.f32 %v1614, 0.0
        %v1700 = vmax.f32 %v1082, 0.0
        %v1701 = vmax.f32 %v1260, 0.0
        %v1702 = vmax.f32 %v1438, 0.0
        %v1703 = vmax.f32 %v1616, 0.0
        %v1704 = vmax.f32 %v1085, 0.0
        %v1705 = vmax.f32 %v1263, 0.0
        %v1706 = vmax.f32 %v1441, 0.0
        %v1707 = vmax.f32 %v1619, 0.0
        %v1708 = vmax.f32 %v1087, 0.0
        %v1709 = vmax.f32 %v1265, 0.0
        %v1710 = vmax.f32 %v1443, 0.0
        %v1711 = vmax.f32 %v1621, 0.0
        %v1712 = vmax.f32 %v1090, 0.0
        %v1713 = vmax.f32 %v1268, 0.0
        %v1714 = vmax.f32 %v1446, 0.0
        %v1715 = vmax.f32 %v1624, 0.0
        %v1716 = vmax.f32 %v1092, 0.0
        %v1717 = vmax.f32 %v1270, 0.0
        %v1718 = vmax.f32 %v1448, 0.0
        %v1719 = vmax.f32 %v1626, 0.0
        %v1720 = vmax.f32 %v1095, 0.0
        %v1721 = vmax.f32 %v1273, 0.0
        %v1722 = vmax.f32 %v1451, 0.0
        %v1723 = vmax.f32 %v1629, 0.0
        %v1724 = vmax.f32 %v1097, 0.0
        %v1725 = vmax.f32 %v1275, 0.0
        %v1726 = vmax.f32 %v1453, 0.0
        %v1727 = vmax.f32 %v1631, 0.0
        %v1728 = vmax.f32 %v1100, 0.0
        %v1729 = vmax.f32 %v1278, 0.0
        %v1730 = vmax.f32 %v1456, 0.0
        %v1731 = vmax.f32 %v1634, 0.0
        %v1732 = vmax.f32 %v1102, 0.0
        %v1733 = vmax.f32 %v1280, 0.0
        %v1734 = vmax.f32 %v1458, 0.0
        %v1735 = vmax.f32 %v1636, 0.0
        %v1736 = vmax.f32 %v1105, 0.0
        %v1737 = vmax.f32 %v1283, 0.0
        %v1738 = vmax.f32 %v1461, 0.0
        %v1739 = vmax.f32 %v1639, 0.0
        %v1740 = vmax.f32 %v1107, 0.0
        %v1741 = vmax.f32 %v1285, 0.0
        %v1742 = vmax.f32 %v1463, 0.0
        %v1743 = vmax.f32 %v1641, 0.0
        %v1744 = vmax.f32 %v1110, 0.0
        %v1745 = vmax.f32 %v1288, 0.0
        %v1746 = vmax.f32 %v1466, 0.0
        %v1747 = vmax.f32 %v1644, 0.0
        %v1748 = vmax.f32 %v1112, 0.0
        %v1749 = vmax.f32 %v1290, 0.0
        %v1750 = vmax.f32 %v1468, 0.0
        %v1751 = vmax.f32 %v1646, 0.0
        %v1752 = vmax.f32 %v1115, 0.0
        %v1753 = vmax.f32 %v1293, 0.0
        %v1754 = vmax.f32 %v1471, 0.0
        %v1755 = vmax.f32 %v1649, 0.0
        %v1756 = vmax.f32 %v1117, 0.0
        %v1757 = vmax.f32 %v1295, 0.0
        %v1758 = vmax.f32 %v1473, 0.0
        %v1759 = vmax.f32 %v1651, 0.0
        %v1760 = vmax.f32 %v1120, 0.0
        %v1761 = vmax.f32 %v1298, 0.0
        %v1762 = vmax.f32 %v1476, 0.0
        %v1763 = vmax.f32 %v1654, 0.0
        %v1764 = vmax.f32 %v1122, 0.0
        %v1765 = vmax.f32 %v1300, 0.0
        %v1766 = vmax.f32 %v1478, 0.0
        %v1767 = vmax.f32 %v1656, 0.0
        %v1768 = vmax.f32 %v1125, 0.0
        %v1769 = vmax.f32 %v1303, 0.0
        %v1770 = vmax.f32 %v1481, 0.0
        %v1771 = vmax.f32 %v1659, 0.0
        %v1772 = vmax.f32 %v1127, 0.0
        %v1773 = vmax.f32 %v1305, 0.0
        %v1774 = vmax.f32 %v1483, 0.0
        %v1775 = vmax.f32 %v1661, 0.0
        %v1776 = vmax.f32 %v1130, 0.0
        %v1777 = vmax.f32 %v1308, 0.0
        %v1778 = vmax.f32 %v1486, 0.0
        %v1779 = vmax.f32 %v1664, 0.0
        %v1780 = vmax.f32 %v1132, 0.0
        %v1781 = vmax.f32 %v1310, 0.0
        %v1782 = vmax.f32 %v1488, 0.0
        %v1783 = vmax.f32 %v1666, 0.0
        %v1784 = vmax.f32 %v1135, 0.0
        %v1785 = vmax.f32 %v1313, 0.0
        %v1786 = vmax.f32 %v1491, 0.0
        %v1787 = vmax.f32 %v1669, 0.0
        %v1788 = vmax.f32 %v1137, 0.0
        %v1789 = vmax.f32 %v1315, 0.0
        %v1790 = vmax.f32 %v1493, 0.0
        %v1791 = vmax.f32 %v1671, 0.0
        %v1792 = vmax.f32 %v1140, 0.0
        %v1793 = vmax.f32 %v1318, 0.0
        %v1794 = vmax.f32 %v1496, 0.0
        %v1795 = vmax.f32 %v1674, 0.0
        %v1796 = vmax.f32 %v1142, 0.0
        %v1797 = vmax.f32 %v1320, 0.0
        %v1798 = vmax.f32 %v1498, 0.0
        %v1799 = vmax.f32 %v1676, 0.0
        %v1800 = vmax.f32 %v1145, 0.0
        %v1801 = vmax.f32 %v1323, 0.0
        %v1802 = vmax.f32 %v1501, 0.0
        %v1803 = vmax.f32 %v1679, 0.0
        %v1804 = vmax.f32 %v1147, 0.0
        %v1805 = vmax.f32 %v1325, 0.0
        %v1806 = vmax.f32 %v1503, 0.0
        %v1807 = vmax.f32 %v1681, 0.0
        %v1808 = vmax.f32 %v1150, 0.0
        %v1809 = vmax.f32 %v1328, 0.0
        %v1810 = vmax.f32 %v1506, 0.0
        %v1811 = vmax.f32 %v1684, 0.0
        %v1812 = vmax.f32 %v1152, 0.0
        %v1813 = vmax.f32 %v1330, 0.0
        %v1814 = vmax.f32 %v1508, 0.0
        %v1815 = vmax.f32 %v1686, 0.0
        %v1816 = vpack.c.bf16 %v1692, %v1688
        %v1817 = vpack.c.bf16 %v1693, %v1689
        %v1818 = vpack.c.bf16 %v1694, %v1690
        %v1819 = vpack.c.bf16 %v1695, %v1691
        %v1820 = vpack.c.bf16 %v1700, %v1696
        %v1821 = vpack.c.bf16 %v1701, %v1697
        %v1822 = vpack.c.bf16 %v1702, %v1698
        %v1823 = vpack.c.bf16 %v1703, %v1699
        %v1824 = vpack.c.bf16 %v1708, %v1704
        %v1825 = vpack.c.bf16 %v1709, %v1705
        %v1826 = vpack.c.bf16 %v1710, %v1706
        %v1827 = vpack.c.bf16 %v1711, %v1707
        %v1828 = vpack.c.bf16 %v1716, %v1712
        %v1829 = vpack.c.bf16 %v1717, %v1713
        %v1830 = vpack.c.bf16 %v1718, %v1714
        %v1831 = vpack.c.bf16 %v1719, %v1715
        %v1832 = vpack.c.bf16 %v1724, %v1720
        %v1833 = vpack.c.bf16 %v1725, %v1721
        %v1834 = vpack.c.bf16 %v1726, %v1722
        %v1835 = vpack.c.bf16 %v1727, %v1723
        %v1836 = vpack.c.bf16 %v1732, %v1728
        %v1837 = vpack.c.bf16 %v1733, %v1729
        %v1838 = vpack.c.bf16 %v1734, %v1730
        %v1839 = vpack.c.bf16 %v1735, %v1731
        %v1840 = vpack.c.bf16 %v1740, %v1736
        %v1841 = vpack.c.bf16 %v1741, %v1737
        %v1842 = vpack.c.bf16 %v1742, %v1738
        %v1843 = vpack.c.bf16 %v1743, %v1739
        %v1844 = vpack.c.bf16 %v1748, %v1744
        %v1845 = vpack.c.bf16 %v1749, %v1745
        %v1846 = vpack.c.bf16 %v1750, %v1746
        %v1847 = vpack.c.bf16 %v1751, %v1747
        %v1848 = vpack.c.bf16 %v1756, %v1752
        %v1849 = vpack.c.bf16 %v1757, %v1753
        %v1850 = vpack.c.bf16 %v1758, %v1754
        %v1851 = vpack.c.bf16 %v1759, %v1755
        %v1852 = vpack.c.bf16 %v1764, %v1760
        %v1853 = vpack.c.bf16 %v1765, %v1761
        %v1854 = vpack.c.bf16 %v1766, %v1762
        %v1855 = vpack.c.bf16 %v1767, %v1763
        %v1856 = vpack.c.bf16 %v1772, %v1768
        %v1857 = vpack.c.bf16 %v1773, %v1769
        %v1858 = vpack.c.bf16 %v1774, %v1770
        %v1859 = vpack.c.bf16 %v1775, %v1771
        %v1860 = vpack.c.bf16 %v1780, %v1776
        %v1861 = vpack.c.bf16 %v1781, %v1777
        %v1862 = vpack.c.bf16 %v1782, %v1778
        %v1863 = vpack.c.bf16 %v1783, %v1779
        %v1864 = vpack.c.bf16 %v1788, %v1784
        %v1865 = vpack.c.bf16 %v1789, %v1785
        %v1866 = vpack.c.bf16 %v1790, %v1786
        %v1867 = vpack.c.bf16 %v1791, %v1787
        %v1868 = vpack.c.bf16 %v1796, %v1792
        %v1869 = vpack.c.bf16 %v1797, %v1793
        %v1870 = vpack.c.bf16 %v1798, %v1794
        %v1871 = vpack.c.bf16 %v1799, %v1795
        %v1872 = vpack.c.bf16 %v1804, %v1800
        %v1873 = vpack.c.bf16 %v1805, %v1801
        %v1874 = vpack.c.bf16 %v1806, %v1802
        %v1875 = vpack.c.bf16 %v1807, %v1803
        %v1876 = vpack.c.bf16 %v1812, %v1808
        %v1877 = vpack.c.bf16 %v1813, %v1809
        %v1878 = vpack.c.bf16 %v1814, %v1810
        %v1879 = vpack.c.bf16 %v1815, %v1811
        %v1880 = vld [vmem:[#allocation7] sm:$0xff]
        %v1881 = vld [vmem:[#allocation7 + $0x8] sm:$0xff]
        %v1882 = vld [vmem:[#allocation7 + $0x10] sm:$0xff]
        %v1883 = vld [vmem:[#allocation7 + $0x18] sm:$0xff]
        %v1884 = vld [vmem:[#allocation7 + $0x20] sm:$0xff]
        %v1885 = vld [vmem:[#allocation7 + $0x28] sm:$0xff]
        %v1886 = vld [vmem:[#allocation7 + $0x30] sm:$0xff]
        %v1887 = vld [vmem:[#allocation7 + $0x38] sm:$0xff]
        %v1888 = vld [vmem:[#allocation7 + $0x40] sm:$0xff]
        %v1889 = vld [vmem:[#allocation7 + $0x48] sm:$0xff]
        %v1890 = vld [vmem:[#allocation7 + $0x50] sm:$0xff]
        %v1891 = vld [vmem:[#allocation7 + $0x58] sm:$0xff]
        %v1892 = vld [vmem:[#allocation7 + $0x60] sm:$0xff]
        %v1893 = vld [vmem:[#allocation7 + $0x68] sm:$0xff]
        %v1894 = vld [vmem:[#allocation7 + $0x70] sm:$0xff]
        %v1895 = vld [vmem:[#allocation7 + $0x78] sm:$0xff]
        %v1896 = vld [vmem:[#allocation7 + $0x80] sm:$0xff]
        %v1897 = vld [vmem:[#allocation7 + $0x88] sm:$0xff]
        %v1898 = vld [vmem:[#allocation7 + $0x90] sm:$0xff]
        %v1899 = vld [vmem:[#allocation7 + $0x98] sm:$0xff]
        %v1900 = vld [vmem:[#allocation7 + $0xa0] sm:$0xff]
        %v1901 = vld [vmem:[#allocation7 + $0xa8] sm:$0xff]
        %v1902 = vld [vmem:[#allocation7 + $0xb0] sm:$0xff]
        %v1903 = vld [vmem:[#allocation7 + $0xb8] sm:$0xff]
        %v1904 = vld [vmem:[#allocation7 + $0xc0] sm:$0xff]
        %v1905 = vld [vmem:[#allocation7 + $0xc8] sm:$0xff]
        %v1906 = vld [vmem:[#allocation7 + $0xd0] sm:$0xff]
        %v1907 = vld [vmem:[#allocation7 + $0xd8] sm:$0xff]
        %v1908 = vld [vmem:[#allocation7 + $0xe0] sm:$0xff]
        %v1909 = vld [vmem:[#allocation7 + $0xe8] sm:$0xff]
        %v1910 = vld [vmem:[#allocation7 + $0xf0] sm:$0xff]
        %v1911 = vld [vmem:[#allocation7 + $0xf8] sm:$0xff]
        %v1912 = vld [vmem:[#allocation7 + $0x100] sm:$0xff]
        %v1913 = vld [vmem:[#allocation7 + $0x108] sm:$0xff]
        %v1914 = vld [vmem:[#allocation7 + $0x110] sm:$0xff]
        %v1915 = vld [vmem:[#allocation7 + $0x118] sm:$0xff]
        %v1916 = vld [vmem:[#allocation7 + $0x120] sm:$0xff]
        %v1917 = vld [vmem:[#allocation7 + $0x128] sm:$0xff]
        %v1918 = vld [vmem:[#allocation7 + $0x130] sm:$0xff]
        %v1919 = vld [vmem:[#allocation7 + $0x138] sm:$0xff]
        %v1920 = vld [vmem:[#allocation7 + $0x140] sm:$0xff]
        %v1921 = vld [vmem:[#allocation7 + $0x148] sm:$0xff]
        %v1922 = vld [vmem:[#allocation7 + $0x150] sm:$0xff]
        %v1923 = vld [vmem:[#allocation7 + $0x158] sm:$0xff]
        %v1924 = vld [vmem:[#allocation7 + $0x160] sm:$0xff]
        %v1925 = vld [vmem:[#allocation7 + $0x168] sm:$0xff]
        %v1926 = vld [vmem:[#allocation7 + $0x170] sm:$0xff]
        %v1927 = vld [vmem:[#allocation7 + $0x178] sm:$0xff]
        %v1928 = vld [vmem:[#allocation7 + $0x180] sm:$0xff]
        %v1929 = vld [vmem:[#allocation7 + $0x188] sm:$0xff]
        %v1930 = vld [vmem:[#allocation7 + $0x190] sm:$0xff]
        %v1931 = vld [vmem:[#allocation7 + $0x198] sm:$0xff]
        %v1932 = vld [vmem:[#allocation7 + $0x1a0] sm:$0xff]
        %v1933 = vld [vmem:[#allocation7 + $0x1a8] sm:$0xff]
        %v1934 = vld [vmem:[#allocation7 + $0x1b0] sm:$0xff]
        %v1935 = vld [vmem:[#allocation7 + $0x1b8] sm:$0xff]
        %v1936 = vld [vmem:[#allocation7 + $0x1c0] sm:$0xff]
        %v1937 = vld [vmem:[#allocation7 + $0x1c8] sm:$0xff]
        %v1938 = vld [vmem:[#allocation7 + $0x1d0] sm:$0xff]
        %v1939 = vld [vmem:[#allocation7 + $0x1d8] sm:$0xff]
        %v1940 = vld [vmem:[#allocation7 + $0x1e0] sm:$0xff]
        %v1941 = vld [vmem:[#allocation7 + $0x1e8] sm:$0xff]
        %v1942 = vld [vmem:[#allocation7 + $0x1f0] sm:$0xff]
        %v1943 = vld [vmem:[#allocation7 + $0x1f8] sm:$0xff]
        %v1944 = vld [vmem:[%s4] sm:$0x3]
        %v1946 = vperm.slane %v1944, 0
        %v1947 = vperm.slane %v1944, 1
        %v2014 = vunpack.c.l.b16 %v1880
        %v2015 = vunpack.c.h.b16 %v1880
        %v2016 = vunpack.c.l.b16 %v1881
        %v2017 = vunpack.c.h.b16 %v1881
        %v2018 = vunpack.c.l.b16 %v1882
        %v2019 = vunpack.c.h.b16 %v1882
        %v2020 = vunpack.c.l.b16 %v1883
        %v2021 = vunpack.c.h.b16 %v1883
        %v2022 = vunpack.c.l.b16 %v1884
        %v2023 = vunpack.c.h.b16 %v1884
        %v2024 = vunpack.c.l.b16 %v1885
        %v2025 = vunpack.c.h.b16 %v1885
        %v2026 = vunpack.c.l.b16 %v1886
        %v2027 = vunpack.c.h.b16 %v1886
        %v2028 = vunpack.c.l.b16 %v1887
        %v2029 = vunpack.c.h.b16 %v1887
        %v2030 = vunpack.c.l.b16 %v1888
        %v2031 = vunpack.c.h.b16 %v1888
        %v2032 = vunpack.c.l.b16 %v1889
        %v2033 = vunpack.c.h.b16 %v1889
        %v2034 = vunpack.c.l.b16 %v1890
        %v2035 = vunpack.c.h.b16 %v1890
        %v2036 = vunpack.c.l.b16 %v1891
        %v2037 = vunpack.c.h.b16 %v1891
        %v2038 = vunpack.c.l.b16 %v1892
        %v2039 = vunpack.c.h.b16 %v1892
        %v2040 = vunpack.c.l.b16 %v1893
        %v2041 = vunpack.c.h.b16 %v1893
        %v2042 = vunpack.c.l.b16 %v1894
        %v2043 = vunpack.c.h.b16 %v1894
        %v2044 = vunpack.c.l.b16 %v1895
        %v2045 = vunpack.c.h.b16 %v1895
        %v2046 = vunpack.c.l.b16 %v1896
        %v2047 = vunpack.c.h.b16 %v1896
        %v2048 = vunpack.c.l.b16 %v1897
        %v2049 = vunpack.c.h.b16 %v1897
        %v2050 = vunpack.c.l.b16 %v1898
        %v2051 = vunpack.c.h.b16 %v1898
        %v2052 = vunpack.c.l.b16 %v1899
        %v2053 = vunpack.c.h.b16 %v1899
        %v2054 = vunpack.c.l.b16 %v1900
        %v2055 = vunpack.c.h.b16 %v1900
        %v2056 = vunpack.c.l.b16 %v1901
        %v2057 = vunpack.c.h.b16 %v1901
        %v2058 = vunpack.c.l.b16 %v1902
        %v2059 = vunpack.c.h.b16 %v1902
        %v2060 = vunpack.c.l.b16 %v1903
        %v2061 = vunpack.c.h.b16 %v1903
        %v2062 = vunpack.c.l.b16 %v1904
        %v2063 = vunpack.c.h.b16 %v1904
        %v2064 = vunpack.c.l.b16 %v1905
        %v2065 = vunpack.c.h.b16 %v1905
        %v2066 = vunpack.c.l.b16 %v1906
        %v2067 = vunpack.c.h.b16 %v1906
        %v2068 = vunpack.c.l.b16 %v1907
        %v2069 = vunpack.c.h.b16 %v1907
        %v2070 = vunpack.c.l.b16 %v1908
        %v2071 = vunpack.c.h.b16 %v1908
        %v2072 = vunpack.c.l.b16 %v1909
        %v2073 = vunpack.c.h.b16 %v1909
        %v2074 = vunpack.c.l.b16 %v1910
        %v2075 = vunpack.c.h.b16 %v1910
        %v2076 = vunpack.c.l.b16 %v1911
        %v2077 = vunpack.c.h.b16 %v1911
        %v2078 = vunpack.c.l.b16 %v1912
        %v2079 = vunpack.c.h.b16 %v1912
        %v2080 = vunpack.c.l.b16 %v1913
        %v2081 = vunpack.c.h.b16 %v1913
        %v2082 = vunpack.c.l.b16 %v1914
        %v2083 = vunpack.c.h.b16 %v1914
        %v2084 = vunpack.c.l.b16 %v1915
        %v2085 = vunpack.c.h.b16 %v1915
        %v2086 = vunpack.c.l.b16 %v1916
        %v2087 = vunpack.c.h.b16 %v1916
        %v2088 = vunpack.c.l.b16 %v1917
        %v2089 = vunpack.c.h.b16 %v1917
        %v2090 = vunpack.c.l.b16 %v1918
        %v2091 = vunpack.c.h.b16 %v1918
        %v2092 = vunpack.c.l.b16 %v1919
        %v2093 = vunpack.c.h.b16 %v1919
        %v2094 = vunpack.c.l.b16 %v1920
        %v2095 = vunpack.c.h.b16 %v1920
        %v2096 = vunpack.c.l.b16 %v1921
        %v2097 = vunpack.c.h.b16 %v1921
        %v2098 = vunpack.c.l.b16 %v1922
        %v2099 = vunpack.c.h.b16 %v1922
        %v2100 = vunpack.c.l.b16 %v1923
        %v2101 = vunpack.c.h.b16 %v1923
        %v2102 = vunpack.c.l.b16 %v1924
        %v2103 = vunpack.c.h.b16 %v1924
        %v2104 = vunpack.c.l.b16 %v1925
        %v2105 = vunpack.c.h.b16 %v1925
        %v2106 = vunpack.c.l.b16 %v1926
        %v2107 = vunpack.c.h.b16 %v1926
        %v2108 = vunpack.c.l.b16 %v1927
        %v2109 = vunpack.c.h.b16 %v1927
        %v2110 = vunpack.c.l.b16 %v1928
        %v2111 = vunpack.c.h.b16 %v1928
        %v2112 = vunpack.c.l.b16 %v1929
        %v2113 = vunpack.c.h.b16 %v1929
        %v2114 = vunpack.c.l.b16 %v1930
        %v2115 = vunpack.c.h.b16 %v1930
        %v2116 = vunpack.c.l.b16 %v1931
        %v2117 = vunpack.c.h.b16 %v1931
        %v2118 = vunpack.c.l.b16 %v1932
        %v2119 = vunpack.c.h.b16 %v1932
        %v2120 = vunpack.c.l.b16 %v1933
        %v2121 = vunpack.c.h.b16 %v1933
        %v2122 = vunpack.c.l.b16 %v1934
        %v2123 = vunpack.c.h.b16 %v1934
        %v2124 = vunpack.c.l.b16 %v1935
        %v2125 = vunpack.c.h.b16 %v1935
        %v2126 = vunpack.c.l.b16 %v1936
        %v2127 = vunpack.c.h.b16 %v1936
        %v2128 = vunpack.c.l.b16 %v1937
        %v2129 = vunpack.c.h.b16 %v1937
        %v2130 = vunpack.c.l.b16 %v1938
        %v2131 = vunpack.c.h.b16 %v1938
        %v2132 = vunpack.c.l.b16 %v1939
        %v2133 = vunpack.c.h.b16 %v1939
        %v2134 = vunpack.c.l.b16 %v1940
        %v2135 = vunpack.c.h.b16 %v1940
        %v2136 = vunpack.c.l.b16 %v1941
        %v2137 = vunpack.c.h.b16 %v1941
        %v2138 = vunpack.c.l.b16 %v1942
        %v2139 = vunpack.c.h.b16 %v1942
        %v2140 = vunpack.c.l.b16 %v1943
        %v2141 = vunpack.c.h.b16 %v1943
        %v2142 = vpack.c.b16 %v2016, %v2014
        %v2143 = vpack.c.b16 %v2017, %v2015
        %v2144 = vpack.c.b16 %v2020, %v2018
        %v2145 = vpack.c.b16 %v2021, %v2019
        %v2146 = vpack.c.b16 %v2024, %v2022
        %v2147 = vpack.c.b16 %v2025, %v2023
        %v2148 = vpack.c.b16 %v2028, %v2026
        %v2149 = vpack.c.b16 %v2029, %v2027
        %v2150 = vpack.c.b16 %v2032, %v2030
        %v2151 = vpack.c.b16 %v2033, %v2031
        %v2152 = vpack.c.b16 %v2036, %v2034
        %v2153 = vpack.c.b16 %v2037, %v2035
        %v2154 = vpack.c.b16 %v2040, %v2038
        %v2155 = vpack.c.b16 %v2041, %v2039
        %v2156 = vpack.c.b16 %v2044, %v2042
        %v2157 = vpack.c.b16 %v2045, %v2043
        %v2158 = vpack.c.b16 %v2048, %v2046
        %v2159 = vpack.c.b16 %v2049, %v2047
        %v2160 = vpack.c.b16 %v2052, %v2050
        %v2161 = vpack.c.b16 %v2053, %v2051
        %v2162 = vpack.c.b16 %v2056, %v2054
        %v2163 = vpack.c.b16 %v2057, %v2055
        %v2164 = vpack.c.b16 %v2060, %v2058
        %v2165 = vpack.c.b16 %v2061, %v2059
        %v2166 = vpack.c.b16 %v2064, %v2062
        %v2167 = vpack.c.b16 %v2065, %v2063
        %v2168 = vpack.c.b16 %v2068, %v2066
        %v2169 = vpack.c.b16 %v2069, %v2067
        %v2170 = vpack.c.b16 %v2072, %v2070
        %v2171 = vpack.c.b16 %v2073, %v2071
        %v2172 = vpack.c.b16 %v2076, %v2074
        %v2173 = vpack.c.b16 %v2077, %v2075
        %v2174 = vpack.c.b16 %v2080, %v2078
        %v2175 = vpack.c.b16 %v2081, %v2079
        %v2176 = vpack.c.b16 %v2084, %v2082
        %v2177 = vpack.c.b16 %v2085, %v2083
        %v2178 = vpack.c.b16 %v2088, %v2086
        %v2179 = vpack.c.b16 %v2089, %v2087
        %v2180 = vpack.c.b16 %v2092, %v2090
        %v2181 = vpack.c.b16 %v2093, %v2091
        %v2182 = vpack.c.b16 %v2096, %v2094
        %v2183 = vpack.c.b16 %v2097, %v2095
        %v2184 = vpack.c.b16 %v2100, %v2098
        %v2185 = vpack.c.b16 %v2101, %v2099
        %v2186 = vpack.c.b16 %v2104, %v2102
        %v2187 = vpack.c.b16 %v2105, %v2103
        %v2188 = vpack.c.b16 %v2108, %v2106
        %v2189 = vpack.c.b16 %v2109, %v2107
        %v2190 = vpack.c.b16 %v2112, %v2110
        %v2191 = vpack.c.b16 %v2113, %v2111
        %v2192 = vpack.c.b16 %v2116, %v2114
        %v2193 = vpack.c.b16 %v2117, %v2115
        %v2194 = vpack.c.b16 %v2120, %v2118
        %v2195 = vpack.c.b16 %v2121, %v2119
        %v2196 = vpack.c.b16 %v2124, %v2122
        %v2197 = vpack.c.b16 %v2125, %v2123
        %v2198 = vpack.c.b16 %v2128, %v2126
        %v2199 = vpack.c.b16 %v2129, %v2127
        %v2200 = vpack.c.b16 %v2132, %v2130
        %v2201 = vpack.c.b16 %v2133, %v2131
        %v2202 = vpack.c.b16 %v2136, %v2134
        %v2203 = vpack.c.b16 %v2137, %v2135
        %v2204 = vpack.c.b16 %v2140, %v2138
        %v2205 = vpack.c.b16 %v2141, %v2139
        %2270 = vmatpush.bf16.msra.mxu0 %v2156
        %2271 = vmatpush.bf16.msra.mxu0 %v2154
        %2272 = vmatpush.bf16.msra.mxu0 %v2152
        %2273 = vmatpush.bf16.msra.mxu0 %v2150
        %2274 = vmatpush.bf16.msra.mxu0 %v2148
        %2275 = vmatpush.bf16.msra.mxu0 %v2146
        %2276 = vmatpush.bf16.msra.mxu0 %v2144
        %2277 = vmatpush.bf16.msra.mxu0 %v2142
        %2278 = vmatmul.bf16.gmra.mxu0 %v1816
        %v2279 = vpop.f32.mrf.mxu0
        %v2280 = vadd.f32 %v1946, %v2279
        %v2281 = vpop.f32.mrf.mxu0
        %v2282 = vadd.f32 %v1946, %v2281
        %2283 = vmatmul.bf16.gmra.mxu0 %v1820
        %v2284 = vpop.f32.mrf.mxu0
        %v2285 = vadd.f32 %v1946, %v2284
        %v2286 = vpop.f32.mrf.mxu0
        %v2287 = vadd.f32 %v1946, %v2286
        %2288 = vmatmul.bf16.gmra.mxu0 %v1824
        %v2289 = vpop.f32.mrf.mxu0
        %v2290 = vadd.f32 %v1946, %v2289
        %v2291 = vpop.f32.mrf.mxu0
        %v2292 = vadd.f32 %v1946, %v2291
        %2293 = vmatmul.bf16.gmra.mxu0 %v1828
        %v2294 = vpop.f32.mrf.mxu0
        %v2295 = vadd.f32 %v1946, %v2294
        %v2296 = vpop.f32.mrf.mxu0
        %v2297 = vadd.f32 %v1946, %v2296
        %2298 = vmatmul.bf16.gmra.mxu0 %v1832
        %v2299 = vpop.f32.mrf.mxu0
        %v2300 = vadd.f32 %v1946, %v2299
        %v2301 = vpop.f32.mrf.mxu0
        %v2302 = vadd.f32 %v1946, %v2301
        %2303 = vmatmul.bf16.gmra.mxu0 %v1836
        %v2304 = vpop.f32.mrf.mxu0
        %v2305 = vadd.f32 %v1946, %v2304
        %v2306 = vpop.f32.mrf.mxu0
        %v2307 = vadd.f32 %v1946, %v2306
        %2308 = vmatmul.bf16.gmra.mxu0 %v1840
        %v2309 = vpop.f32.mrf.mxu0
        %v2310 = vadd.f32 %v1946, %v2309
        %v2311 = vpop.f32.mrf.mxu0
        %v2312 = vadd.f32 %v1946, %v2311
        %2313 = vmatmul.bf16.gmra.mxu0 %v1844
        %v2314 = vpop.f32.mrf.mxu0
        %v2315 = vadd.f32 %v1946, %v2314
        %v2316 = vpop.f32.mrf.mxu0
        %v2317 = vadd.f32 %v1946, %v2316
        %2318 = vmatmul.bf16.gmra.mxu0 %v1848
        %v2319 = vpop.f32.mrf.mxu0
        %v2320 = vadd.f32 %v1946, %v2319
        %v2321 = vpop.f32.mrf.mxu0
        %v2322 = vadd.f32 %v1946, %v2321
        %2323 = vmatmul.bf16.gmra.mxu0 %v1852
        %v2324 = vpop.f32.mrf.mxu0
        %v2325 = vadd.f32 %v1946, %v2324
        %v2326 = vpop.f32.mrf.mxu0
        %v2327 = vadd.f32 %v1946, %v2326
        %2328 = vmatmul.bf16.gmra.mxu0 %v1856
        %v2329 = vpop.f32.mrf.mxu0
        %v2330 = vadd.f32 %v1946, %v2329
        %v2331 = vpop.f32.mrf.mxu0
        %v2332 = vadd.f32 %v1946, %v2331
        %2333 = vmatmul.bf16.gmra.mxu0 %v1860
        %v2334 = vpop.f32.mrf.mxu0
        %v2335 = vadd.f32 %v1946, %v2334
        %v2336 = vpop.f32.mrf.mxu0
        %v2337 = vadd.f32 %v1946, %v2336
        %2338 = vmatmul.bf16.gmra.mxu0 %v1864
        %v2339 = vpop.f32.mrf.mxu0
        %v2340 = vadd.f32 %v1946, %v2339
        %v2341 = vpop.f32.mrf.mxu0
        %v2342 = vadd.f32 %v1946, %v2341
        %2343 = vmatmul.bf16.gmra.mxu0 %v1868
        %v2344 = vpop.f32.mrf.mxu0
        %v2345 = vadd.f32 %v1946, %v2344
        %v2346 = vpop.f32.mrf.mxu0
        %v2347 = vadd.f32 %v1946, %v2346
        %2348 = vmatmul.bf16.gmra.mxu0 %v1872
        %v2349 = vpop.f32.mrf.mxu0
        %v2350 = vadd.f32 %v1946, %v2349
        %v2351 = vpop.f32.mrf.mxu0
        %v2352 = vadd.f32 %v1946, %v2351
        %2353 = vmatmul.bf16.gmra.mxu0 %v1876
        %v2354 = vpop.f32.mrf.mxu0
        %v2355 = vadd.f32 %v1946, %v2354
        %v2356 = vpop.f32.mrf.mxu0
        %v2357 = vadd.f32 %v1946, %v2356
        %2358 = vdwg.mxu0
        %2359 = vmatpush.bf16.msra.mxu0 %v2172
        %2360 = vmatpush.bf16.msra.mxu0 %v2170
        %2361 = vmatpush.bf16.msra.mxu0 %v2168
        %2362 = vmatpush.bf16.msra.mxu0 %v2166
        %2363 = vmatpush.bf16.msra.mxu0 %v2164
        %2364 = vmatpush.bf16.msra.mxu0 %v2162
        %2365 = vmatpush.bf16.msra.mxu0 %v2160
        %2366 = vmatpush.bf16.msra.mxu0 %v2158
        %2367 = vmatmul.bf16.gmra.mxu0 %v1817
        %v2368 = vpop.f32.mrf.mxu0
        %v2369 = vadd.f32 %v2280, %v2368
        %v2370 = vpop.f32.mrf.mxu0
        %v2371 = vadd.f32 %v2282, %v2370
        %2372 = vmatmul.bf16.gmra.mxu0 %v1821
        %v2373 = vpop.f32.mrf.mxu0
        %v2374 = vadd.f32 %v2285, %v2373
        %v2375 = vpop.f32.mrf.mxu0
        %v2376 = vadd.f32 %v2287, %v2375
        %2377 = vmatmul.bf16.gmra.mxu0 %v1825
        %v2378 = vpop.f32.mrf.mxu0
        %v2379 = vadd.f32 %v2290, %v2378
        %v2380 = vpop.f32.mrf.mxu0
        %v2381 = vadd.f32 %v2292, %v2380
        %2382 = vmatmul.bf16.gmra.mxu0 %v1829
        %v2383 = vpop.f32.mrf.mxu0
        %v2384 = vadd.f32 %v2295, %v2383
        %v2385 = vpop.f32.mrf.mxu0
        %v2386 = vadd.f32 %v2297, %v2385
        %2387 = vmatmul.bf16.gmra.mxu0 %v1833
        %v2388 = vpop.f32.mrf.mxu0
        %v2389 = vadd.f32 %v2300, %v2388
        %v2390 = vpop.f32.mrf.mxu0
        %v2391 = vadd.f32 %v2302, %v2390
        %2392 = vmatmul.bf16.gmra.mxu0 %v1837
        %v2393 = vpop.f32.mrf.mxu0
        %v2394 = vadd.f32 %v2305, %v2393
        %v2395 = vpop.f32.mrf.mxu0
        %v2396 = vadd.f32 %v2307, %v2395
        %2397 = vmatmul.bf16.gmra.mxu0 %v1841
        %v2398 = vpop.f32.mrf.mxu0
        %v2399 = vadd.f32 %v2310, %v2398
        %v2400 = vpop.f32.mrf.mxu0
        %v2401 = vadd.f32 %v2312, %v2400
        %2402 = vmatmul.bf16.gmra.mxu0 %v1845
        %v2403 = vpop.f32.mrf.mxu0
        %v2404 = vadd.f32 %v2315, %v2403
        %v2405 = vpop.f32.mrf.mxu0
        %v2406 = vadd.f32 %v2317, %v2405
        %2407 = vmatmul.bf16.gmra.mxu0 %v1849
        %v2408 = vpop.f32.mrf.mxu0
        %v2409 = vadd.f32 %v2320, %v2408
        %v2410 = vpop.f32.mrf.mxu0
        %v2411 = vadd.f32 %v2322, %v2410
        %2412 = vmatmul.bf16.gmra.mxu0 %v1853
        %v2413 = vpop.f32.mrf.mxu0
        %v2414 = vadd.f32 %v2325, %v2413
        %v2415 = vpop.f32.mrf.mxu0
        %v2416 = vadd.f32 %v2327, %v2415
        %2417 = vmatmul.bf16.gmra.mxu0 %v1857
        %v2418 = vpop.f32.mrf.mxu0
        %v2419 = vadd.f32 %v2330, %v2418
        %v2420 = vpop.f32.mrf.mxu0
        %v2421 = vadd.f32 %v2332, %v2420
        %2422 = vmatmul.bf16.gmra.mxu0 %v1861
        %v2423 = vpop.f32.mrf.mxu0
        %v2424 = vadd.f32 %v2335, %v2423
        %v2425 = vpop.f32.mrf.mxu0
        %v2426 = vadd.f32 %v2337, %v2425
        %2427 = vmatmul.bf16.gmra.mxu0 %v1865
        %v2428 = vpop.f32.mrf.mxu0
        %v2429 = vadd.f32 %v2340, %v2428
        %v2430 = vpop.f32.mrf.mxu0
        %v2431 = vadd.f32 %v2342, %v2430
        %2432 = vmatmul.bf16.gmra.mxu0 %v1869
        %v2433 = vpop.f32.mrf.mxu0
        %v2434 = vadd.f32 %v2345, %v2433
        %v2435 = vpop.f32.mrf.mxu0
        %v2436 = vadd.f32 %v2347, %v2435
        %2437 = vmatmul.bf16.gmra.mxu0 %v1873
        %v2438 = vpop.f32.mrf.mxu0
        %v2439 = vadd.f32 %v2350, %v2438
        %v2440 = vpop.f32.mrf.mxu0
        %v2441 = vadd.f32 %v2352, %v2440
        %2442 = vmatmul.bf16.gmra.mxu0 %v1877
        %v2443 = vpop.f32.mrf.mxu0
        %v2444 = vadd.f32 %v2355, %v2443
        %v2445 = vpop.f32.mrf.mxu0
        %v2446 = vadd.f32 %v2357, %v2445
        %2447 = vdwg.mxu0
        %2448 = vmatpush.bf16.msra.mxu0 %v2188
        %2449 = vmatpush.bf16.msra.mxu0 %v2186
        %2450 = vmatpush.bf16.msra.mxu0 %v2184
        %2451 = vmatpush.bf16.msra.mxu0 %v2182
        %2452 = vmatpush.bf16.msra.mxu0 %v2180
        %2453 = vmatpush.bf16.msra.mxu0 %v2178
        %2454 = vmatpush.bf16.msra.mxu0 %v2176
        %2455 = vmatpush.bf16.msra.mxu0 %v2174
        %2456 = vmatmul.bf16.gmra.mxu0 %v1818
        %v2457 = vpop.f32.mrf.mxu0
        %v2458 = vadd.f32 %v2369, %v2457
        %v2459 = vpop.f32.mrf.mxu0
        %v2460 = vadd.f32 %v2371, %v2459
        %2461 = vmatmul.bf16.gmra.mxu0 %v1822
        %v2462 = vpop.f32.mrf.mxu0
        %v2463 = vadd.f32 %v2374, %v2462
        %v2464 = vpop.f32.mrf.mxu0
        %v2465 = vadd.f32 %v2376, %v2464
        %2466 = vmatmul.bf16.gmra.mxu0 %v1826
        %v2467 = vpop.f32.mrf.mxu0
        %v2468 = vadd.f32 %v2379, %v2467
        %v2469 = vpop.f32.mrf.mxu0
        %v2470 = vadd.f32 %v2381, %v2469
        %2471 = vmatmul.bf16.gmra.mxu0 %v1830
        %v2472 = vpop.f32.mrf.mxu0
        %v2473 = vadd.f32 %v2384, %v2472
        %v2474 = vpop.f32.mrf.mxu0
        %v2475 = vadd.f32 %v2386, %v2474
        %2476 = vmatmul.bf16.gmra.mxu0 %v1834
        %v2477 = vpop.f32.mrf.mxu0
        %v2478 = vadd.f32 %v2389, %v2477
        %v2479 = vpop.f32.mrf.mxu0
        %v2480 = vadd.f32 %v2391, %v2479
        %2481 = vmatmul.bf16.gmra.mxu0 %v1838
        %v2482 = vpop.f32.mrf.mxu0
        %v2483 = vadd.f32 %v2394, %v2482
        %v2484 = vpop.f32.mrf.mxu0
        %v2485 = vadd.f32 %v2396, %v2484
        %2486 = vmatmul.bf16.gmra.mxu0 %v1842
        %v2487 = vpop.f32.mrf.mxu0
        %v2488 = vadd.f32 %v2399, %v2487
        %v2489 = vpop.f32.mrf.mxu0
        %v2490 = vadd.f32 %v2401, %v2489
        %2491 = vmatmul.bf16.gmra.mxu0 %v1846
        %v2492 = vpop.f32.mrf.mxu0
        %v2493 = vadd.f32 %v2404, %v2492
        %v2494 = vpop.f32.mrf.mxu0
        %v2495 = vadd.f32 %v2406, %v2494
        %2496 = vmatmul.bf16.gmra.mxu0 %v1850
        %v2497 = vpop.f32.mrf.mxu0
        %v2498 = vadd.f32 %v2409, %v2497
        %v2499 = vpop.f32.mrf.mxu0
        %v2500 = vadd.f32 %v2411, %v2499
        %2501 = vmatmul.bf16.gmra.mxu0 %v1854
        %v2502 = vpop.f32.mrf.mxu0
        %v2503 = vadd.f32 %v2414, %v2502
        %v2504 = vpop.f32.mrf.mxu0
        %v2505 = vadd.f32 %v2416, %v2504
        %2506 = vmatmul.bf16.gmra.mxu0 %v1858
        %v2507 = vpop.f32.mrf.mxu0
        %v2508 = vadd.f32 %v2419, %v2507
        %v2509 = vpop.f32.mrf.mxu0
        %v2510 = vadd.f32 %v2421, %v2509
        %2511 = vmatmul.bf16.gmra.mxu0 %v1862
        %v2512 = vpop.f32.mrf.mxu0
        %v2513 = vadd.f32 %v2424, %v2512
        %v2514 = vpop.f32.mrf.mxu0
        %v2515 = vadd.f32 %v2426, %v2514
        %2516 = vmatmul.bf16.gmra.mxu0 %v1866
        %v2517 = vpop.f32.mrf.mxu0
        %v2518 = vadd.f32 %v2429, %v2517
        %v2519 = vpop.f32.mrf.mxu0
        %v2520 = vadd.f32 %v2431, %v2519
        %2521 = vmatmul.bf16.gmra.mxu0 %v1870
        %v2522 = vpop.f32.mrf.mxu0
        %v2523 = vadd.f32 %v2434, %v2522
        %v2524 = vpop.f32.mrf.mxu0
        %v2525 = vadd.f32 %v2436, %v2524
        %2526 = vmatmul.bf16.gmra.mxu0 %v1874
        %v2527 = vpop.f32.mrf.mxu0
        %v2528 = vadd.f32 %v2439, %v2527
        %v2529 = vpop.f32.mrf.mxu0
        %v2530 = vadd.f32 %v2441, %v2529
        %2531 = vmatmul.bf16.gmra.mxu0 %v1878
        %v2532 = vpop.f32.mrf.mxu0
        %v2533 = vadd.f32 %v2444, %v2532
        %v2534 = vpop.f32.mrf.mxu0
        %v2535 = vadd.f32 %v2446, %v2534
        %2536 = vdwg.mxu0
        %2537 = vmatpush.bf16.msra.mxu0 %v2204
        %2538 = vmatpush.bf16.msra.mxu0 %v2202
        %2539 = vmatpush.bf16.msra.mxu0 %v2200
        %2540 = vmatpush.bf16.msra.mxu0 %v2198
        %2541 = vmatpush.bf16.msra.mxu0 %v2196
        %2542 = vmatpush.bf16.msra.mxu0 %v2194
        %2543 = vmatpush.bf16.msra.mxu0 %v2192
        %2544 = vmatpush.bf16.msra.mxu0 %v2190
        %2545 = vmatmul.bf16.gmra.mxu0 %v1819
        %v2546 = vpop.f32.mrf.mxu0
        %v2547 = vadd.f32 %v2458, %v2546
        %v2548 = vpop.f32.mrf.mxu0
        %v2549 = vadd.f32 %v2460, %v2548
        %2550 = vmatmul.bf16.gmra.mxu0 %v1823
        %v2551 = vpop.f32.mrf.mxu0
        %v2552 = vadd.f32 %v2463, %v2551
        %v2553 = vpop.f32.mrf.mxu0
        %v2554 = vadd.f32 %v2465, %v2553
        %2555 = vmatmul.bf16.gmra.mxu0 %v1827
        %v2556 = vpop.f32.mrf.mxu0
        %v2557 = vadd.f32 %v2468, %v2556
        %v2558 = vpop.f32.mrf.mxu0
        %v2559 = vadd.f32 %v2470, %v2558
        %2560 = vmatmul.bf16.gmra.mxu0 %v1831
        %v2561 = vpop.f32.mrf.mxu0
        %v2562 = vadd.f32 %v2473, %v2561
        %v2563 = vpop.f32.mrf.mxu0
        %v2564 = vadd.f32 %v2475, %v2563
        %2565 = vmatmul.bf16.gmra.mxu0 %v1835
        %v2566 = vpop.f32.mrf.mxu0
        %v2567 = vadd.f32 %v2478, %v2566
        %v2568 = vpop.f32.mrf.mxu0
        %v2569 = vadd.f32 %v2480, %v2568
        %2570 = vmatmul.bf16.gmra.mxu0 %v1839
        %v2571 = vpop.f32.mrf.mxu0
        %v2572 = vadd.f32 %v2483, %v2571
        %v2573 = vpop.f32.mrf.mxu0
        %v2574 = vadd.f32 %v2485, %v2573
        %2575 = vmatmul.bf16.gmra.mxu0 %v1843
        %v2576 = vpop.f32.mrf.mxu0
        %v2577 = vadd.f32 %v2488, %v2576
        %v2578 = vpop.f32.mrf.mxu0
        %v2579 = vadd.f32 %v2490, %v2578
        %2580 = vmatmul.bf16.gmra.mxu0 %v1847
        %v2581 = vpop.f32.mrf.mxu0
        %v2582 = vadd.f32 %v2493, %v2581
        %v2583 = vpop.f32.mrf.mxu0
        %v2584 = vadd.f32 %v2495, %v2583
        %2585 = vmatmul.bf16.gmra.mxu0 %v1851
        %v2586 = vpop.f32.mrf.mxu0
        %v2587 = vadd.f32 %v2498, %v2586
        %v2588 = vpop.f32.mrf.mxu0
        %v2589 = vadd.f32 %v2500, %v2588
        %2590 = vmatmul.bf16.gmra.mxu0 %v1855
        %v2591 = vpop.f32.mrf.mxu0
        %v2592 = vadd.f32 %v2503, %v2591
        %v2593 = vpop.f32.mrf.mxu0
        %v2594 = vadd.f32 %v2505, %v2593
        %2595 = vmatmul.bf16.gmra.mxu0 %v1859
        %v2596 = vpop.f32.mrf.mxu0
        %v2597 = vadd.f32 %v2508, %v2596
        %v2598 = vpop.f32.mrf.mxu0
        %v2599 = vadd.f32 %v2510, %v2598
        %2600 = vmatmul.bf16.gmra.mxu0 %v1863
        %v2601 = vpop.f32.mrf.mxu0
        %v2602 = vadd.f32 %v2513, %v2601
        %v2603 = vpop.f32.mrf.mxu0
        %v2604 = vadd.f32 %v2515, %v2603
        %2605 = vmatmul.bf16.gmra.mxu0 %v1867
        %v2606 = vpop.f32.mrf.mxu0
        %v2607 = vadd.f32 %v2518, %v2606
        %v2608 = vpop.f32.mrf.mxu0
        %v2609 = vadd.f32 %v2520, %v2608
        %2610 = vmatmul.bf16.gmra.mxu0 %v1871
        %v2611 = vpop.f32.mrf.mxu0
        %v2612 = vadd.f32 %v2523, %v2611
        %v2613 = vpop.f32.mrf.mxu0
        %v2614 = vadd.f32 %v2525, %v2613
        %2615 = vmatmul.bf16.gmra.mxu0 %v1875
        %v2616 = vpop.f32.mrf.mxu0
        %v2617 = vadd.f32 %v2528, %v2616
        %v2618 = vpop.f32.mrf.mxu0
        %v2619 = vadd.f32 %v2530, %v2618
        %2620 = vmatmul.bf16.gmra.mxu0 %v1879
        %v2621 = vpop.f32.mrf.mxu0
        %v2622 = vadd.f32 %v2533, %v2621
        %v2623 = vpop.f32.mrf.mxu0
        %v2624 = vadd.f32 %v2535, %v2623
        %2625 = vdwg.mxu0
        %2626 = vmatpush.bf16.msra.mxu0 %v2157
        %2627 = vmatpush.bf16.msra.mxu0 %v2155
        %2628 = vmatpush.bf16.msra.mxu0 %v2153
        %2629 = vmatpush.bf16.msra.mxu0 %v2151
        %2630 = vmatpush.bf16.msra.mxu0 %v2149
        %2631 = vmatpush.bf16.msra.mxu0 %v2147
        %2632 = vmatpush.bf16.msra.mxu0 %v2145
        %2633 = vmatpush.bf16.msra.mxu0 %v2143
        %2634 = vmatmul.bf16.gmra.mxu0 %v1816
        %v2635 = vpop.f32.mrf.mxu0
        %v2636 = vadd.f32 %v1947, %v2635
        %v2637 = vpop.f32.mrf.mxu0
        %v2638 = vadd.f32 %v1947, %v2637
        %2639 = vmatmul.bf16.gmra.mxu0 %v1820
        %v2640 = vpop.f32.mrf.mxu0
        %v2641 = vadd.f32 %v1947, %v2640
        %v2642 = vpop.f32.mrf.mxu0
        %v2643 = vadd.f32 %v1947, %v2642
        %2644 = vmatmul.bf16.gmra.mxu0 %v1824
        %v2645 = vpop.f32.mrf.mxu0
        %v2646 = vadd.f32 %v1947, %v2645
        %v2647 = vpop.f32.mrf.mxu0
        %v2648 = vadd.f32 %v1947, %v2647
        %2649 = vmatmul.bf16.gmra.mxu0 %v1828
        %v2650 = vpop.f32.mrf.mxu0
        %v2651 = vadd.f32 %v1947, %v2650
        %v2652 = vpop.f32.mrf.mxu0
        %v2653 = vadd.f32 %v1947, %v2652
        %2654 = vmatmul.bf16.gmra.mxu0 %v1832
        %v2655 = vpop.f32.mrf.mxu0
        %v2656 = vadd.f32 %v1947, %v2655
        %v2657 = vpop.f32.mrf.mxu0
        %v2658 = vadd.f32 %v1947, %v2657
        %2659 = vmatmul.bf16.gmra.mxu0 %v1836
        %v2660 = vpop.f32.mrf.mxu0
        %v2661 = vadd.f32 %v1947, %v2660
        %v2662 = vpop.f32.mrf.mxu0
        %v2663 = vadd.f32 %v1947, %v2662
        %2664 = vmatmul.bf16.gmra.mxu0 %v1840
        %v2665 = vpop.f32.mrf.mxu0
        %v2666 = vadd.f32 %v1947, %v2665
        %v2667 = vpop.f32.mrf.mxu0
        %v2668 = vadd.f32 %v1947, %v2667
        %2669 = vmatmul.bf16.gmra.mxu0 %v1844
        %v2670 = vpop.f32.mrf.mxu0
        %v2671 = vadd.f32 %v1947, %v2670
        %v2672 = vpop.f32.mrf.mxu0
        %v2673 = vadd.f32 %v1947, %v2672
        %2674 = vmatmul.bf16.gmra.mxu0 %v1848
        %v2675 = vpop.f32.mrf.mxu0
        %v2676 = vadd.f32 %v1947, %v2675
        %v2677 = vpop.f32.mrf.mxu0
        %v2678 = vadd.f32 %v1947, %v2677
        %2679 = vmatmul.bf16.gmra.mxu0 %v1852
        %v2680 = vpop.f32.mrf.mxu0
        %v2681 = vadd.f32 %v1947, %v2680
        %v2682 = vpop.f32.mrf.mxu0
        %v2683 = vadd.f32 %v1947, %v2682
        %2684 = vmatmul.bf16.gmra.mxu0 %v1856
        %v2685 = vpop.f32.mrf.mxu0
        %v2686 = vadd.f32 %v1947, %v2685
        %v2687 = vpop.f32.mrf.mxu0
        %v2688 = vadd.f32 %v1947, %v2687
        %2689 = vmatmul.bf16.gmra.mxu0 %v1860
        %v2690 = vpop.f32.mrf.mxu0
        %v2691 = vadd.f32 %v1947, %v2690
        %v2692 = vpop.f32.mrf.mxu0
        %v2693 = vadd.f32 %v1947, %v2692
        %2694 = vmatmul.bf16.gmra.mxu0 %v1864
        %v2695 = vpop.f32.mrf.mxu0
        %v2696 = vadd.f32 %v1947, %v2695
        %v2697 = vpop.f32.mrf.mxu0
        %v2698 = vadd.f32 %v1947, %v2697
        %2699 = vmatmul.bf16.gmra.mxu0 %v1868
        %v2700 = vpop.f32.mrf.mxu0
        %v2701 = vadd.f32 %v1947, %v2700
        %v2702 = vpop.f32.mrf.mxu0
        %v2703 = vadd.f32 %v1947, %v2702
        %2704 = vmatmul.bf16.gmra.mxu0 %v1872
        %v2705 = vpop.f32.mrf.mxu0
        %v2706 = vadd.f32 %v1947, %v2705
        %v2707 = vpop.f32.mrf.mxu0
        %v2708 = vadd.f32 %v1947, %v2707
        %2709 = vmatmul.bf16.gmra.mxu0 %v1876
        %v2710 = vpop.f32.mrf.mxu0
        %v2711 = vadd.f32 %v1947, %v2710
        %v2712 = vpop.f32.mrf.mxu0
        %v2713 = vadd.f32 %v1947, %v2712
        %2714 = vdwg.mxu0
        %2715 = vmatpush.bf16.msra.mxu0 %v2173
        %2716 = vmatpush.bf16.msra.mxu0 %v2171
        %2717 = vmatpush.bf16.msra.mxu0 %v2169
        %2718 = vmatpush.bf16.msra.mxu0 %v2167
        %2719 = vmatpush.bf16.msra.mxu0 %v2165
        %2720 = vmatpush.bf16.msra.mxu0 %v2163
        %2721 = vmatpush.bf16.msra.mxu0 %v2161
        %2722 = vmatpush.bf16.msra.mxu0 %v2159
        %2723 = vmatmul.bf16.gmra.mxu0 %v1817
        %v2724 = vpop.f32.mrf.mxu0
        %v2725 = vadd.f32 %v2636, %v2724
        %v2726 = vpop.f32.mrf.mxu0
        %v2727 = vadd.f32 %v2638, %v2726
        %2728 = vmatmul.bf16.gmra.mxu0 %v1821
        %v2729 = vpop.f32.mrf.mxu0
        %v2730 = vadd.f32 %v2641, %v2729
        %v2731 = vpop.f32.mrf.mxu0
        %v2732 = vadd.f32 %v2643, %v2731
        %2733 = vmatmul.bf16.gmra.mxu0 %v1825
        %v2734 = vpop.f32.mrf.mxu0
        %v2735 = vadd.f32 %v2646, %v2734
        %v2736 = vpop.f32.mrf.mxu0
        %v2737 = vadd.f32 %v2648, %v2736
        %2738 = vmatmul.bf16.gmra.mxu0 %v1829
        %v2739 = vpop.f32.mrf.mxu0
        %v2740 = vadd.f32 %v2651, %v2739
        %v2741 = vpop.f32.mrf.mxu0
        %v2742 = vadd.f32 %v2653, %v2741
        %2743 = vmatmul.bf16.gmra.mxu0 %v1833
        %v2744 = vpop.f32.mrf.mxu0
        %v2745 = vadd.f32 %v2656, %v2744
        %v2746 = vpop.f32.mrf.mxu0
        %v2747 = vadd.f32 %v2658, %v2746
        %2748 = vmatmul.bf16.gmra.mxu0 %v1837
        %v2749 = vpop.f32.mrf.mxu0
        %v2750 = vadd.f32 %v2661, %v2749
        %v2751 = vpop.f32.mrf.mxu0
        %v2752 = vadd.f32 %v2663, %v2751
        %2753 = vmatmul.bf16.gmra.mxu0 %v1841
        %v2754 = vpop.f32.mrf.mxu0
        %v2755 = vadd.f32 %v2666, %v2754
        %v2756 = vpop.f32.mrf.mxu0
        %v2757 = vadd.f32 %v2668, %v2756
        %2758 = vmatmul.bf16.gmra.mxu0 %v1845
        %v2759 = vpop.f32.mrf.mxu0
        %v2760 = vadd.f32 %v2671, %v2759
        %v2761 = vpop.f32.mrf.mxu0
        %v2762 = vadd.f32 %v2673, %v2761
        %2763 = vmatmul.bf16.gmra.mxu0 %v1849
        %v2764 = vpop.f32.mrf.mxu0
        %v2765 = vadd.f32 %v2676, %v2764
        %v2766 = vpop.f32.mrf.mxu0
        %v2767 = vadd.f32 %v2678, %v2766
        %2768 = vmatmul.bf16.gmra.mxu0 %v1853
        %v2769 = vpop.f32.mrf.mxu0
        %v2770 = vadd.f32 %v2681, %v2769
        %v2771 = vpop.f32.mrf.mxu0
        %v2772 = vadd.f32 %v2683, %v2771
        %2773 = vmatmul.bf16.gmra.mxu0 %v1857
        %v2774 = vpop.f32.mrf.mxu0
        %v2775 = vadd.f32 %v2686, %v2774
        %v2776 = vpop.f32.mrf.mxu0
        %v2777 = vadd.f32 %v2688, %v2776
        %2778 = vmatmul.bf16.gmra.mxu0 %v1861
        %v2779 = vpop.f32.mrf.mxu0
        %v2780 = vadd.f32 %v2691, %v2779
        %v2781 = vpop.f32.mrf.mxu0
        %v2782 = vadd.f32 %v2693, %v2781
        %2783 = vmatmul.bf16.gmra.mxu0 %v1865
        %v2784 = vpop.f32.mrf.mxu0
        %v2785 = vadd.f32 %v2696, %v2784
        %v2786 = vpop.f32.mrf.mxu0
        %v2787 = vadd.f32 %v2698, %v2786
        %2788 = vmatmul.bf16.gmra.mxu0 %v1869
        %v2789 = vpop.f32.mrf.mxu0
        %v2790 = vadd.f32 %v2701, %v2789
        %v2791 = vpop.f32.mrf.mxu0
        %v2792 = vadd.f32 %v2703, %v2791
        %2793 = vmatmul.bf16.gmra.mxu0 %v1873
        %v2794 = vpop.f32.mrf.mxu0
        %v2795 = vadd.f32 %v2706, %v2794
        %v2796 = vpop.f32.mrf.mxu0
        %v2797 = vadd.f32 %v2708, %v2796
        %2798 = vmatmul.bf16.gmra.mxu0 %v1877
        %v2799 = vpop.f32.mrf.mxu0
        %v2800 = vadd.f32 %v2711, %v2799
        %v2801 = vpop.f32.mrf.mxu0
        %v2802 = vadd.f32 %v2713, %v2801
        %2803 = vdwg.mxu0
        %2804 = vmatpush.bf16.msra.mxu0 %v2189
        %2805 = vmatpush.bf16.msra.mxu0 %v2187
        %2806 = vmatpush.bf16.msra.mxu0 %v2185
        %2807 = vmatpush.bf16.msra.mxu0 %v2183
        %2808 = vmatpush.bf16.msra.mxu0 %v2181
        %2809 = vmatpush.bf16.msra.mxu0 %v2179
        %2810 = vmatpush.bf16.msra.mxu0 %v2177
        %2811 = vmatpush.bf16.msra.mxu0 %v2175
        %2812 = vmatmul.bf16.gmra.mxu0 %v1818
        %v2813 = vpop.f32.mrf.mxu0
        %v2814 = vadd.f32 %v2725, %v2813
        %v2815 = vpop.f32.mrf.mxu0
        %v2816 = vadd.f32 %v2727, %v2815
        %2817 = vmatmul.bf16.gmra.mxu0 %v1822
        %v2818 = vpop.f32.mrf.mxu0
        %v2819 = vadd.f32 %v2730, %v2818
        %v2820 = vpop.f32.mrf.mxu0
        %v2821 = vadd.f32 %v2732, %v2820
        %2822 = vmatmul.bf16.gmra.mxu0 %v1826
        %v2823 = vpop.f32.mrf.mxu0
        %v2824 = vadd.f32 %v2735, %v2823
        %v2825 = vpop.f32.mrf.mxu0
        %v2826 = vadd.f32 %v2737, %v2825
        %2827 = vmatmul.bf16.gmra.mxu0 %v1830
        %v2828 = vpop.f32.mrf.mxu0
        %v2829 = vadd.f32 %v2740, %v2828
        %v2830 = vpop.f32.mrf.mxu0
        %v2831 = vadd.f32 %v2742, %v2830
        %2832 = vmatmul.bf16.gmra.mxu0 %v1834
        %v2833 = vpop.f32.mrf.mxu0
        %v2834 = vadd.f32 %v2745, %v2833
        %v2835 = vpop.f32.mrf.mxu0
        %v2836 = vadd.f32 %v2747, %v2835
        %2837 = vmatmul.bf16.gmra.mxu0 %v1838
        %v2838 = vpop.f32.mrf.mxu0
        %v2839 = vadd.f32 %v2750, %v2838
        %v2840 = vpop.f32.mrf.mxu0
        %v2841 = vadd.f32 %v2752, %v2840
        %2842 = vmatmul.bf16.gmra.mxu0 %v1842
        %v2843 = vpop.f32.mrf.mxu0
        %v2844 = vadd.f32 %v2755, %v2843
        %v2845 = vpop.f32.mrf.mxu0
        %v2846 = vadd.f32 %v2757, %v2845
        %2847 = vmatmul.bf16.gmra.mxu0 %v1846
        %v2848 = vpop.f32.mrf.mxu0
        %v2849 = vadd.f32 %v2760, %v2848
        %v2850 = vpop.f32.mrf.mxu0
        %v2851 = vadd.f32 %v2762, %v2850
        %2852 = vmatmul.bf16.gmra.mxu0 %v1850
        %v2853 = vpop.f32.mrf.mxu0
        %v2854 = vadd.f32 %v2765, %v2853
        %v2855 = vpop.f32.mrf.mxu0
        %v2856 = vadd.f32 %v2767, %v2855
        %2857 = vmatmul.bf16.gmra.mxu0 %v1854
        %v2858 = vpop.f32.mrf.mxu0
        %v2859 = vadd.f32 %v2770, %v2858
        %v2860 = vpop.f32.mrf.mxu0
        %v2861 = vadd.f32 %v2772, %v2860
        %2862 = vmatmul.bf16.gmra.mxu0 %v1858
        %v2863 = vpop.f32.mrf.mxu0
        %v2864 = vadd.f32 %v2775, %v2863
        %v2865 = vpop.f32.mrf.mxu0
        %v2866 = vadd.f32 %v2777, %v2865
        %2867 = vmatmul.bf16.gmra.mxu0 %v1862
        %v2868 = vpop.f32.mrf.mxu0
        %v2869 = vadd.f32 %v2780, %v2868
        %v2870 = vpop.f32.mrf.mxu0
        %v2871 = vadd.f32 %v2782, %v2870
        %2872 = vmatmul.bf16.gmra.mxu0 %v1866
        %v2873 = vpop.f32.mrf.mxu0
        %v2874 = vadd.f32 %v2785, %v2873
        %v2875 = vpop.f32.mrf.mxu0
        %v2876 = vadd.f32 %v2787, %v2875
        %2877 = vmatmul.bf16.gmra.mxu0 %v1870
        %v2878 = vpop.f32.mrf.mxu0
        %v2879 = vadd.f32 %v2790, %v2878
        %v2880 = vpop.f32.mrf.mxu0
        %v2881 = vadd.f32 %v2792, %v2880
        %2882 = vmatmul.bf16.gmra.mxu0 %v1874
        %v2883 = vpop.f32.mrf.mxu0
        %v2884 = vadd.f32 %v2795, %v2883
        %v2885 = vpop.f32.mrf.mxu0
        %v2886 = vadd.f32 %v2797, %v2885
        %2887 = vmatmul.bf16.gmra.mxu0 %v1878
        %v2888 = vpop.f32.mrf.mxu0
        %v2889 = vadd.f32 %v2800, %v2888
        %v2890 = vpop.f32.mrf.mxu0
        %v2891 = vadd.f32 %v2802, %v2890
        %2892 = vdwg.mxu0
        %2893 = vmatpush.bf16.msra.mxu0 %v2205
        %2894 = vmatpush.bf16.msra.mxu0 %v2203
        %2895 = vmatpush.bf16.msra.mxu0 %v2201
        %2896 = vmatpush.bf16.msra.mxu0 %v2199
        %2897 = vmatpush.bf16.msra.mxu0 %v2197
        %2898 = vmatpush.bf16.msra.mxu0 %v2195
        %2899 = vmatpush.bf16.msra.mxu0 %v2193
        %2900 = vmatpush.bf16.msra.mxu0 %v2191
        %2901 = vmatmul.bf16.gmra.mxu0 %v1819
        %v2902 = vpop.f32.mrf.mxu0
        %v2903 = vadd.f32 %v2814, %v2902
        %v2904 = vpop.f32.mrf.mxu0
        %v2905 = vadd.f32 %v2816, %v2904
        %2906 = vmatmul.bf16.gmra.mxu0 %v1823
        %v2907 = vpop.f32.mrf.mxu0
        %v2908 = vadd.f32 %v2819, %v2907
        %v2909 = vpop.f32.mrf.mxu0
        %v2910 = vadd.f32 %v2821, %v2909
        %2911 = vmatmul.bf16.gmra.mxu0 %v1827
        %v2912 = vpop.f32.mrf.mxu0
        %v2913 = vadd.f32 %v2824, %v2912
        %v2914 = vpop.f32.mrf.mxu0
        %v2915 = vadd.f32 %v2826, %v2914
        %2916 = vmatmul.bf16.gmra.mxu0 %v1831
        %v2917 = vpop.f32.mrf.mxu0
        %v2918 = vadd.f32 %v2829, %v2917
        %v2919 = vpop.f32.mrf.mxu0
        %v2920 = vadd.f32 %v2831, %v2919
        %2921 = vmatmul.bf16.gmra.mxu0 %v1835
        %v2922 = vpop.f32.mrf.mxu0
        %v2923 = vadd.f32 %v2834, %v2922
        %v2924 = vpop.f32.mrf.mxu0
        %v2925 = vadd.f32 %v2836, %v2924
        %2926 = vmatmul.bf16.gmra.mxu0 %v1839
        %v2927 = vpop.f32.mrf.mxu0
        %v2928 = vadd.f32 %v2839, %v2927
        %v2929 = vpop.f32.mrf.mxu0
        %v2930 = vadd.f32 %v2841, %v2929
        %2931 = vmatmul.bf16.gmra.mxu0 %v1843
        %v2932 = vpop.f32.mrf.mxu0
        %v2933 = vadd.f32 %v2844, %v2932
        %v2934 = vpop.f32.mrf.mxu0
        %v2935 = vadd.f32 %v2846, %v2934
        %2936 = vmatmul.bf16.gmra.mxu0 %v1847
        %v2937 = vpop.f32.mrf.mxu0
        %v2938 = vadd.f32 %v2849, %v2937
        %v2939 = vpop.f32.mrf.mxu0
        %v2940 = vadd.f32 %v2851, %v2939
        %2941 = vmatmul.bf16.gmra.mxu0 %v1851
        %v2942 = vpop.f32.mrf.mxu0
        %v2943 = vadd.f32 %v2854, %v2942
        %v2944 = vpop.f32.mrf.mxu0
        %v2945 = vadd.f32 %v2856, %v2944
        %2946 = vmatmul.bf16.gmra.mxu0 %v1855
        %v2947 = vpop.f32.mrf.mxu0
        %v2948 = vadd.f32 %v2859, %v2947
        %v2949 = vpop.f32.mrf.mxu0
        %v2950 = vadd.f32 %v2861, %v2949
        %2951 = vmatmul.bf16.gmra.mxu0 %v1859
        %v2952 = vpop.f32.mrf.mxu0
        %v2953 = vadd.f32 %v2864, %v2952
        %v2954 = vpop.f32.mrf.mxu0
        %v2955 = vadd.f32 %v2866, %v2954
        %2956 = vmatmul.bf16.gmra.mxu0 %v1863
        %v2957 = vpop.f32.mrf.mxu0
        %v2958 = vadd.f32 %v2869, %v2957
        %v2959 = vpop.f32.mrf.mxu0
        %v2960 = vadd.f32 %v2871, %v2959
        %2961 = vmatmul.bf16.gmra.mxu0 %v1867
        %v2962 = vpop.f32.mrf.mxu0
        %v2963 = vadd.f32 %v2874, %v2962
        %v2964 = vpop.f32.mrf.mxu0
        %v2965 = vadd.f32 %v2876, %v2964
        %2966 = vmatmul.bf16.gmra.mxu0 %v1871
        %v2967 = vpop.f32.mrf.mxu0
        %v2968 = vadd.f32 %v2879, %v2967
        %v2969 = vpop.f32.mrf.mxu0
        %v2970 = vadd.f32 %v2881, %v2969
        %2971 = vmatmul.bf16.gmra.mxu0 %v1875
        %v2972 = vpop.f32.mrf.mxu0
        %v2973 = vadd.f32 %v2884, %v2972
        %v2974 = vpop.f32.mrf.mxu0
        %v2975 = vadd.f32 %v2886, %v2974
        %2976 = vmatmul.bf16.gmra.mxu0 %v1879
        %v2977 = vpop.f32.mrf.mxu0
        %v2978 = vadd.f32 %v2889, %v2977
        %v2979 = vpop.f32.mrf.mxu0
        %v2980 = vadd.f32 %v2891, %v2979
        %2981 = vdwg.mxu0
        %v2982 = vmax.f32 %v2547, 0.0
        %v2983 = vmax.f32 %v2903, 0.0
        %v2984 = vmax.f32 %v2549, 0.0
        %v2985 = vmax.f32 %v2905, 0.0
        %v2986 = vmax.f32 %v2552, 0.0
        %v2987 = vmax.f32 %v2908, 0.0
        %v2988 = vmax.f32 %v2554, 0.0
        %v2989 = vmax.f32 %v2910, 0.0
        %v2990 = vmax.f32 %v2557, 0.0
        %v2991 = vmax.f32 %v2913, 0.0
        %v2992 = vmax.f32 %v2559, 0.0
        %v2993 = vmax.f32 %v2915, 0.0
        %v2994 = vmax.f32 %v2562, 0.0
        %v2995 = vmax.f32 %v2918, 0.0
        %v2996 = vmax.f32 %v2564, 0.0
        %v2997 = vmax.f32 %v2920, 0.0
        %v2998 = vmax.f32 %v2567, 0.0
        %v2999 = vmax.f32 %v2923, 0.0
        %v3000 = vmax.f32 %v2569, 0.0
        %v3001 = vmax.f32 %v2925, 0.0
        %v3002 = vmax.f32 %v2572, 0.0
        %v3003 = vmax.f32 %v2928, 0.0
        %v3004 = vmax.f32 %v2574, 0.0
        %v3005 = vmax.f32 %v2930, 0.0
        %v3006 = vmax.f32 %v2577, 0.0
        %v3007 = vmax.f32 %v2933, 0.0
        %v3008 = vmax.f32 %v2579, 0.0
        %v3009 = vmax.f32 %v2935, 0.0
        %v3010 = vmax.f32 %v2582, 0.0
        %v3011 = vmax.f32 %v2938, 0.0
        %v3012 = vmax.f32 %v2584, 0.0
        %v3013 = vmax.f32 %v2940, 0.0
        %v3014 = vmax.f32 %v2587, 0.0
        %v3015 = vmax.f32 %v2943, 0.0
        %v3016 = vmax.f32 %v2589, 0.0
        %v3017 = vmax.f32 %v2945, 0.0
        %v3018 = vmax.f32 %v2592, 0.0
        %v3019 = vmax.f32 %v2948, 0.0
        %v3020 = vmax.f32 %v2594, 0.0
        %v3021 = vmax.f32 %v2950, 0.0
        %v3022 = vmax.f32 %v2597, 0.0
        %v3023 = vmax.f32 %v2953, 0.0
        %v3024 = vmax.f32 %v2599, 0.0
        %v3025 = vmax.f32 %v2955, 0.0
        %v3026 = vmax.f32 %v2602, 0.0
        %v3027 = vmax.f32 %v2958, 0.0
        %v3028 = vmax.f32 %v2604, 0.0
        %v3029 = vmax.f32 %v2960, 0.0
        %v3030 = vmax.f32 %v2607, 0.0
        %v3031 = vmax.f32 %v2963, 0.0
        %v3032 = vmax.f32 %v2609, 0.0
        %v3033 = vmax.f32 %v2965, 0.0
        %v3034 = vmax.f32 %v2612, 0.0
        %v3035 = vmax.f32 %v2968, 0.0
        %v3036 = vmax.f32 %v2614, 0.0
        %v3037 = vmax.f32 %v2970, 0.0
        %v3038 = vmax.f32 %v2617, 0.0
        %v3039 = vmax.f32 %v2973, 0.0
        %v3040 = vmax.f32 %v2619, 0.0
        %v3041 = vmax.f32 %v2975, 0.0
        %v3042 = vmax.f32 %v2622, 0.0
        %v3043 = vmax.f32 %v2978, 0.0
        %v3044 = vmax.f32 %v2624, 0.0
        %v3045 = vmax.f32 %v2980, 0.0
        %v3046 = vpack.c.bf16 %v2984, %v2982
        %v3047 = vpack.c.bf16 %v2985, %v2983
        %v3048 = vpack.c.bf16 %v2988, %v2986
        %v3049 = vpack.c.bf16 %v2989, %v2987
        %v3050 = vpack.c.bf16 %v2992, %v2990
        %v3051 = vpack.c.bf16 %v2993, %v2991
        %v3052 = vpack.c.bf16 %v2996, %v2994
        %v3053 = vpack.c.bf16 %v2997, %v2995
        %v3054 = vpack.c.bf16 %v3000, %v2998
        %v3055 = vpack.c.bf16 %v3001, %v2999
        %v3056 = vpack.c.bf16 %v3004, %v3002
        %v3057 = vpack.c.bf16 %v3005, %v3003
        %v3058 = vpack.c.bf16 %v3008, %v3006
        %v3059 = vpack.c.bf16 %v3009, %v3007
        %v3060 = vpack.c.bf16 %v3012, %v3010
        %v3061 = vpack.c.bf16 %v3013, %v3011
        %v3062 = vpack.c.bf16 %v3016, %v3014
        %v3063 = vpack.c.bf16 %v3017, %v3015
        %v3064 = vpack.c.bf16 %v3020, %v3018
        %v3065 = vpack.c.bf16 %v3021, %v3019
        %v3066 = vpack.c.bf16 %v3024, %v3022
        %v3067 = vpack.c.bf16 %v3025, %v3023
        %v3068 = vpack.c.bf16 %v3028, %v3026
        %v3069 = vpack.c.bf16 %v3029, %v3027
        %v3070 = vpack.c.bf16 %v3032, %v3030
        %v3071 = vpack.c.bf16 %v3033, %v3031
        %v3072 = vpack.c.bf16 %v3036, %v3034
        %v3073 = vpack.c.bf16 %v3037, %v3035
        %v3074 = vpack.c.bf16 %v3040, %v3038
        %v3075 = vpack.c.bf16 %v3041, %v3039
        %v3076 = vpack.c.bf16 %v3044, %v3042
        %v3077 = vpack.c.bf16 %v3045, %v3043
        %v3078 = vld [vmem:[%s5] sm:$0xf]
        %v3079 = vld [vmem:[%s5 + $0x4] sm:$0xf]
        %v3080 = vld [vmem:[%s5 + $0x8] sm:$0xf]
        %v3081 = vld [vmem:[%s5 + $0xc] sm:$0xf]
        %v3082 = vld [vmem:[%s5 + $0x10] sm:$0xf]
        %v3083 = vld [vmem:[%s5 + $0x14] sm:$0xf]
        %v3084 = vld [vmem:[%s5 + $0x18] sm:$0xf]
        %v3085 = vld [vmem:[%s5 + $0x1c] sm:$0xf]
        %v3086 = vld [vmem:[%s5 + $0x20] sm:$0xf]
        %v3087 = vld [vmem:[%s5 + $0x24] sm:$0xf]
        %v3088 = vld [vmem:[%s5 + $0x28] sm:$0xf]
        %v3089 = vld [vmem:[%s5 + $0x2c] sm:$0xf]
        %v3090 = vld [vmem:[%s5 + $0x30] sm:$0xf]
        %v3091 = vld [vmem:[%s5 + $0x34] sm:$0xf]
        %v3092 = vld [vmem:[%s5 + $0x38] sm:$0xf]
        %v3093 = vld [vmem:[%s5 + $0x3c] sm:$0xf]
        %v3094 = vld [vmem:[%s5 + $0x40] sm:$0xf]
        %v3095 = vld [vmem:[%s5 + $0x44] sm:$0xf]
        %v3096 = vld [vmem:[%s5 + $0x48] sm:$0xf]
        %v3097 = vld [vmem:[%s5 + $0x4c] sm:$0xf]
        %v3098 = vld [vmem:[%s5 + $0x50] sm:$0xf]
        %v3099 = vld [vmem:[%s5 + $0x54] sm:$0xf]
        %v3100 = vld [vmem:[%s5 + $0x58] sm:$0xf]
        %v3101 = vld [vmem:[%s5 + $0x5c] sm:$0xf]
        %v3102 = vld [vmem:[%s5 + $0x60] sm:$0xf]
        %v3103 = vld [vmem:[%s5 + $0x64] sm:$0xf]
        %v3104 = vld [vmem:[%s5 + $0x68] sm:$0xf]
        %v3105 = vld [vmem:[%s5 + $0x6c] sm:$0xf]
        %v3106 = vld [vmem:[%s5 + $0x70] sm:$0xf]
        %v3107 = vld [vmem:[%s5 + $0x74] sm:$0xf]
        %v3108 = vld [vmem:[%s5 + $0x78] sm:$0xf]
        %v3109 = vld [vmem:[%s5 + $0x7c] sm:$0xf]
        %v3110 = vld [vmem:[%s6] sm:$0x1]
        %v3112 = vperm.slane %v3110, 0
        %v3146 = vunpack.c.l.b16 %v3078
        %v3147 = vunpack.c.l.b16 %v3079
        %v3148 = vunpack.c.l.b16 %v3080
        %v3149 = vunpack.c.l.b16 %v3081
        %v3150 = vunpack.c.l.b16 %v3082
        %v3151 = vunpack.c.l.b16 %v3083
        %v3152 = vunpack.c.l.b16 %v3084
        %v3153 = vunpack.c.l.b16 %v3085
        %v3154 = vunpack.c.l.b16 %v3086
        %v3155 = vunpack.c.l.b16 %v3087
        %v3156 = vunpack.c.l.b16 %v3088
        %v3157 = vunpack.c.l.b16 %v3089
        %v3158 = vunpack.c.l.b16 %v3090
        %v3159 = vunpack.c.l.b16 %v3091
        %v3160 = vunpack.c.l.b16 %v3092
        %v3161 = vunpack.c.l.b16 %v3093
        %v3162 = vunpack.c.l.b16 %v3094
        %v3163 = vunpack.c.l.b16 %v3095
        %v3164 = vunpack.c.l.b16 %v3096
        %v3165 = vunpack.c.l.b16 %v3097
        %v3166 = vunpack.c.l.b16 %v3098
        %v3167 = vunpack.c.l.b16 %v3099
        %v3168 = vunpack.c.l.b16 %v3100
        %v3169 = vunpack.c.l.b16 %v3101
        %v3170 = vunpack.c.l.b16 %v3102
        %v3171 = vunpack.c.l.b16 %v3103
        %v3172 = vunpack.c.l.b16 %v3104
        %v3173 = vunpack.c.l.b16 %v3105
        %v3174 = vunpack.c.l.b16 %v3106
        %v3175 = vunpack.c.l.b16 %v3107
        %v3176 = vunpack.c.l.b16 %v3108
        %v3177 = vunpack.c.l.b16 %v3109
        %v3178 = vpack.c.b16 %v3147, %v3146
        %v3179 = vpack.c.b16 %v3149, %v3148
        %v3180 = vpack.c.b16 %v3151, %v3150
        %v3181 = vpack.c.b16 %v3153, %v3152
        %v3182 = vpack.c.b16 %v3155, %v3154
        %v3183 = vpack.c.b16 %v3157, %v3156
        %v3184 = vpack.c.b16 %v3159, %v3158
        %v3185 = vpack.c.b16 %v3161, %v3160
        %v3186 = vpack.c.b16 %v3163, %v3162
        %v3187 = vpack.c.b16 %v3165, %v3164
        %v3188 = vpack.c.b16 %v3167, %v3166
        %v3189 = vpack.c.b16 %v3169, %v3168
        %v3190 = vpack.c.b16 %v3171, %v3170
        %v3191 = vpack.c.b16 %v3173, %v3172
        %v3192 = vpack.c.b16 %v3175, %v3174
        %v3193 = vpack.c.b16 %v3177, %v3176
        %3210 = vmatpush.bf16.msra.mxu0 %v3185
        %3211 = vmatpush.bf16.msra.mxu0 %v3184
        %3212 = vmatpush.bf16.msra.mxu0 %v3183
        %3213 = vmatpush.bf16.msra.mxu0 %v3182
        %3214 = vmatpush.bf16.msra.mxu0 %v3181
        %3215 = vmatpush.bf16.msra.mxu0 %v3180
        %3216 = vmatpush.bf16.msra.mxu0 %v3179
        %3217 = vmatpush.bf16.msra.mxu0 %v3178
        %3218 = vmatmul.bf16.gmra.mxu0 %v3046
        %v3219 = vpop.f32.mrf.mxu0
        %v3220 = vadd.f32 %v3112, %v3219
        %v3221 = vpop.f32.mrf.mxu0
        %v3222 = vadd.f32 %v3112, %v3221
        %3223 = vmatmul.bf16.gmra.mxu0 %v3048
        %v3224 = vpop.f32.mrf.mxu0
        %v3225 = vadd.f32 %v3112, %v3224
        %v3226 = vpop.f32.mrf.mxu0
        %v3227 = vadd.f32 %v3112, %v3226
        %3228 = vmatmul.bf16.gmra.mxu0 %v3050
        %v3229 = vpop.f32.mrf.mxu0
        %v3230 = vadd.f32 %v3112, %v3229
        %v3231 = vpop.f32.mrf.mxu0
        %v3232 = vadd.f32 %v3112, %v3231
        %3233 = vmatmul.bf16.gmra.mxu0 %v3052
        %v3234 = vpop.f32.mrf.mxu0
        %v3235 = vadd.f32 %v3112, %v3234
        %v3236 = vpop.f32.mrf.mxu0
        %v3237 = vadd.f32 %v3112, %v3236
        %3238 = vmatmul.bf16.gmra.mxu0 %v3054
        %v3239 = vpop.f32.mrf.mxu0
        %v3240 = vadd.f32 %v3112, %v3239
        %v3241 = vpop.f32.mrf.mxu0
        %v3242 = vadd.f32 %v3112, %v3241
        %3243 = vmatmul.bf16.gmra.mxu0 %v3056
        %v3244 = vpop.f32.mrf.mxu0
        %v3245 = vadd.f32 %v3112, %v3244
        %v3246 = vpop.f32.mrf.mxu0
        %v3247 = vadd.f32 %v3112, %v3246
        %3248 = vmatmul.bf16.gmra.mxu0 %v3058
        %v3249 = vpop.f32.mrf.mxu0
        %v3250 = vadd.f32 %v3112, %v3249
        %v3251 = vpop.f32.mrf.mxu0
        %v3252 = vadd.f32 %v3112, %v3251
        %3253 = vmatmul.bf16.gmra.mxu0 %v3060
        %v3254 = vpop.f32.mrf.mxu0
        %v3255 = vadd.f32 %v3112, %v3254
        %v3256 = vpop.f32.mrf.mxu0
        %v3257 = vadd.f32 %v3112, %v3256
        %3258 = vmatmul.bf16.gmra.mxu0 %v3062
        %v3259 = vpop.f32.mrf.mxu0
        %v3260 = vadd.f32 %v3112, %v3259
        %v3261 = vpop.f32.mrf.mxu0
        %v3262 = vadd.f32 %v3112, %v3261
        %3263 = vmatmul.bf16.gmra.mxu0 %v3064
        %v3264 = vpop.f32.mrf.mxu0
        %v3265 = vadd.f32 %v3112, %v3264
        %v3266 = vpop.f32.mrf.mxu0
        %v3267 = vadd.f32 %v3112, %v3266
        %3268 = vmatmul.bf16.gmra.mxu0 %v3066
        %v3269 = vpop.f32.mrf.mxu0
        %v3270 = vadd.f32 %v3112, %v3269
        %v3271 = vpop.f32.mrf.mxu0
        %v3272 = vadd.f32 %v3112, %v3271
        %3273 = vmatmul.bf16.gmra.mxu0 %v3068
        %v3274 = vpop.f32.mrf.mxu0
        %v3275 = vadd.f32 %v3112, %v3274
        %v3276 = vpop.f32.mrf.mxu0
        %v3277 = vadd.f32 %v3112, %v3276
        %3278 = vmatmul.bf16.gmra.mxu0 %v3070
        %v3279 = vpop.f32.mrf.mxu0
        %v3280 = vadd.f32 %v3112, %v3279
        %v3281 = vpop.f32.mrf.mxu0
        %v3282 = vadd.f32 %v3112, %v3281
        %3283 = vmatmul.bf16.gmra.mxu0 %v3072
        %v3284 = vpop.f32.mrf.mxu0
        %v3285 = vadd.f32 %v3112, %v3284
        %v3286 = vpop.f32.mrf.mxu0
        %v3287 = vadd.f32 %v3112, %v3286
        %3288 = vmatmul.bf16.gmra.mxu0 %v3074
        %v3289 = vpop.f32.mrf.mxu0
        %v3290 = vadd.f32 %v3112, %v3289
        %v3291 = vpop.f32.mrf.mxu0
        %v3292 = vadd.f32 %v3112, %v3291
        %3293 = vmatmul.bf16.gmra.mxu0 %v3076
        %v3294 = vpop.f32.mrf.mxu0
        %v3295 = vadd.f32 %v3112, %v3294
        %v3296 = vpop.f32.mrf.mxu0
        %v3297 = vadd.f32 %v3112, %v3296
        %3298 = vdwg.mxu0
        %3299 = vmatpush.bf16.msra.mxu0 %v3193
        %3300 = vmatpush.bf16.msra.mxu0 %v3192
        %3301 = vmatpush.bf16.msra.mxu0 %v3191
        %3302 = vmatpush.bf16.msra.mxu0 %v3190
        %3303 = vmatpush.bf16.msra.mxu0 %v3189
        %3304 = vmatpush.bf16.msra.mxu0 %v3188
        %3305 = vmatpush.bf16.msra.mxu0 %v3187
        %3306 = vmatpush.bf16.msra.mxu0 %v3186
        %3307 = vmatmul.bf16.gmra.mxu0 %v3047
        %v3308 = vpop.f32.mrf.mxu0
        %v3309 = vadd.f32 %v3220, %v3308
        %v3310 = vpop.f32.mrf.mxu0
        %v3311 = vadd.f32 %v3222, %v3310
        %3312 = vmatmul.bf16.gmra.mxu0 %v3049
        %v3313 = vpop.f32.mrf.mxu0
        %v3314 = vadd.f32 %v3225, %v3313
        %v3315 = vpop.f32.mrf.mxu0
        %v3316 = vadd.f32 %v3227, %v3315
        %3317 = vmatmul.bf16.gmra.mxu0 %v3051
        %v3318 = vpop.f32.mrf.mxu0
        %v3319 = vadd.f32 %v3230, %v3318
        %v3320 = vpop.f32.mrf.mxu0
        %v3321 = vadd.f32 %v3232, %v3320
        %3322 = vmatmul.bf16.gmra.mxu0 %v3053
        %v3323 = vpop.f32.mrf.mxu0
        %v3324 = vadd.f32 %v3235, %v3323
        %v3325 = vpop.f32.mrf.mxu0
        %v3326 = vadd.f32 %v3237, %v3325
        %3327 = vmatmul.bf16.gmra.mxu0 %v3055
        %v3328 = vpop.f32.mrf.mxu0
        %v3329 = vadd.f32 %v3240, %v3328
        %v3330 = vpop.f32.mrf.mxu0
        %v3331 = vadd.f32 %v3242, %v3330
        %3332 = vmatmul.bf16.gmra.mxu0 %v3057
        %v3333 = vpop.f32.mrf.mxu0
        %v3334 = vadd.f32 %v3245, %v3333
        %v3335 = vpop.f32.mrf.mxu0
        %v3336 = vadd.f32 %v3247, %v3335
        %3337 = vmatmul.bf16.gmra.mxu0 %v3059
        %v3338 = vpop.f32.mrf.mxu0
        %v3339 = vadd.f32 %v3250, %v3338
        %v3340 = vpop.f32.mrf.mxu0
        %v3341 = vadd.f32 %v3252, %v3340
        %3342 = vmatmul.bf16.gmra.mxu0 %v3061
        %v3343 = vpop.f32.mrf.mxu0
        %v3344 = vadd.f32 %v3255, %v3343
        %v3345 = vpop.f32.mrf.mxu0
        %v3346 = vadd.f32 %v3257, %v3345
        %3347 = vmatmul.bf16.gmra.mxu0 %v3063
        %v3348 = vpop.f32.mrf.mxu0
        %v3349 = vadd.f32 %v3260, %v3348
        %v3350 = vpop.f32.mrf.mxu0
        %v3351 = vadd.f32 %v3262, %v3350
        %3352 = vmatmul.bf16.gmra.mxu0 %v3065
        %v3353 = vpop.f32.mrf.mxu0
        %v3354 = vadd.f32 %v3265, %v3353
        %v3355 = vpop.f32.mrf.mxu0
        %v3356 = vadd.f32 %v3267, %v3355
        %3357 = vmatmul.bf16.gmra.mxu0 %v3067
        %v3358 = vpop.f32.mrf.mxu0
        %v3359 = vadd.f32 %v3270, %v3358
        %v3360 = vpop.f32.mrf.mxu0
        %v3361 = vadd.f32 %v3272, %v3360
        %3362 = vmatmul.bf16.gmra.mxu0 %v3069
        %v3363 = vpop.f32.mrf.mxu0
        %v3364 = vadd.f32 %v3275, %v3363
        %v3365 = vpop.f32.mrf.mxu0
        %v3366 = vadd.f32 %v3277, %v3365
        %3367 = vmatmul.bf16.gmra.mxu0 %v3071
        %v3368 = vpop.f32.mrf.mxu0
        %v3369 = vadd.f32 %v3280, %v3368
        %v3370 = vpop.f32.mrf.mxu0
        %v3371 = vadd.f32 %v3282, %v3370
        %3372 = vmatmul.bf16.gmra.mxu0 %v3073
        %v3373 = vpop.f32.mrf.mxu0
        %v3374 = vadd.f32 %v3285, %v3373
        %v3375 = vpop.f32.mrf.mxu0
        %v3376 = vadd.f32 %v3287, %v3375
        %3377 = vmatmul.bf16.gmra.mxu0 %v3075
        %v3378 = vpop.f32.mrf.mxu0
        %v3379 = vadd.f32 %v3290, %v3378
        %v3380 = vpop.f32.mrf.mxu0
        %v3381 = vadd.f32 %v3292, %v3380
        %3382 = vmatmul.bf16.gmra.mxu0 %v3077
        %v3383 = vpop.f32.mrf.mxu0
        %v3384 = vadd.f32 %v3295, %v3383
        %v3385 = vpop.f32.mrf.mxu0
        %v3386 = vadd.f32 %v3297, %v3385
        %3387 = vdwg.mxu0
        %v3388 = vmax.f32 %v3309, 0.0
        %v3389 = vmax.f32 %v3311, 0.0
        %v3390 = vmax.f32 %v3314, 0.0
        %v3391 = vmax.f32 %v3316, 0.0
        %v3392 = vmax.f32 %v3319, 0.0
        %v3393 = vmax.f32 %v3321, 0.0
        %v3394 = vmax.f32 %v3324, 0.0
        %v3395 = vmax.f32 %v3326, 0.0
        %v3396 = vmax.f32 %v3329, 0.0
        %v3397 = vmax.f32 %v3331, 0.0
        %v3398 = vmax.f32 %v3334, 0.0
        %v3399 = vmax.f32 %v3336, 0.0
        %v3400 = vmax.f32 %v3339, 0.0
        %v3401 = vmax.f32 %v3341, 0.0
        %v3402 = vmax.f32 %v3344, 0.0
        %v3403 = vmax.f32 %v3346, 0.0
        %v3404 = vmax.f32 %v3349, 0.0
        %v3405 = vmax.f32 %v3351, 0.0
        %v3406 = vmax.f32 %v3354, 0.0
        %v3407 = vmax.f32 %v3356, 0.0
        %v3408 = vmax.f32 %v3359, 0.0
        %v3409 = vmax.f32 %v3361, 0.0
        %v3410 = vmax.f32 %v3364, 0.0
        %v3411 = vmax.f32 %v3366, 0.0
        %v3412 = vmax.f32 %v3369, 0.0
        %v3413 = vmax.f32 %v3371, 0.0
        %v3414 = vmax.f32 %v3374, 0.0
        %v3415 = vmax.f32 %v3376, 0.0
        %v3416 = vmax.f32 %v3379, 0.0
        %v3417 = vmax.f32 %v3381, 0.0
        %v3418 = vmax.f32 %v3384, 0.0
        %v3419 = vmax.f32 %v3386, 0.0
        %v3420 = vpack.c.bf16 %v3389, %v3388
        %v3421 = vpack.c.bf16 %v3391, %v3390
        %v3422 = vpack.c.bf16 %v3393, %v3392
        %v3423 = vpack.c.bf16 %v3395, %v3394
        %v3424 = vpack.c.bf16 %v3397, %v3396
        %v3425 = vpack.c.bf16 %v3399, %v3398
        %v3426 = vpack.c.bf16 %v3401, %v3400
        %v3427 = vpack.c.bf16 %v3403, %v3402
        %v3428 = vpack.c.bf16 %v3405, %v3404
        %v3429 = vpack.c.bf16 %v3407, %v3406
        %v3430 = vpack.c.bf16 %v3409, %v3408
        %v3431 = vpack.c.bf16 %v3411, %v3410
        %v3432 = vpack.c.bf16 %v3413, %v3412
        %v3433 = vpack.c.bf16 %v3415, %v3414
        %v3434 = vpack.c.bf16 %v3417, %v3416
        %v3435 = vpack.c.bf16 %v3419, %v3418
        %v3436 = vld [vmem:[%s7] sm:$0xf]
        %v3437 = vld [vmem:[%s7 + $0x4] sm:$0xf]
        %v3438 = vld [vmem:[%s7 + $0x8] sm:$0xf]
        %v3439 = vld [vmem:[%s7 + $0xc] sm:$0xf]
        %v3440 = vld [vmem:[%s7 + $0x10] sm:$0xf]
        %v3441 = vld [vmem:[%s7 + $0x14] sm:$0xf]
        %v3442 = vld [vmem:[%s7 + $0x18] sm:$0xf]
        %v3443 = vld [vmem:[%s7 + $0x1c] sm:$0xf]
        %v3444 = vld [vmem:[%s8] sm:$0x1]
        %v3446 = vperm.slane %v3444, 0
        %v3456 = vunpack.c.l.b16 %v3436
        %v3457 = vunpack.c.l.b16 %v3437
        %v3458 = vunpack.c.l.b16 %v3438
        %v3459 = vunpack.c.l.b16 %v3439
        %v3460 = vunpack.c.l.b16 %v3440
        %v3461 = vunpack.c.l.b16 %v3441
        %v3462 = vunpack.c.l.b16 %v3442
        %v3463 = vunpack.c.l.b16 %v3443
        %v3464 = vpack.c.b16 %v3457, %v3456
        %v3465 = vpack.c.b16 %v3459, %v3458
        %v3466 = vpack.c.b16 %v3461, %v3460
        %v3467 = vpack.c.b16 %v3463, %v3462
        %vm3472 = vcmask 523264
        %v3474 = vsel %vm3472, %v3420, 0
        %v3477 = vsel %vm3472, %v3421, 0
        %v3480 = vsel %vm3472, %v3422, 0
        %v3483 = vsel %vm3472, %v3423, 0
        %v3486 = vsel %vm3472, %v3424, 0
        %v3489 = vsel %vm3472, %v3425, 0
        %v3492 = vsel %vm3472, %v3426, 0
        %v3495 = vsel %vm3472, %v3427, 0
        %v3498 = vsel %vm3472, %v3428, 0
        %v3501 = vsel %vm3472, %v3429, 0
        %v3504 = vsel %vm3472, %v3430, 0
        %v3507 = vsel %vm3472, %v3431, 0
        %v3510 = vsel %vm3472, %v3432, 0
        %v3513 = vsel %vm3472, %v3433, 0
        %v3516 = vsel %vm3472, %v3434, 0
        %v3519 = vsel %vm3472, %v3435, 0
        %3521 = vmatpush.bf16.msra.mxu0 0
        %3522 = vmatpush.bf16.msra.mxu0 0
        %3523 = vmatpush.bf16.msra.mxu0 0
        %3524 = vmatpush.bf16.msra.mxu0 0
        %3525 = vmatpush.bf16.msra.mxu0 %v3467
        %3526 = vmatpush.bf16.msra.mxu0 %v3466
        %3527 = vmatpush.bf16.msra.mxu0 %v3465
        %3528 = vmatpush.bf16.msra.mxu0 %v3464
        %3529 = vmatmul.bf16.gmra.mxu0 %v3474
        %v3530 = vpop.f32.mrf.mxu0
        %v3531 = vadd.f32 %v3446, %v3530
        %v3532 = vpop.f32.mrf.mxu0
        %v3533 = vadd.f32 %v3446, %v3532
        %3534 = vmatmul.bf16.gmra.mxu0 %v3477
        %v3535 = vpop.f32.mrf.mxu0
        %v3536 = vadd.f32 %v3446, %v3535
        %v3537 = vpop.f32.mrf.mxu0
        %v3538 = vadd.f32 %v3446, %v3537
        %3539 = vmatmul.bf16.gmra.mxu0 %v3480
        %v3540 = vpop.f32.mrf.mxu0
        %v3541 = vadd.f32 %v3446, %v3540
        %v3542 = vpop.f32.mrf.mxu0
        %v3543 = vadd.f32 %v3446, %v3542
        %3544 = vmatmul.bf16.gmra.mxu0 %v3483
        %v3545 = vpop.f32.mrf.mxu0
        %v3546 = vadd.f32 %v3446, %v3545
        %v3547 = vpop.f32.mrf.mxu0
        %v3548 = vadd.f32 %v3446, %v3547
        %3549 = vmatmul.bf16.gmra.mxu0 %v3486
        %v3550 = vpop.f32.mrf.mxu0
        %v3551 = vadd.f32 %v3446, %v3550
        %v3552 = vpop.f32.mrf.mxu0
        %v3553 = vadd.f32 %v3446, %v3552
        %3554 = vmatmul.bf16.gmra.mxu0 %v3489
        %v3555 = vpop.f32.mrf.mxu0
        %v3556 = vadd.f32 %v3446, %v3555
        %v3557 = vpop.f32.mrf.mxu0
        %v3558 = vadd.f32 %v3446, %v3557
        %3559 = vmatmul.bf16.gmra.mxu0 %v3492
        %v3560 = vpop.f32.mrf.mxu0
        %v3561 = vadd.f32 %v3446, %v3560
        %v3562 = vpop.f32.mrf.mxu0
        %v3563 = vadd.f32 %v3446, %v3562
        %3564 = vmatmul.bf16.gmra.mxu0 %v3495
        %v3565 = vpop.f32.mrf.mxu0
        %v3566 = vadd.f32 %v3446, %v3565
        %v3567 = vpop.f32.mrf.mxu0
        %v3568 = vadd.f32 %v3446, %v3567
        %3569 = vmatmul.bf16.gmra.mxu0 %v3498
        %v3570 = vpop.f32.mrf.mxu0
        %v3571 = vadd.f32 %v3446, %v3570
        %v3572 = vpop.f32.mrf.mxu0
        %v3573 = vadd.f32 %v3446, %v3572
        %3574 = vmatmul.bf16.gmra.mxu0 %v3501
        %v3575 = vpop.f32.mrf.mxu0
        %v3576 = vadd.f32 %v3446, %v3575
        %v3577 = vpop.f32.mrf.mxu0
        %v3578 = vadd.f32 %v3446, %v3577
        %3579 = vmatmul.bf16.gmra.mxu0 %v3504
        %v3580 = vpop.f32.mrf.mxu0
        %v3581 = vadd.f32 %v3446, %v3580
        %v3582 = vpop.f32.mrf.mxu0
        %v3583 = vadd.f32 %v3446, %v3582
        %3584 = vmatmul.bf16.gmra.mxu0 %v3507
        %v3585 = vpop.f32.mrf.mxu0
        %v3586 = vadd.f32 %v3446, %v3585
        %v3587 = vpop.f32.mrf.mxu0
        %v3588 = vadd.f32 %v3446, %v3587
        %3589 = vmatmul.bf16.gmra.mxu0 %v3510
        %v3590 = vpop.f32.mrf.mxu0
        %v3591 = vadd.f32 %v3446, %v3590
        %v3592 = vpop.f32.mrf.mxu0
        %v3593 = vadd.f32 %v3446, %v3592
        %3594 = vmatmul.bf16.gmra.mxu0 %v3513
        %v3595 = vpop.f32.mrf.mxu0
        %v3596 = vadd.f32 %v3446, %v3595
        %v3597 = vpop.f32.mrf.mxu0
        %v3598 = vadd.f32 %v3446, %v3597
        %3599 = vmatmul.bf16.gmra.mxu0 %v3516
        %v3600 = vpop.f32.mrf.mxu0
        %v3601 = vadd.f32 %v3446, %v3600
        %v3602 = vpop.f32.mrf.mxu0
        %v3603 = vadd.f32 %v3446, %v3602
        %3604 = vmatmul.bf16.gmra.mxu0 %v3519
        %v3605 = vpop.f32.mrf.mxu0
        %v3606 = vadd.f32 %v3446, %v3605
        %v3607 = vpop.f32.mrf.mxu0
        %v3608 = vadd.f32 %v3446, %v3607
        %3609 = vdwg.mxu0
        %v3610 = vlaneseq
        %v3611 = vand.u32 %v3610, 127
        %vm3612 = vcmp.ge.s32.totalorder %v3611, 64
        %vm3613 = vcmp.lt.s32.totalorder %v3611, 65
        %vm3614 = vmand %vm3612, %vm3613
        %v3615 = vsub.f32 0.0, %v3531
        %v3616 = vsub.f32 0.0, %v3533
        %v3617 = vsub.f32 0.0, %v3536
        %v3618 = vsub.f32 0.0, %v3538
        %v3619 = vsub.f32 0.0, %v3541
        %v3620 = vsub.f32 0.0, %v3543
        %v3621 = vsub.f32 0.0, %v3546
        %v3622 = vsub.f32 0.0, %v3548
        %v3623 = vsub.f32 0.0, %v3551
        %v3624 = vsub.f32 0.0, %v3553
        %v3625 = vsub.f32 0.0, %v3556
        %v3626 = vsub.f32 0.0, %v3558
        %v3627 = vsub.f32 0.0, %v3561
        %v3628 = vsub.f32 0.0, %v3563
        %v3629 = vsub.f32 0.0, %v3566
        %v3630 = vsub.f32 0.0, %v3568
        %v3631 = vsub.f32 0.0, %v3571
        %v3632 = vsub.f32 0.0, %v3573
        %v3633 = vsub.f32 0.0, %v3576
        %v3634 = vsub.f32 0.0, %v3578
        %v3635 = vsub.f32 0.0, %v3581
        %v3636 = vsub.f32 0.0, %v3583
        %v3637 = vsub.f32 0.0, %v3586
        %v3638 = vsub.f32 0.0, %v3588
        %v3639 = vsub.f32 0.0, %v3591
        %v3640 = vsub.f32 0.0, %v3593
        %v3641 = vsub.f32 0.0, %v3596
        %v3642 = vsub.f32 0.0, %v3598
        %v3643 = vsub.f32 0.0, %v3601
        %v3644 = vsub.f32 0.0, %v3603
        %v3645 = vsub.f32 0.0, %v3606
        %v3646 = vsub.f32 0.0, %v3608
        %v3647 = vmul.f32 %v3615, 1.442695
        %v3648 = vpow.pop %v3647
        %v3649 = vmul.f32 %v3616, 1.442695
        %v3650 = vpow.pop %v3649
        %v3651 = vmul.f32 %v3617, 1.442695
        %v3652 = vpow.pop %v3651
        %v3653 = vmul.f32 %v3618, 1.442695
        %v3654 = vpow.pop %v3653
        %v3655 = vmul.f32 %v3619, 1.442695
        %v3656 = vpow.pop %v3655
        %v3657 = vmul.f32 %v3620, 1.442695
        %v3658 = vpow.pop %v3657
        %v3659 = vmul.f32 %v3621, 1.442695
        %v3660 = vpow.pop %v3659
        %v3661 = vmul.f32 %v3622, 1.442695
        %v3662 = vpow.pop %v3661
        %v3663 = vmul.f32 %v3623, 1.442695
        %v3664 = vpow.pop %v3663
        %v3665 = vmul.f32 %v3624, 1.442695
        %v3666 = vpow.pop %v3665
        %v3667 = vmul.f32 %v3625, 1.442695
        %v3668 = vpow.pop %v3667
        %v3669 = vmul.f32 %v3626, 1.442695
        %v3670 = vpow.pop %v3669
        %v3671 = vmul.f32 %v3627, 1.442695
        %v3672 = vpow.pop %v3671
        %v3673 = vmul.f32 %v3628, 1.442695
        %v3674 = vpow.pop %v3673
        %v3675 = vmul.f32 %v3629, 1.442695
        %v3676 = vpow.pop %v3675
        %v3677 = vmul.f32 %v3630, 1.442695
        %v3678 = vpow.pop %v3677
        %v3679 = vmul.f32 %v3631, 1.442695
        %v3680 = vpow.pop %v3679
        %v3681 = vmul.f32 %v3632, 1.442695
        %v3682 = vpow.pop %v3681
        %v3683 = vmul.f32 %v3633, 1.442695
        %v3684 = vpow.pop %v3683
        %v3685 = vmul.f32 %v3634, 1.442695
        %v3686 = vpow.pop %v3685
        %v3687 = vmul.f32 %v3635, 1.442695
        %v3688 = vpow.pop %v3687
        %v3689 = vmul.f32 %v3636, 1.442695
        %v3690 = vpow.pop %v3689
        %v3691 = vmul.f32 %v3637, 1.442695
        %v3692 = vpow.pop %v3691
        %v3693 = vmul.f32 %v3638, 1.442695
        %v3694 = vpow.pop %v3693
        %v3695 = vmul.f32 %v3639, 1.442695
        %v3696 = vpow.pop %v3695
        %v3697 = vmul.f32 %v3640, 1.442695
        %v3698 = vpow.pop %v3697
        %v3699 = vmul.f32 %v3641, 1.442695
        %v3700 = vpow.pop %v3699
        %v3701 = vmul.f32 %v3642, 1.442695
        %v3702 = vpow.pop %v3701
        %v3703 = vmul.f32 %v3643, 1.442695
        %v3704 = vpow.pop %v3703
        %v3705 = vmul.f32 %v3644, 1.442695
        %v3706 = vpow.pop %v3705
        %v3707 = vmul.f32 %v3645, 1.442695
        %v3708 = vpow.pop %v3707
        %v3709 = vmul.f32 %v3646, 1.442695
        %v3710 = vpow.pop %v3709
        %v3711 = vadd.f32 %v3648, 1.0
        %v3712 = vadd.f32 %v3650, 1.0
        %v3713 = vadd.f32 %v3652, 1.0
        %v3714 = vadd.f32 %v3654, 1.0
        %v3715 = vadd.f32 %v3656, 1.0
        %v3716 = vadd.f32 %v3658, 1.0
        %v3717 = vadd.f32 %v3660, 1.0
        %v3718 = vadd.f32 %v3662, 1.0
        %v3719 = vadd.f32 %v3664, 1.0
        %v3720 = vadd.f32 %v3666, 1.0
        %v3721 = vadd.f32 %v3668, 1.0
        %v3722 = vadd.f32 %v3670, 1.0
        %v3723 = vadd.f32 %v3672, 1.0
        %v3724 = vadd.f32 %v3674, 1.0
        %v3725 = vadd.f32 %v3676, 1.0
        %v3726 = vadd.f32 %v3678, 1.0
        %v3727 = vadd.f32 %v3680, 1.0
        %v3728 = vadd.f32 %v3682, 1.0
        %v3729 = vadd.f32 %v3684, 1.0
        %v3730 = vadd.f32 %v3686, 1.0
        %v3731 = vadd.f32 %v3688, 1.0
        %v3732 = vadd.f32 %v3690, 1.0
        %v3733 = vadd.f32 %v3692, 1.0
        %v3734 = vadd.f32 %v3694, 1.0
        %v3735 = vadd.f32 %v3696, 1.0
        %v3736 = vadd.f32 %v3698, 1.0
        %v3737 = vadd.f32 %v3700, 1.0
        %v3738 = vadd.f32 %v3702, 1.0
        %v3739 = vadd.f32 %v3704, 1.0
        %v3740 = vadd.f32 %v3706, 1.0
        %v3741 = vadd.f32 %v3708, 1.0
        %v3742 = vadd.f32 %v3710, 1.0
        %v3743 = vrcp.pop %v3711
        %v3744 = vrcp.pop %v3712
        %v3745 = vrcp.pop %v3713
        %v3746 = vrcp.pop %v3714
        %v3747 = vrcp.pop %v3715
        %v3748 = vrcp.pop %v3716
        %v3749 = vrcp.pop %v3717
        %v3750 = vrcp.pop %v3718
        %v3751 = vrcp.pop %v3719
        %v3752 = vrcp.pop %v3720
        %v3753 = vrcp.pop %v3721
        %v3754 = vrcp.pop %v3722
        %v3755 = vrcp.pop %v3723
        %v3756 = vrcp.pop %v3724
        %v3757 = vrcp.pop %v3725
        %v3758 = vrcp.pop %v3726
        %v3759 = vrcp.pop %v3727
        %v3760 = vrcp.pop %v3728
        %v3761 = vrcp.pop %v3729
        %v3762 = vrcp.pop %v3730
        %v3763 = vrcp.pop %v3731
        %v3764 = vrcp.pop %v3732
        %v3765 = vrcp.pop %v3733
        %v3766 = vrcp.pop %v3734
        %v3767 = vrcp.pop %v3735
        %v3768 = vrcp.pop %v3736
        %v3769 = vrcp.pop %v3737
        %v3770 = vrcp.pop %v3738
        %v3771 = vrcp.pop %v3739
        %v3772 = vrcp.pop %v3740
        %v3773 = vrcp.pop %v3741
        %v3774 = vrcp.pop %v3742
        %v3775 = vsel %vm3614, %v3743, %v3531
        %v3776 = vsel %vm3614, %v3744, %v3533
        %v3777 = vsel %vm3614, %v3745, %v3536
        %v3778 = vsel %vm3614, %v3746, %v3538
        %v3779 = vsel %vm3614, %v3747, %v3541
        %v3780 = vsel %vm3614, %v3748, %v3543
        %v3781 = vsel %vm3614, %v3749, %v3546
        %v3782 = vsel %vm3614, %v3750, %v3548
        %v3783 = vsel %vm3614, %v3751, %v3551
        %v3784 = vsel %vm3614, %v3752, %v3553
        %v3785 = vsel %vm3614, %v3753, %v3556
        %v3786 = vsel %vm3614, %v3754, %v3558
        %v3787 = vsel %vm3614, %v3755, %v3561
        %v3788 = vsel %vm3614, %v3756, %v3563
        %v3789 = vsel %vm3614, %v3757, %v3566
        %v3790 = vsel %vm3614, %v3758, %v3568
        %v3791 = vsel %vm3614, %v3759, %v3571
        %v3792 = vsel %vm3614, %v3760, %v3573
        %v3793 = vsel %vm3614, %v3761, %v3576
        %v3794 = vsel %vm3614, %v3762, %v3578
        %v3795 = vsel %vm3614, %v3763, %v3581
        %v3796 = vsel %vm3614, %v3764, %v3583
        %v3797 = vsel %vm3614, %v3765, %v3586
        %v3798 = vsel %vm3614, %v3766, %v3588
        %v3799 = vsel %vm3614, %v3767, %v3591
        %v3800 = vsel %vm3614, %v3768, %v3593
        %v3801 = vsel %vm3614, %v3769, %v3596
        %v3802 = vsel %vm3614, %v3770, %v3598
        %v3803 = vsel %vm3614, %v3771, %v3601
        %v3804 = vsel %vm3614, %v3772, %v3603
        %v3805 = vsel %vm3614, %v3773, %v3606
        %v3806 = vsel %vm3614, %v3774, %v3608
        %3807 = vst [vmem:[%s386] sm:$0xff] %v3775
        %3808 = vst [vmem:[%s386 + $0x8] sm:$0xff] %v3776
        %3809 = vst [vmem:[%s386 + $0x10] sm:$0xff] %v3777
        %3810 = vst [vmem:[%s386 + $0x18] sm:$0xff] %v3778
        %3811 = vst [vmem:[%s386 + $0x20] sm:$0xff] %v3779
        %3812 = vst [vmem:[%s386 + $0x28] sm:$0xff] %v3780
        %3813 = vst [vmem:[%s386 + $0x30] sm:$0xff] %v3781
        %3814 = vst [vmem:[%s386 + $0x38] sm:$0xff] %v3782
        %3815 = vst [vmem:[%s386 + $0x40] sm:$0xff] %v3783
        %3816 = vst [vmem:[%s386 + $0x48] sm:$0xff] %v3784
        %3817 = vst [vmem:[%s386 + $0x50] sm:$0xff] %v3785
        %3818 = vst [vmem:[%s386 + $0x58] sm:$0xff] %v3786
        %3819 = vst [vmem:[%s386 + $0x60] sm:$0xff] %v3787
        %3820 = vst [vmem:[%s386 + $0x68] sm:$0xff] %v3788
        %3821 = vst [vmem:[%s386 + $0x70] sm:$0xff] %v3789
        %3822 = vst [vmem:[%s386 + $0x78] sm:$0xff] %v3790
        %3823 = vst [vmem:[%s386 + $0x80] sm:$0xff] %v3791
        %3824 = vst [vmem:[%s386 + $0x88] sm:$0xff] %v3792
        %3825 = vst [vmem:[%s386 + $0x90] sm:$0xff] %v3793
        %3826 = vst [vmem:[%s386 + $0x98] sm:$0xff] %v3794
        %3827 = vst [vmem:[%s386 + $0xa0] sm:$0xff] %v3795
        %3828 = vst [vmem:[%s386 + $0xa8] sm:$0xff] %v3796
        %3829 = vst [vmem:[%s386 + $0xb0] sm:$0xff] %v3797
        %3830 = vst [vmem:[%s386 + $0xb8] sm:$0xff] %v3798
        %3831 = vst [vmem:[%s386 + $0xc0] sm:$0xff] %v3799
        %3832 = vst [vmem:[%s386 + $0xc8] sm:$0xff] %v3800
        %3833 = vst [vmem:[%s386 + $0xd0] sm:$0xff] %v3801
        %3834 = vst [vmem:[%s386 + $0xd8] sm:$0xff] %v3802
        %3835 = vst [vmem:[%s386 + $0xe0] sm:$0xff] %v3803
        %3836 = vst [vmem:[%s386 + $0xe8] sm:$0xff] %v3804
        %3837 = vst [vmem:[%s386 + $0xf0] sm:$0xff] %v3805
        %3838 = vst [vmem:[%s386 + $0xf8] sm:$0xff] %v3806
        %s3839 = sand.u32 %s229, 1
        %s3840 = scalar_lea.sflag [#allocation4], %s3839
        %s3841 = sand.u32 %s229, 1
        %s3842 = smul.addr %s3841, 256
        %s3843 = scalar_lea.vmem [#allocation8], %s3842
        // Predicated region
        $region69: #{tpu_custom_call.1} parent=55 // pred_check
          %p3844 = pneg %p239
        $region70: #{tpu_custom_call.1} parent=55 // pred_check_branch
          %3846 = sbr.rel (%p3844) target = $region72
        $region71: #{tpu_custom_call.1} parent=55 // pred_region
          %s3847 = smul.u32 32, %s27
          %3849 = vsyncadd %s3840, 0
          %s3850 = smul.addr %s3847, 8
          %s3851 = scalar_lea.hbm %s9, %s3850
          %s3852 = sshll.u32 %s3843, 4
          %s3853 = int_to_ptr.vmem [resolvable:$true] %s3852
          %s3854 = sshll.u32 %s3851, 4
          %s3855 = int_to_ptr.hbm [resolvable:$true] %s3854
          %3860 = dma.vmem_to_hbm [thread:$0]  %s3853, 4096, %s3855, %s3840, 128, 128, 8
        $region72: #{tpu_custom_call.1} parent=55 // pred_fallthru
          _
      $region56: #{tpu_custom_call.1} parent=5 // pred_fallthru
        _
      %p3861 = scmp.le.s32.totalorder 2, %s22
      // Predicated region
      $region73: #{tpu_custom_call.1} parent=5 // pred_check
        %p3862 = pneg %p3861
      $region74: #{tpu_custom_call.1} parent=5 // pred_check_branch
        %3864 = sbr.rel (%p3862) target = $region76
      $region75: #{tpu_custom_call.1} parent=5 // pred_region
        %s3865 = ssub.s32 %s22, 2
        // Predicated region
        $region77: #{tpu_custom_call.1} parent=75 // pred_check
          %p3866 = pneg %p245
        $region78: #{tpu_custom_call.1} parent=75 // pred_check_branch
          %3868 = sbr.rel (%p3866) target = $region80
        $region79: #{tpu_custom_call.1} parent=75 // pred_region
          %s3869 = sand.u32 %s230, 1
          %s3870 = scalar_lea.sflag [#allocation4], %s3869
          %s3871 = sand.u32 %s230, 1
          %s3872 = smul.addr %s3871, 256
          %s3873 = scalar_lea.vmem [#allocation8], %s3872
          %3875 = dma.done %s3870, 4096
        $region80: #{tpu_custom_call.1} parent=75 // pred_fallthru
          _
      $region76: #{tpu_custom_call.1} parent=5 // pred_fallthru
        _
    $region6: #{tpu_custom_call.1} parent=1 // loop_footer
      %s26 = sadd.s32 1, %s22
    $region7: #{tpu_custom_call.1} parent=1 // loop_footer_branch
      %21 = sbr.rel target = $region3
    $region8: #{tpu_custom_call.1} parent=1 // loop_exit
      _
    %3876 = vsyncpa [#allocation3], 1
    %s3877 = scalar_lea.sflag [#allocation3], 1
    %3878 = vsyncpa %s3877, 1
    %3879 = vsyncpa [#allocation6], 1
    %3880 = vsyncpa [#allocation4], 1
    %s3881 = scalar_lea.sflag [#allocation4], 1
    %3882 = vsyncpa %s3881, 1

</llo_original>
